<compile_context>
chip_gen: v6e
topology: v6e:2x2x1
jax: 0.10.0
libtpu: 0.0.40
codegen_flags: <defaults>
</compile_context>

<pallas_src>
import jax
import jax.numpy as jnp
from jax.experimental import pallas as pl
from jax.experimental.pallas import tpu as pltpu

d_model = 512
d_ff = 2048
LN_EPS = 1e-5

D_FF_CHUNK = 512
N_CHUNKS = d_ff // D_FF_CHUNK


def ffn_kernel(x_ref, w1_ref, w2_ref, o_ref, h_ref):
    # x_ref : (tm, d_model) f32 input tile
    # w1_ref: (d_model, d_ff)   bf16, resident across the grid
    # w2_ref: (d_ff, d_model)   bf16, resident across the grid
    # h_ref : (tm, d_ff)        bf16 VMEM scratch (ReLU'd fc1 output)
    x_in = x_ref[...]
    x_bf = x_in.astype(jnp.bfloat16)          # MXU operand

    # fc1 + ReLU, chunked over d_ff so the live f32 intermediate is (tm, 512)
    # instead of (tm, 2048).  Each bf16 chunk lands in h_ref; fc2 then runs as
    # a single matmul, so there is no per-chunk f32 accumulator RMW.
    for c in range(N_CHUNKS):
        lo = c * D_FF_CHUNK
        h = jnp.dot(x_bf, w1_ref[:, lo:lo + D_FF_CHUNK],
                    preferred_element_type=jnp.float32)
        h_ref[:, lo:lo + D_FF_CHUNK] = jnp.maximum(h, 0.0).astype(jnp.bfloat16)

    # fc2 (one K=2048 MXU matmul, f32 accumulation) + residual.
    y = jnp.dot(h_ref[...], w2_ref[...], preferred_element_type=jnp.float32)
    y = y + x_in.astype(jnp.float32)

    # One-pass LayerNorm (gamma=1, beta=0, eps=1e-5), all in f32.
    inv_d = 1.0 / d_model
    mean = jnp.sum(y, axis=-1, keepdims=True) * inv_d
    ex2 = jnp.sum(y * y, axis=-1, keepdims=True) * inv_d
    var = jnp.maximum(ex2 - mean * mean, 0.0)   # guard tiny negative cancellation
    o_ref[...] = ((y - mean) * jax.lax.rsqrt(var + LN_EPS)).astype(o_ref.dtype)


def _pick_tm(M, tm_max):
    """Row-tile size: multiple of 8, <= tm_max, grid_m >= 2 when possible
    (v7x dual TensorCores shard the single 'parallel' axis), preferring a
    divisor of the 8-aligned row count so no padded copy of x is needed."""
    m8 = ((M + 7) // 8) * 8
    if m8 <= 8:
        return 8
    cap = min(tm_max, max(8, (m8 // 2) // 8 * 8))   # keep grid_m >= 2
    best = 8
    for tm in range(cap, 7, -8):
        if m8 % tm == 0:
            best = tm
            break
    # Accept the exact divisor only if it doesn't shrink the tile too much;
    # otherwise one slightly-padded last tile beats many tiny grid steps.
    return best if best * 2 >= cap else cap


def poswise_ffn(x, w1, w2, *, tm_max=512):
    """x: (B, S, d_model) f32; w1: (d_model, d_ff) bf16; w2: (d_ff, d_model) bf16."""
    B, S, D = x.shape
    assert D == d_model
    M = B * S
    x2 = x.reshape(M, D)

    tm = _pick_tm(M, tm_max)
    grid_m = pl.cdiv(M, tm)
    M_pad = grid_m * tm
    if M_pad != M:
        # Rarely taken: _pick_tm avoids this for typical (power-of-two-ish)
        # transformer shapes.  Zero rows layer-norm to zero (eps > 0), harmless.
        x2 = jnp.pad(x2, ((0, M_pad - M), (0, 0)))

    flops = 2 * M_pad * 2 * d_model * d_ff
    bytes_accessed = (
        2 * M_pad * d_model * x.dtype.itemsize            # x in + out
        + 2 * d_model * d_ff * w1.dtype.itemsize)         # both weights

    out = pl.pallas_call(
        ffn_kernel,
        out_shape=jax.ShapeDtypeStruct((M_pad, D), x.dtype),
        grid_spec=pltpu.PrefetchScalarGridSpec(
            num_scalar_prefetch=0,
            grid=(grid_m,),
            in_specs=[
                pl.BlockSpec((tm, d_model), lambda i: (i, 0)),
                # Grid-invariant weights (constant index_map): fetched once,
                # stay resident.  Single-buffering (pl.Buffered(1)) omitted —
                # see header comment; footprint fits comfortably as-is.
                pl.BlockSpec((d_model, d_ff), lambda i: (0, 0)),
                pl.BlockSpec((d_ff, d_model), lambda i: (0, 0)),
            ],
            out_specs=pl.BlockSpec((tm, d_model), lambda i: (i, 0)),
            scratch_shapes=[pltpu.VMEM((tm, d_ff), jnp.bfloat16)],
        ),
        compiler_params=pltpu.CompilerParams(
            dimension_semantics=("parallel",),
            vmem_limit_bytes=32 * 1024 * 1024,   # right-sized for v7x 64 MiB/TC
        ),
        cost_estimate=pl.CostEstimate(
            flops=flops, transcendentals=0, bytes_accessed=bytes_accessed),
    )(x2, w1, w2)

    if M_pad != M:
        out = out[:M]
    return out.reshape(B, S, D)


def init_params(key):
    # nn.Linear(bias=False) default weight init: U(-1/sqrt(fan_in), 1/sqrt(fan_in)).
    # Stored (in, out) and in bf16 for the MXU (intentional quantization,
    # covered by the loosened tolerance below).
    k1, k2 = jax.random.split(key)
    b1 = 1.0 / (d_model ** 0.5)
    b2 = 1.0 / (d_ff ** 0.5)
    w1 = jax.random.uniform(k1, (d_model, d_ff), jnp.float32, -b1, b1).astype(jnp.bfloat16)
    w2 = jax.random.uniform(k2, (d_ff, d_model), jnp.float32, -b2, b2).astype(jnp.bfloat16)
    return w1, w2


def reference(x, w1, w2):
    # Pure-JAX f32 reference (same bf16-rounded weight values, f32 math).
    w1f = w1.astype(jnp.float32)
    w2f = w2.astype(jnp.float32)
    h = jnp.maximum(x @ w1f, 0.0)
    y = h @ w2f + x
    mean = jnp.mean(y, axis=-1, keepdims=True)
    var = jnp.mean((y - mean) ** 2, axis=-1, keepdims=True)
    return (y - mean) * jax.lax.rsqrt(var + LN_EPS)


if __name__ == "__main__":
    key = jax.random.PRNGKey(0)
    kx, kp = jax.random.split(key)

    batch, seq = 2, 8
    x = jax.random.normal(kx, (batch, seq, d_model), jnp.float32)
    w1, w2 = init_params(kp)

    out = jax.block_until_ready(poswise_ffn(x, w1, w2))

    ref = reference(x, w1, w2)
    assert out.shape == (batch, seq, d_model)
    # bf16 MXU operands vs f32 reference -> loosened tolerance
    assert jnp.allclose(out, ref, atol=2e-2, rtol=2e-2), "mismatch vs reference"

    print("KERNEL_OK")
</pallas_src>

<mosaic_0001>
module attributes {stable_mosaic.version = 11 : i64} {
  func.func @ffn_kernel(%arg0: i32, %arg1: memref<8x512xf32, #tpu.memory_space<vmem>>, %arg2: memref<512x2048xbf16, #tpu.memory_space<vmem>>, %arg3: memref<2048x512xbf16, #tpu.memory_space<vmem>>, %arg4: memref<8x512xf32, #tpu.memory_space<vmem>>, %arg5: memref<8x2048xbf16, #tpu.memory_space<vmem>>) attributes {dimension_semantics = [#tpu.dimension_semantics<parallel>], iteration_bounds = array<i64: 2>, scalar_prefetch = 0 : i64, scratch_operands = 1 : i64, tpu.core_type = #tpu.core_type<tc>, window_params = [{transform_indices = @transform_0, window_bounds = array<i64: 8, 512>}, {pipeline_mode = #tpu.pipeline_mode<synchronous>, transform_indices = @transform_1, window_bounds = array<i64: 512, 2048>}, {pipeline_mode = #tpu.pipeline_mode<synchronous>, transform_indices = @transform_2, window_bounds = array<i64: 2048, 512>}, {transform_indices = @transform_3, window_bounds = array<i64: 8, 512>}]} {
    %c0 = arith.constant 0 : index
    %c0_0 = arith.constant 0 : index
    %0 = vector.load %arg1[%c0, %c0_0] : memref<8x512xf32, #tpu.memory_space<vmem>>, vector<8x512xf32>
    %1 = arith.truncf %0 : vector<8x512xf32> to vector<8x512xbf16>
    %c0_1 = arith.constant 0 : index
    %c0_2 = arith.constant 0 : index
    %2 = vector.load %arg2[%c0_1, %c0_2] : memref<512x2048xbf16, #tpu.memory_space<vmem>>, vector<512x512xbf16>
    %cst = arith.constant dense<0.000000e+00> : vector<8x512xf32>
    %3 = tpu.matmul %1, %2, %cst {dimension_numbers = #tpu.dot_dimension_numbers<[1], [0], [0], [1], [0, 0, 1, 1], [], []>} : vector<8x512xbf16>, vector<512x512xbf16>, vector<8x512xf32> -> vector<8x512xf32>
    %cst_3 = arith.constant 0.000000e+00 : f32
    %4 = vector.broadcast %cst_3 : f32 to vector<8x512xf32>
    %5 = arith.maximumf %3, %4 : vector<8x512xf32>
    %6 = arith.truncf %5 : vector<8x512xf32> to vector<8x512xbf16>
    %c0_4 = arith.constant 0 : index
    %c0_5 = arith.constant 0 : index
    %7 = vector.load %arg5[%c0_4, %c0_5] : memref<8x2048xbf16, #tpu.memory_space<vmem>>, vector<8x512xbf16>
    tpu.vector_store %arg5[%c0_4, %c0_5], %6 {strides = array<i32>} : memref<8x2048xbf16, #tpu.memory_space<vmem>>, vector<8x512xbf16>,
    %c0_6 = arith.constant 0 : index
    %c512 = arith.constant 512 : index
    %8 = vector.load %arg2[%c0_6, %c512] : memref<512x2048xbf16, #tpu.memory_space<vmem>>, vector<512x512xbf16>
    %cst_7 = arith.constant dense<0.000000e+00> : vector<8x512xf32>
    %9 = tpu.matmul %1, %8, %cst_7 {dimension_numbers = #tpu.dot_dimension_numbers<[1], [0], [0], [1], [0, 0, 1, 1], [], []>} : vector<8x512xbf16>, vector<512x512xbf16>, vector<8x512xf32> -> vector<8x512xf32>
    %cst_8 = arith.constant 0.000000e+00 : f32
    %10 = vector.broadcast %cst_8 : f32 to vector<8x512xf32>
    %11 = arith.maximumf %9, %10 : vector<8x512xf32>
    %12 = arith.truncf %11 : vector<8x512xf32> to vector<8x512xbf16>
    %c0_9 = arith.constant 0 : index
    %c512_10 = arith.constant 512 : index
    %13 = vector.load %arg5[%c0_9, %c512_10] : memref<8x2048xbf16, #tpu.memory_space<vmem>>, vector<8x512xbf16>
    tpu.vector_store %arg5[%c0_9, %c512_10], %12 {strides = array<i32>} : memref<8x2048xbf16, #tpu.memory_space<vmem>>, vector<8x512xbf16>,
    %c0_11 = arith.constant 0 : index
    %c1024 = arith.constant 1024 : index
    %14 = vector.load %arg2[%c0_11, %c1024] : memref<512x2048xbf16, #tpu.memory_space<vmem>>, vector<512x512xbf16>
    %cst_12 = arith.constant dense<0.000000e+00> : vector<8x512xf32>
    %15 = tpu.matmul %1, %14, %cst_12 {dimension_numbers = #tpu.dot_dimension_numbers<[1], [0], [0], [1], [0, 0, 1, 1], [], []>} : vector<8x512xbf16>, vector<512x512xbf16>, vector<8x512xf32> -> vector<8x512xf32>
    %cst_13 = arith.constant 0.000000e+00 : f32
    %16 = vector.broadcast %cst_13 : f32 to vector<8x512xf32>
    %17 = arith.maximumf %15, %16 : vector<8x512xf32>
    %18 = arith.truncf %17 : vector<8x512xf32> to vector<8x512xbf16>
    %c0_14 = arith.constant 0 : index
    %c1024_15 = arith.constant 1024 : index
    %19 = vector.load %arg5[%c0_14, %c1024_15] : memref<8x2048xbf16, #tpu.memory_space<vmem>>, vector<8x512xbf16>
    tpu.vector_store %arg5[%c0_14, %c1024_15], %18 {strides = array<i32>} : memref<8x2048xbf16, #tpu.memory_space<vmem>>, vector<8x512xbf16>,
    %c0_16 = arith.constant 0 : index
    %c1536 = arith.constant 1536 : index
    %20 = vector.load %arg2[%c0_16, %c1536] : memref<512x2048xbf16, #tpu.memory_space<vmem>>, vector<512x512xbf16>
    %cst_17 = arith.constant dense<0.000000e+00> : vector<8x512xf32>
    %21 = tpu.matmul %1, %20, %cst_17 {dimension_numbers = #tpu.dot_dimension_numbers<[1], [0], [0], [1], [0, 0, 1, 1], [], []>} : vector<8x512xbf16>, vector<512x512xbf16>, vector<8x512xf32> -> vector<8x512xf32>
    %cst_18 = arith.constant 0.000000e+00 : f32
    %22 = vector.broadcast %cst_18 : f32 to vector<8x512xf32>
    %23 = arith.maximumf %21, %22 : vector<8x512xf32>
    %24 = arith.truncf %23 : vector<8x512xf32> to vector<8x512xbf16>
    %c0_19 = arith.constant 0 : index
    %c1536_20 = arith.constant 1536 : index
    %25 = vector.load %arg5[%c0_19, %c1536_20] : memref<8x2048xbf16, #tpu.memory_space<vmem>>, vector<8x512xbf16>
    tpu.vector_store %arg5[%c0_19, %c1536_20], %24 {strides = array<i32>} : memref<8x2048xbf16, #tpu.memory_space<vmem>>, vector<8x512xbf16>,
    %c0_21 = arith.constant 0 : index
    %c0_22 = arith.constant 0 : index
    %26 = vector.load %arg5[%c0_21, %c0_22] : memref<8x2048xbf16, #tpu.memory_space<vmem>>, vector<8x2048xbf16>
    %c0_23 = arith.constant 0 : index
    %c0_24 = arith.constant 0 : index
    %27 = vector.load %arg3[%c0_23, %c0_24] : memref<2048x512xbf16, #tpu.memory_space<vmem>>, vector<2048x512xbf16>
    %cst_25 = arith.constant dense<0.000000e+00> : vector<8x512xf32>
    %28 = tpu.matmul %26, %27, %cst_25 {dimension_numbers = #tpu.dot_dimension_numbers<[1], [0], [0], [1], [0, 0, 1, 1], [], []>} : vector<8x2048xbf16>, vector<2048x512xbf16>, vector<8x512xf32> -> vector<8x512xf32>
    %29 = arith.addf %28, %0 : vector<8x512xf32>
    %cst_26 = arith.constant dense<0.000000e+00> : vector<8xf32>
    %30 = vector.multi_reduction <add>, %29, %cst_26 [1] : vector<8x512xf32> to vector<8xf32>
    %31 = vector.shape_cast %30 : vector<8xf32> to vector<8x1xf32>
    %cst_27 = arith.constant 0.001953125 : f32
    %32 = vector.broadcast %cst_27 : f32 to vector<8x1xf32>
    %33 = arith.mulf %31, %32 : vector<8x1xf32>
    %34 = arith.mulf %29, %29 : vector<8x512xf32>
    %cst_28 = arith.constant dense<0.000000e+00> : vector<8xf32>
    %35 = vector.multi_reduction <add>, %34, %cst_28 [1] : vector<8x512xf32> to vector<8xf32>
    %36 = vector.shape_cast %35 : vector<8xf32> to vector<8x1xf32>
    %cst_29 = arith.constant 0.001953125 : f32
    %37 = vector.broadcast %cst_29 : f32 to vector<8x1xf32>
    %38 = arith.mulf %36, %37 : vector<8x1xf32>
    %39 = arith.mulf %33, %33 : vector<8x1xf32>
    %40 = arith.subf %38, %39 : vector<8x1xf32>
    %cst_30 = arith.constant 0.000000e+00 : f32
    %41 = vector.broadcast %cst_30 : f32 to vector<8x1xf32>
    %42 = arith.maximumf %40, %41 : vector<8x1xf32>
    %43 = vector.broadcast %33 : vector<8x1xf32> to vector<8x512xf32>
    %44 = arith.subf %29, %43 : vector<8x512xf32>
    %cst_31 = arith.constant 9.99999974E-6 : f32
    %45 = vector.broadcast %cst_31 : f32 to vector<8x1xf32>
    %46 = arith.addf %42, %45 : vector<8x1xf32>
    %47 = math.rsqrt %46 : vector<8x1xf32>
    %48 = vector.broadcast %47 : vector<8x1xf32> to vector<8x512xf32>
    %49 = arith.mulf %44, %48 : vector<8x512xf32>
    %c0_32 = arith.constant 0 : index
    %c0_33 = arith.constant 0 : index
    %50 = vector.load %arg4[%c0_32, %c0_33] : memref<8x512xf32, #tpu.memory_space<vmem>>, vector<8x512xf32>
    tpu.vector_store %arg4[%c0_32, %c0_33], %49 {strides = array<i32>} : memref<8x512xf32, #tpu.memory_space<vmem>>, vector<8x512xf32>,
    return
  }
  func.func @transform_0(%arg0: i32) -> (i32, i32) {
    %c0_i32 = arith.constant 0 : i32
    %c0_i32_0 = arith.constant 0 : i32
    return %arg0, %c0_i32 : i32, i32
  }
  func.func @transform_1(%arg0: i32) -> (i32, i32) {
    %c0_i32 = arith.constant 0 : i32
    %c0_i32_0 = arith.constant 0 : i32
    %c0_i32_1 = arith.constant 0 : i32
    return %c0_i32, %c0_i32_0 : i32, i32
  }
  func.func @transform_2(%arg0: i32) -> (i32, i32) {
    %c0_i32 = arith.constant 0 : i32
    %c0_i32_0 = arith.constant 0 : i32
    %c0_i32_1 = arith.constant 0 : i32
    return %c0_i32, %c0_i32_0 : i32, i32
  }
  func.func @transform_3(%arg0: i32) -> (i32, i32) {
    %c0_i32 = arith.constant 0 : i32
    %c0_i32_0 = arith.constant 0 : i32
    return %arg0, %c0_i32 : i32, i32
  }
}

</mosaic_0001>

<llo_original>
// kernel: tpu_custom_call.1
$region0: #{tpu_custom_call.1}
  #allocation0 [shape = 'u32[]', space=smem, size = 0x4, offset = 0x4, fixed_abs, tag = 'smem constant byte address 0x4 - core index']
  #allocation1 [shape = 'u32[144,128]{1,0:T(1,128)}', space=vmem, size = 0x12000, scoped, tag = 'internal scratch']
  #allocation2 [shape = 'bf16[8,2048]{1,0:T(8,128)(2,1)}', space=vmem, size = 0x8000, scoped, tag = 'scratch operand']
  %s0 = inlined_call_operand.hbm [shape: f32[16,512], index: 0, kind: input, shape index: {}]
  %s1 = inlined_call_operand.hbm [shape: bf16[512,2048], index: 1, kind: input, shape index: {}]
  %s2 = inlined_call_operand.hbm [shape: bf16[2048,512], index: 2, kind: input, shape index: {}]
  %s3 = inlined_call_operand.hbm [shape: f32[16,512], index: 3, kind: output, shape index: {}]
  %s4 = sld [smem:[#allocation0]]
  $region57: #{tpu_custom_call.1} parent=0
    _
  %s6 = ssub.s32 1, %s4
  %s7 = scalar_select 0, %s6, %s4
  $region1: #{tpu_custom_call.1} parent=0
    #allocation3 [shape = 'u8[32768]{0}', space=vmem, size = 0x8000, scoped, tag = 'input window, operand 0']
    #allocation4 [shape = 's32[2]{0}', space=sflag, size = 0x8, scoped, tag = 'scoped memory for tpu_custom_call.1']
    #allocation5 [shape = 's32[2]{0}', space=sflag, size = 0x8, scoped, tag = 'scoped memory for tpu_custom_call.1']
    #allocation6 [shape = 'u8[2097152]{0}', space=vmem, size = 0x200000, scoped, tag = 'input window, operand 1, single buffered']
    #allocation7 [shape = 's32[1]{0}', space=sflag, size = 0x4, scoped, tag = 'scoped memory for tpu_custom_call.1']
    #allocation8 [shape = 'u8[2097152]{0}', space=vmem, size = 0x200000, scoped, tag = 'input window, operand 2, single buffered']
    #allocation9 [shape = 'u8[32768]{0}', space=vmem, size = 0x8000, scoped, tag = 'output window, operand 0']
    %8 = vsyncpa [#allocation4], 0
    %s9 = scalar_lea.sflag [#allocation4], 1
    %10 = vsyncpa %s9, 0
    %11 = vsyncpa [#allocation7], 0
    %12 = vsyncpa [#allocation5], 0
    %s13 = scalar_lea.sflag [#allocation5], 1
    %14 = vsyncpa %s13, 0
    loop: start=0, step=1, limit=4
    $region2: #{tpu_custom_call.1} parent=1 // loop_pre_header
      _
    $region3: #{tpu_custom_call.1} parent=1 // loop_header
      %s16 = sphi 0, %s20
      %p17 = scmp.ge.s32.totalorder %s16, 4
      %s26 = sphi 0, %s28
      %s29 = sphi 0, %s26
      %s30 = sphi 0, %s29
      %s46 = sphi 0, %s30
      %s50 = sphi 0, %s50
      %s52 = sphi 0, %s50
      %s53 = sphi 0, %s52
      %s67 = sphi 0, %s53
      %s71 = sphi 0, %s71
      %s73 = sphi 0, %s71
      %s74 = sphi 0, %s73
      %s88 = sphi 0, %s74
      %s94 = sphi 0, %s96
      %s97 = sphi 0, %s94
      %s98 = sphi 0, %s97
      %s114 = sphi 0, %s98
    $region4: #{tpu_custom_call.1} parent=1 // loop_header_branch
      %19 = sbr.rel (%p17) target = $region8
    $region5: #{tpu_custom_call.1} parent=1 // loop_body
      %s21 = ssub.s32 %s16, 1
      %s22 = ssub.s32 %s16, 2
      %s23 = sadd.s32 %s16, 1
      %s24 = ssub.s32 %s16, %s23
      %p25 = scmp.eq.s32.totalorder %s24, 0
      %s27 = sadd.s32 %s26, 1
      %s28 = scalar_select %p25, %s26, %s27
      %p31 = pneg %p25
      %p32 = scmp.eq.s32.totalorder %s16, 1
      %p33 = por %p31, %p32
      %p34 = scmp.ne.s32.totalorder %s26, %s29
      %p35 = scmp.eq.s32.totalorder %s16, 0
      %p36 = por %p34, %p35
      %p37 = scmp.ne.s32.totalorder %s26, %s29
      %p38 = scmp.eq.s32.totalorder %s21, 1
      %p39 = por %p37, %p38
      %p40 = scmp.ne.s32.totalorder %s29, %s30
      %p41 = scmp.eq.s32.totalorder %s21, 0
      %p42 = por %p40, %p41
      %p43 = scmp.ne.s32.totalorder %s29, %s30
      %p44 = scmp.eq.s32.totalorder %s22, 1
      %p45 = por %p43, %p44
      %p47 = scmp.ne.s32.totalorder %s30, %s46
      %p48 = scmp.eq.s32.totalorder %s22, 0
      %p49 = por %p47, %p48
      %s51 = sadd.s32 %s50, 1
      %p54 = scmp.eq.s32.totalorder %s16, 1
      %p55 = scmp.ne.s32.totalorder %s50, %s52
      %p56 = scmp.eq.s32.totalorder %s16, 0
      %p57 = por %p55, %p56
      %p58 = scmp.ne.s32.totalorder %s50, %s52
      %p59 = scmp.eq.s32.totalorder %s21, 1
      %p60 = por %p58, %p59
      %p61 = scmp.ne.s32.totalorder %s52, %s53
      %p62 = scmp.eq.s32.totalorder %s21, 0
      %p63 = por %p61, %p62
      %p64 = scmp.ne.s32.totalorder %s52, %s53
      %p65 = scmp.eq.s32.totalorder %s22, 1
      %p66 = por %p64, %p65
      %p68 = scmp.ne.s32.totalorder %s53, %s67
      %p69 = scmp.eq.s32.totalorder %s22, 0
      %p70 = por %p68, %p69
      %s72 = sadd.s32 %s71, 1
      %p75 = scmp.eq.s32.totalorder %s16, 1
      %p76 = scmp.ne.s32.totalorder %s71, %s73
      %p77 = scmp.eq.s32.totalorder %s16, 0
      %p78 = por %p76, %p77
      %p79 = scmp.ne.s32.totalorder %s71, %s73
      %p80 = scmp.eq.s32.totalorder %s21, 1
      %p81 = por %p79, %p80
      %p82 = scmp.ne.s32.totalorder %s73, %s74
      %p83 = scmp.eq.s32.totalorder %s21, 0
      %p84 = por %p82, %p83
      %p85 = scmp.ne.s32.totalorder %s73, %s74
      %p86 = scmp.eq.s32.totalorder %s22, 1
      %p87 = por %p85, %p86
      %p89 = scmp.ne.s32.totalorder %s74, %s88
      %p90 = scmp.eq.s32.totalorder %s22, 0
      %p91 = por %p89, %p90
      %s92 = ssub.s32 %s16, %s23
      %p93 = scmp.eq.s32.totalorder %s92, 0
      %s95 = sadd.s32 %s94, 1
      %s96 = scalar_select %p93, %s94, %s95
      %p99 = pneg %p93
      %p100 = scmp.eq.s32.totalorder %s16, 1
      %p101 = por %p99, %p100
      %p102 = scmp.ne.s32.totalorder %s94, %s97
      %p103 = scmp.eq.s32.totalorder %s16, 0
      %p104 = por %p102, %p103
      %p105 = scmp.ne.s32.totalorder %s94, %s97
      %p106 = scmp.eq.s32.totalorder %s21, 1
      %p107 = por %p105, %p106
      %p108 = scmp.ne.s32.totalorder %s97, %s98
      %p109 = scmp.eq.s32.totalorder %s21, 0
      %p110 = por %p108, %p109
      %p111 = scmp.ne.s32.totalorder %s97, %s98
      %p112 = scmp.eq.s32.totalorder %s22, 1
      %p113 = por %p111, %p112
      %p115 = scmp.ne.s32.totalorder %s98, %s114
      %p116 = scmp.eq.s32.totalorder %s22, 0
      %p117 = por %p115, %p116
      %p118 = scmp.le.s32.totalorder 1, %s16
      %p119 = scmp.lt.s32.totalorder %s16, 3
      %p120 = pnand %p118, %p119
      %p121 = pneg %p120
      // Predicated region
      $region9: #{tpu_custom_call.1} parent=5 // pred_check
        _
      $region10: #{tpu_custom_call.1} parent=5 // pred_check_branch
        %123 = sbr.rel (%p120) target = $region12
      $region11: #{tpu_custom_call.1} parent=5 // pred_region
        %s124 = ssub.s32 %s16, 1
        // Predicated region
        $region13: #{tpu_custom_call.1} parent=11 // pred_check
          %p125 = pneg %p63
        $region14: #{tpu_custom_call.1} parent=11 // pred_check_branch
          %127 = sbr.rel (%p125) target = $region16
        $region15: #{tpu_custom_call.1} parent=11 // pred_region
          %s129 = ssub.s32 65536, 65536
          %130 = vsyncadd [#allocation7], %s129
          %s131 = sshll.u32 [#allocation6], 4
          %s132 = int_to_ptr.vmem [resolvable:$true] %s131
          %137 = dma.hbm_to_vmem [thread:$0]  %s1, 65536, %s132, [#allocation7], 1024, 1024, 64
        $region16: #{tpu_custom_call.1} parent=11 // pred_fallthru
          _
        // Predicated region
        $region17: #{tpu_custom_call.1} parent=11 // pred_check
          %p138 = pneg %p84
        $region18: #{tpu_custom_call.1} parent=11 // pred_check_branch
          %140 = sbr.rel (%p138) target = $region20
        $region19: #{tpu_custom_call.1} parent=11 // pred_region
          %s142 = ssub.s32 65536, 65536
          %143 = vsyncadd [#allocation7], %s142
          %s144 = sshll.u32 [#allocation8], 4
          %s145 = int_to_ptr.vmem [resolvable:$true] %s144
          %150 = dma.hbm_to_vmem [thread:$0]  %s2, 65536, %s145, [#allocation7], 256, 256, 16
        $region20: #{tpu_custom_call.1} parent=11 // pred_fallthru
          _
      $region12: #{tpu_custom_call.1} parent=5 // pred_fallthru
        _
      %p151 = scmp.lt.s32.totalorder %s16, 2
      // Predicated region
      $region21: #{tpu_custom_call.1} parent=5 // pred_check
        %p152 = pneg %p151
      $region22: #{tpu_custom_call.1} parent=5 // pred_check_branch
        %154 = sbr.rel (%p152) target = $region24
      $region23: #{tpu_custom_call.1} parent=5 // pred_region
        // Predicated region
        $region25: #{tpu_custom_call.1} parent=23 // pred_check
          %p155 = pneg %p36
        $region26: #{tpu_custom_call.1} parent=23 // pred_check_branch
          %157 = sbr.rel (%p155) target = $region28
        $region27: #{tpu_custom_call.1} parent=23 // pred_region
          %s158 = sand.u32 %s26, 1
          %s159 = scalar_lea.sflag [#allocation4], %s158
          %s160 = sand.u32 %s26, 1
          %s161 = smul.addr %s160, 32
          %s162 = scalar_lea.vmem [#allocation3], %s161
          %s164 = ssub.s32 512, 512
          %165 = vsyncadd %s159, %s164
          %s166 = smul.addr %s16, 4
          %s167 = smul.addr %s166, 128
          %s168 = scalar_lea.hbm %s0, %s167
          %s170 = sshll.u32 %s162, 4
          %s171 = int_to_ptr.vmem [resolvable:$true] %s170
          %173 = dma.hbm_to_vmem [thread:$0]  %s168, 512, %s171, %s159
        $region28: #{tpu_custom_call.1} parent=23 // pred_fallthru
          _
      $region24: #{tpu_custom_call.1} parent=5 // pred_fallthru
        _
      %p174 = scmp.le.s32.totalorder 1, %s16
      %p175 = scmp.lt.s32.totalorder %s16, 3
      %p176 = pnand %p174, %p175
      %p177 = pneg %p176
      // Predicated region
      $region29: #{tpu_custom_call.1} parent=5 // pred_check
        _
      $region30: #{tpu_custom_call.1} parent=5 // pred_check_branch
        %179 = sbr.rel (%p176) target = $region32
      $region31: #{tpu_custom_call.1} parent=5 // pred_region
        %s180 = ssub.s32 %s16, 1
        %s181 = sand.u32 %s29, 1
        %s182 = scalar_lea.sflag [#allocation4], %s181
        %s183 = sand.u32 %s29, 1
        %s184 = smul.addr %s183, 32
        %s185 = scalar_lea.vmem [#allocation3], %s184
        // Predicated region
        $region33: #{tpu_custom_call.1} parent=31 // pred_check
          %p186 = pneg %p42
        $region34: #{tpu_custom_call.1} parent=31 // pred_check_branch
          %188 = sbr.rel (%p186) target = $region36
        $region35: #{tpu_custom_call.1} parent=31 // pred_region
          %189 = dma.done %s182, 512
        $region36: #{tpu_custom_call.1} parent=31 // pred_fallthru
          _
        // Predicated region
        $region37: #{tpu_custom_call.1} parent=31 // pred_check
          %p190 = pneg %p63
        $region38: #{tpu_custom_call.1} parent=31 // pred_check_branch
          %192 = sbr.rel (%p190) target = $region40
        $region39: #{tpu_custom_call.1} parent=31 // pred_region
          %193 = dma.done [#allocation7], 65536
        $region40: #{tpu_custom_call.1} parent=31 // pred_fallthru
          _
        // Predicated region
        $region41: #{tpu_custom_call.1} parent=31 // pred_check
          %p194 = pneg %p84
        $region42: #{tpu_custom_call.1} parent=31 // pred_check_branch
          %196 = sbr.rel (%p194) target = $region44
        $region43: #{tpu_custom_call.1} parent=31 // pred_region
          %197 = dma.done [#allocation7], 65536
        $region44: #{tpu_custom_call.1} parent=31 // pred_fallthru
          _
        %s198 = sand.u32 %s29, 1
        %s199 = scalar_lea.sflag [#allocation4], %s198
        %s200 = sand.u32 %s29, 1
        %s201 = smul.addr %s200, 32
        %s202 = scalar_lea.vmem [#allocation3], %s201
        %p203 = pneg %p42
        %p204 = pneg %p39
        %p205 = pneg %p63
        %p206 = pneg %p60
        %p207 = pneg %p84
        %p208 = pneg %p81
        %p209 = pneg %p110
        %p210 = pneg %p107
        %s211 = sand.u32 %s97, 1
        %s212 = scalar_lea.sflag [#allocation5], %s211
        %s213 = sand.u32 %s97, 1
        %s214 = smul.addr %s213, 32
        %s215 = scalar_lea.vmem [#allocation9], %s214
        %v216 = vld [vmem:[%s185] sm:$0xff]
        %v217 = vld [vmem:[%s185 + $0x8] sm:$0xff]
        %v218 = vld [vmem:[%s185 + $0x10] sm:$0xff]
        %v219 = vld [vmem:[%s185 + $0x18] sm:$0xff]
        %v220 = vpack.c.bf16 %v216, %v216
        %v221 = vpack.c.bf16 %v217, %v217
        %v222 = vpack.c.bf16 %v218, %v218
        %v223 = vpack.c.bf16 %v219, %v219
        %v224 = vld [vmem:[#allocation6] sm:$0xff]
        %v225 = vld [vmem:[#allocation6 + $0x8] sm:$0xff]
        %v226 = vld [vmem:[#allocation6 + $0x40] sm:$0xff]
        %v227 = vld [vmem:[#allocation6 + $0x48] sm:$0xff]
        %v228 = vld [vmem:[#allocation6 + $0x80] sm:$0xff]
        %v229 = vld [vmem:[#allocation6 + $0x88] sm:$0xff]
        %v230 = vld [vmem:[#allocation6 + $0xc0] sm:$0xff]
        %v231 = vld [vmem:[#allocation6 + $0xc8] sm:$0xff]
        %v232 = vld [vmem:[#allocation6 + $0x100] sm:$0xff]
        %v233 = vld [vmem:[#allocation6 + $0x108] sm:$0xff]
        %v234 = vld [vmem:[#allocation6 + $0x140] sm:$0xff]
        %v235 = vld [vmem:[#allocation6 + $0x148] sm:$0xff]
        %v236 = vld [vmem:[#allocation6 + $0x180] sm:$0xff]
        %v237 = vld [vmem:[#allocation6 + $0x188] sm:$0xff]
        %v238 = vld [vmem:[#allocation6 + $0x1c0] sm:$0xff]
        %v239 = vld [vmem:[#allocation6 + $0x1c8] sm:$0xff]
        %v240 = vld [vmem:[#allocation6 + $0x200] sm:$0xff]
        %v241 = vld [vmem:[#allocation6 + $0x208] sm:$0xff]
        %v242 = vld [vmem:[#allocation6 + $0x240] sm:$0xff]
        %v243 = vld [vmem:[#allocation6 + $0x248] sm:$0xff]
        %v244 = vld [vmem:[#allocation6 + $0x280] sm:$0xff]
        %v245 = vld [vmem:[#allocation6 + $0x288] sm:$0xff]
        %v246 = vld [vmem:[#allocation6 + $0x2c0] sm:$0xff]
        %v247 = vld [vmem:[#allocation6 + $0x2c8] sm:$0xff]
        %v248 = vld [vmem:[#allocation6 + $0x300] sm:$0xff]
        %v249 = vld [vmem:[#allocation6 + $0x308] sm:$0xff]
        %v250 = vld [vmem:[#allocation6 + $0x340] sm:$0xff]
        %v251 = vld [vmem:[#allocation6 + $0x348] sm:$0xff]
        %v252 = vld [vmem:[#allocation6 + $0x380] sm:$0xff]
        %v253 = vld [vmem:[#allocation6 + $0x388] sm:$0xff]
        %v254 = vld [vmem:[#allocation6 + $0x3c0] sm:$0xff]
        %v255 = vld [vmem:[#allocation6 + $0x3c8] sm:$0xff]
        %v256 = vld [vmem:[#allocation6 + $0x400] sm:$0xff]
        %v257 = vld [vmem:[#allocation6 + $0x408] sm:$0xff]
        %v258 = vld [vmem:[#allocation6 + $0x440] sm:$0xff]
        %v259 = vld [vmem:[#allocation6 + $0x448] sm:$0xff]
        %v260 = vld [vmem:[#allocation6 + $0x480] sm:$0xff]
        %v261 = vld [vmem:[#allocation6 + $0x488] sm:$0xff]
        %v262 = vld [vmem:[#allocation6 + $0x4c0] sm:$0xff]
        %v263 = vld [vmem:[#allocation6 + $0x4c8] sm:$0xff]
        %v264 = vld [vmem:[#allocation6 + $0x500] sm:$0xff]
        %v265 = vld [vmem:[#allocation6 + $0x508] sm:$0xff]
        %v266 = vld [vmem:[#allocation6 + $0x540] sm:$0xff]
        %v267 = vld [vmem:[#allocation6 + $0x548] sm:$0xff]
        %v268 = vld [vmem:[#allocation6 + $0x580] sm:$0xff]
        %v269 = vld [vmem:[#allocation6 + $0x588] sm:$0xff]
        %v270 = vld [vmem:[#allocation6 + $0x5c0] sm:$0xff]
        %v271 = vld [vmem:[#allocation6 + $0x5c8] sm:$0xff]
        %v272 = vld [vmem:[#allocation6 + $0x600] sm:$0xff]
        %v273 = vld [vmem:[#allocation6 + $0x608] sm:$0xff]
        %v274 = vld [vmem:[#allocation6 + $0x640] sm:$0xff]
        %v275 = vld [vmem:[#allocation6 + $0x648] sm:$0xff]
        %v276 = vld [vmem:[#allocation6 + $0x680] sm:$0xff]
        %v277 = vld [vmem:[#allocation6 + $0x688] sm:$0xff]
        %v278 = vld [vmem:[#allocation6 + $0x6c0] sm:$0xff]
        %v279 = vld [vmem:[#allocation6 + $0x6c8] sm:$0xff]
        %v280 = vld [vmem:[#allocation6 + $0x700] sm:$0xff]
        %v281 = vld [vmem:[#allocation6 + $0x708] sm:$0xff]
        %v282 = vld [vmem:[#allocation6 + $0x740] sm:$0xff]
        %v283 = vld [vmem:[#allocation6 + $0x748] sm:$0xff]
        %v284 = vld [vmem:[#allocation6 + $0x780] sm:$0xff]
        %v285 = vld [vmem:[#allocation6 + $0x788] sm:$0xff]
        %v286 = vld [vmem:[#allocation6 + $0x7c0] sm:$0xff]
        %v287 = vld [vmem:[#allocation6 + $0x7c8] sm:$0xff]
        %v288 = vld [vmem:[#allocation6 + $0x800] sm:$0xff]
        %v289 = vld [vmem:[#allocation6 + $0x808] sm:$0xff]
        %v290 = vld [vmem:[#allocation6 + $0x840] sm:$0xff]
        %v291 = vld [vmem:[#allocation6 + $0x848] sm:$0xff]
        %v292 = vld [vmem:[#allocation6 + $0x880] sm:$0xff]
        %v293 = vld [vmem:[#allocation6 + $0x888] sm:$0xff]
        %v294 = vld [vmem:[#allocation6 + $0x8c0] sm:$0xff]
        %v295 = vld [vmem:[#allocation6 + $0x8c8] sm:$0xff]
        %v296 = vld [vmem:[#allocation6 + $0x900] sm:$0xff]
        %v297 = vld [vmem:[#allocation6 + $0x908] sm:$0xff]
        %v298 = vld [vmem:[#allocation6 + $0x940] sm:$0xff]
        %v299 = vld [vmem:[#allocation6 + $0x948] sm:$0xff]
        %v300 = vld [vmem:[#allocation6 + $0x980] sm:$0xff]
        %v301 = vld [vmem:[#allocation6 + $0x988] sm:$0xff]
        %v302 = vld [vmem:[#allocation6 + $0x9c0] sm:$0xff]
        %v303 = vld [vmem:[#allocation6 + $0x9c8] sm:$0xff]
        %v304 = vld [vmem:[#allocation6 + $0xa00] sm:$0xff]
        %v305 = vld [vmem:[#allocation6 + $0xa08] sm:$0xff]
        %v306 = vld [vmem:[#allocation6 + $0xa40] sm:$0xff]
        %v307 = vld [vmem:[#allocation6 + $0xa48] sm:$0xff]
        %v308 = vld [vmem:[#allocation6 + $0xa80] sm:$0xff]
        %v309 = vld [vmem:[#allocation6 + $0xa88] sm:$0xff]
        %v310 = vld [vmem:[#allocation6 + $0xac0] sm:$0xff]
        %v311 = vld [vmem:[#allocation6 + $0xac8] sm:$0xff]
        %v312 = vld [vmem:[#allocation6 + $0xb00] sm:$0xff]
        %v313 = vld [vmem:[#allocation6 + $0xb08] sm:$0xff]
        %v314 = vld [vmem:[#allocation6 + $0xb40] sm:$0xff]
        %v315 = vld [vmem:[#allocation6 + $0xb48] sm:$0xff]
        %v316 = vld [vmem:[#allocation6 + $0xb80] sm:$0xff]
        %v317 = vld [vmem:[#allocation6 + $0xb88] sm:$0xff]
        %v318 = vld [vmem:[#allocation6 + $0xbc0] sm:$0xff]
        %v319 = vld [vmem:[#allocation6 + $0xbc8] sm:$0xff]
        %v320 = vld [vmem:[#allocation6 + $0xc00] sm:$0xff]
        %v321 = vld [vmem:[#allocation6 + $0xc08] sm:$0xff]
        %v322 = vld [vmem:[#allocation6 + $0xc40] sm:$0xff]
        %v323 = vld [vmem:[#allocation6 + $0xc48] sm:$0xff]
        %v324 = vld [vmem:[#allocation6 + $0xc80] sm:$0xff]
        %v325 = vld [vmem:[#allocation6 + $0xc88] sm:$0xff]
        %v326 = vld [vmem:[#allocation6 + $0xcc0] sm:$0xff]
        %v327 = vld [vmem:[#allocation6 + $0xcc8] sm:$0xff]
        %v328 = vld [vmem:[#allocation6 + $0xd00] sm:$0xff]
        %v329 = vld [vmem:[#allocation6 + $0xd08] sm:$0xff]
        %v330 = vld [vmem:[#allocation6 + $0xd40] sm:$0xff]
        %v331 = vld [vmem:[#allocation6 + $0xd48] sm:$0xff]
        %v332 = vld [vmem:[#allocation6 + $0xd80] sm:$0xff]
        %v333 = vld [vmem:[#allocation6 + $0xd88] sm:$0xff]
        %v334 = vld [vmem:[#allocation6 + $0xdc0] sm:$0xff]
        %v335 = vld [vmem:[#allocation6 + $0xdc8] sm:$0xff]
        %v336 = vld [vmem:[#allocation6 + $0xe00] sm:$0xff]
        %v337 = vld [vmem:[#allocation6 + $0xe08] sm:$0xff]
        %v338 = vld [vmem:[#allocation6 + $0xe40] sm:$0xff]
        %v339 = vld [vmem:[#allocation6 + $0xe48] sm:$0xff]
        %v340 = vld [vmem:[#allocation6 + $0xe80] sm:$0xff]
        %v341 = vld [vmem:[#allocation6 + $0xe88] sm:$0xff]
        %v342 = vld [vmem:[#allocation6 + $0xec0] sm:$0xff]
        %v343 = vld [vmem:[#allocation6 + $0xec8] sm:$0xff]
        %v344 = vld [vmem:[#allocation6 + $0xf00] sm:$0xff]
        %v345 = vld [vmem:[#allocation6 + $0xf08] sm:$0xff]
        %v346 = vld [vmem:[#allocation6 + $0xf40] sm:$0xff]
        %v347 = vld [vmem:[#allocation6 + $0xf48] sm:$0xff]
        %v348 = vld [vmem:[#allocation6 + $0xf80] sm:$0xff]
        %v349 = vld [vmem:[#allocation6 + $0xf88] sm:$0xff]
        %v350 = vld [vmem:[#allocation6 + $0xfc0] sm:$0xff]
        %v351 = vld [vmem:[#allocation6 + $0xfc8] sm:$0xff]
        %v480 = vunpack.c.l.b16 %v224
        %v481 = vunpack.c.h.b16 %v224
        %v482 = vunpack.c.l.b16 %v225
        %v483 = vunpack.c.h.b16 %v225
        %v484 = vunpack.c.l.b16 %v226
        %v485 = vunpack.c.h.b16 %v226
        %v486 = vunpack.c.l.b16 %v227
        %v487 = vunpack.c.h.b16 %v227
        %v488 = vunpack.c.l.b16 %v228
        %v489 = vunpack.c.h.b16 %v228
        %v490 = vunpack.c.l.b16 %v229
        %v491 = vunpack.c.h.b16 %v229
        %v492 = vunpack.c.l.b16 %v230
        %v493 = vunpack.c.h.b16 %v230
        %v494 = vunpack.c.l.b16 %v231
        %v495 = vunpack.c.h.b16 %v231
        %v496 = vunpack.c.l.b16 %v232
        %v497 = vunpack.c.h.b16 %v232
        %v498 = vunpack.c.l.b16 %v233
        %v499 = vunpack.c.h.b16 %v233
        %v500 = vunpack.c.l.b16 %v234
        %v501 = vunpack.c.h.b16 %v234
        %v502 = vunpack.c.l.b16 %v235
        %v503 = vunpack.c.h.b16 %v235
        %v504 = vunpack.c.l.b16 %v236
        %v505 = vunpack.c.h.b16 %v236
        %v506 = vunpack.c.l.b16 %v237
        %v507 = vunpack.c.h.b16 %v237
        %v508 = vunpack.c.l.b16 %v238
        %v509 = vunpack.c.h.b16 %v238
        %v510 = vunpack.c.l.b16 %v239
        %v511 = vunpack.c.h.b16 %v239
        %v512 = vunpack.c.l.b16 %v240
        %v513 = vunpack.c.h.b16 %v240
        %v514 = vunpack.c.l.b16 %v241
        %v515 = vunpack.c.h.b16 %v241
        %v516 = vunpack.c.l.b16 %v242
        %v517 = vunpack.c.h.b16 %v242
        %v518 = vunpack.c.l.b16 %v243
        %v519 = vunpack.c.h.b16 %v243
        %v520 = vunpack.c.l.b16 %v244
        %v521 = vunpack.c.h.b16 %v244
        %v522 = vunpack.c.l.b16 %v245
        %v523 = vunpack.c.h.b16 %v245
        %v524 = vunpack.c.l.b16 %v246
        %v525 = vunpack.c.h.b16 %v246
        %v526 = vunpack.c.l.b16 %v247
        %v527 = vunpack.c.h.b16 %v247
        %v528 = vunpack.c.l.b16 %v248
        %v529 = vunpack.c.h.b16 %v248
        %v530 = vunpack.c.l.b16 %v249
        %v531 = vunpack.c.h.b16 %v249
        %v532 = vunpack.c.l.b16 %v250
        %v533 = vunpack.c.h.b16 %v250
        %v534 = vunpack.c.l.b16 %v251
        %v535 = vunpack.c.h.b16 %v251
        %v536 = vunpack.c.l.b16 %v252
        %v537 = vunpack.c.h.b16 %v252
        %v538 = vunpack.c.l.b16 %v253
        %v539 = vunpack.c.h.b16 %v253
        %v540 = vunpack.c.l.b16 %v254
        %v541 = vunpack.c.h.b16 %v254
        %v542 = vunpack.c.l.b16 %v255
        %v543 = vunpack.c.h.b16 %v255
        %v544 = vunpack.c.l.b16 %v256
        %v545 = vunpack.c.h.b16 %v256
        %v546 = vunpack.c.l.b16 %v257
        %v547 = vunpack.c.h.b16 %v257
        %v548 = vunpack.c.l.b16 %v258
        %v549 = vunpack.c.h.b16 %v258
        %v550 = vunpack.c.l.b16 %v259
        %v551 = vunpack.c.h.b16 %v259
        %v552 = vunpack.c.l.b16 %v260
        %v553 = vunpack.c.h.b16 %v260
        %v554 = vunpack.c.l.b16 %v261
        %v555 = vunpack.c.h.b16 %v261
        %v556 = vunpack.c.l.b16 %v262
        %v557 = vunpack.c.h.b16 %v262
        %v558 = vunpack.c.l.b16 %v263
        %v559 = vunpack.c.h.b16 %v263
        %v560 = vunpack.c.l.b16 %v264
        %v561 = vunpack.c.h.b16 %v264
        %v562 = vunpack.c.l.b16 %v265
        %v563 = vunpack.c.h.b16 %v265
        %v564 = vunpack.c.l.b16 %v266
        %v565 = vunpack.c.h.b16 %v266
        %v566 = vunpack.c.l.b16 %v267
        %v567 = vunpack.c.h.b16 %v267
        %v568 = vunpack.c.l.b16 %v268
        %v569 = vunpack.c.h.b16 %v268
        %v570 = vunpack.c.l.b16 %v269
        %v571 = vunpack.c.h.b16 %v269
        %v572 = vunpack.c.l.b16 %v270
        %v573 = vunpack.c.h.b16 %v270
        %v574 = vunpack.c.l.b16 %v271
        %v575 = vunpack.c.h.b16 %v271
        %v576 = vunpack.c.l.b16 %v272
        %v577 = vunpack.c.h.b16 %v272
        %v578 = vunpack.c.l.b16 %v273
        %v579 = vunpack.c.h.b16 %v273
        %v580 = vunpack.c.l.b16 %v274
        %v581 = vunpack.c.h.b16 %v274
        %v582 = vunpack.c.l.b16 %v275
        %v583 = vunpack.c.h.b16 %v275
        %v584 = vunpack.c.l.b16 %v276
        %v585 = vunpack.c.h.b16 %v276
        %v586 = vunpack.c.l.b16 %v277
        %v587 = vunpack.c.h.b16 %v277
        %v588 = vunpack.c.l.b16 %v278
        %v589 = vunpack.c.h.b16 %v278
        %v590 = vunpack.c.l.b16 %v279
        %v591 = vunpack.c.h.b16 %v279
        %v592 = vunpack.c.l.b16 %v280
        %v593 = vunpack.c.h.b16 %v280
        %v594 = vunpack.c.l.b16 %v281
        %v595 = vunpack.c.h.b16 %v281
        %v596 = vunpack.c.l.b16 %v282
        %v597 = vunpack.c.h.b16 %v282
        %v598 = vunpack.c.l.b16 %v283
        %v599 = vunpack.c.h.b16 %v283
        %v600 = vunpack.c.l.b16 %v284
        %v601 = vunpack.c.h.b16 %v284
        %v602 = vunpack.c.l.b16 %v285
        %v603 = vunpack.c.h.b16 %v285
        %v604 = vunpack.c.l.b16 %v286
        %v605 = vunpack.c.h.b16 %v286
        %v606 = vunpack.c.l.b16 %v287
        %v607 = vunpack.c.h.b16 %v287
        %v608 = vunpack.c.l.b16 %v288
        %v609 = vunpack.c.h.b16 %v288
        %v610 = vunpack.c.l.b16 %v289
        %v611 = vunpack.c.h.b16 %v289
        %v612 = vunpack.c.l.b16 %v290
        %v613 = vunpack.c.h.b16 %v290
        %v614 = vunpack.c.l.b16 %v291
        %v615 = vunpack.c.h.b16 %v291
        %v616 = vunpack.c.l.b16 %v292
        %v617 = vunpack.c.h.b16 %v292
        %v618 = vunpack.c.l.b16 %v293
        %v619 = vunpack.c.h.b16 %v293
        %v620 = vunpack.c.l.b16 %v294
        %v621 = vunpack.c.h.b16 %v294
        %v622 = vunpack.c.l.b16 %v295
        %v623 = vunpack.c.h.b16 %v295
        %v624 = vunpack.c.l.b16 %v296
        %v625 = vunpack.c.h.b16 %v296
        %v626 = vunpack.c.l.b16 %v297
        %v627 = vunpack.c.h.b16 %v297
        %v628 = vunpack.c.l.b16 %v298
        %v629 = vunpack.c.h.b16 %v298
        %v630 = vunpack.c.l.b16 %v299
        %v631 = vunpack.c.h.b16 %v299
        %v632 = vunpack.c.l.b16 %v300
        %v633 = vunpack.c.h.b16 %v300
        %v634 = vunpack.c.l.b16 %v301
        %v635 = vunpack.c.h.b16 %v301
        %v636 = vunpack.c.l.b16 %v302
        %v637 = vunpack.c.h.b16 %v302
        %v638 = vunpack.c.l.b16 %v303
        %v639 = vunpack.c.h.b16 %v303
        %v640 = vunpack.c.l.b16 %v304
        %v641 = vunpack.c.h.b16 %v304
        %v642 = vunpack.c.l.b16 %v305
        %v643 = vunpack.c.h.b16 %v305
        %v644 = vunpack.c.l.b16 %v306
        %v645 = vunpack.c.h.b16 %v306
        %v646 = vunpack.c.l.b16 %v307
        %v647 = vunpack.c.h.b16 %v307
        %v648 = vunpack.c.l.b16 %v308
        %v649 = vunpack.c.h.b16 %v308
        %v650 = vunpack.c.l.b16 %v309
        %v651 = vunpack.c.h.b16 %v309
        %v652 = vunpack.c.l.b16 %v310
        %v653 = vunpack.c.h.b16 %v310
        %v654 = vunpack.c.l.b16 %v311
        %v655 = vunpack.c.h.b16 %v311
        %v656 = vunpack.c.l.b16 %v312
        %v657 = vunpack.c.h.b16 %v312
        %v658 = vunpack.c.l.b16 %v313
        %v659 = vunpack.c.h.b16 %v313
        %v660 = vunpack.c.l.b16 %v314
        %v661 = vunpack.c.h.b16 %v314
        %v662 = vunpack.c.l.b16 %v315
        %v663 = vunpack.c.h.b16 %v315
        %v664 = vunpack.c.l.b16 %v316
        %v665 = vunpack.c.h.b16 %v316
        %v666 = vunpack.c.l.b16 %v317
        %v667 = vunpack.c.h.b16 %v317
        %v668 = vunpack.c.l.b16 %v318
        %v669 = vunpack.c.h.b16 %v318
        %v670 = vunpack.c.l.b16 %v319
        %v671 = vunpack.c.h.b16 %v319
        %v672 = vunpack.c.l.b16 %v320
        %v673 = vunpack.c.h.b16 %v320
        %v674 = vunpack.c.l.b16 %v321
        %v675 = vunpack.c.h.b16 %v321
        %v676 = vunpack.c.l.b16 %v322
        %v677 = vunpack.c.h.b16 %v322
        %v678 = vunpack.c.l.b16 %v323
        %v679 = vunpack.c.h.b16 %v323
        %v680 = vunpack.c.l.b16 %v324
        %v681 = vunpack.c.h.b16 %v324
        %v682 = vunpack.c.l.b16 %v325
        %v683 = vunpack.c.h.b16 %v325
        %v684 = vunpack.c.l.b16 %v326
        %v685 = vunpack.c.h.b16 %v326
        %v686 = vunpack.c.l.b16 %v327
        %v687 = vunpack.c.h.b16 %v327
        %v688 = vunpack.c.l.b16 %v328
        %v689 = vunpack.c.h.b16 %v328
        %v690 = vunpack.c.l.b16 %v329
        %v691 = vunpack.c.h.b16 %v329
        %v692 = vunpack.c.l.b16 %v330
        %v693 = vunpack.c.h.b16 %v330
        %v694 = vunpack.c.l.b16 %v331
        %v695 = vunpack.c.h.b16 %v331
        %v696 = vunpack.c.l.b16 %v332
        %v697 = vunpack.c.h.b16 %v332
        %v698 = vunpack.c.l.b16 %v333
        %v699 = vunpack.c.h.b16 %v333
        %v700 = vunpack.c.l.b16 %v334
        %v701 = vunpack.c.h.b16 %v334
        %v702 = vunpack.c.l.b16 %v335
        %v703 = vunpack.c.h.b16 %v335
        %v704 = vunpack.c.l.b16 %v336
        %v705 = vunpack.c.h.b16 %v336
        %v706 = vunpack.c.l.b16 %v337
        %v707 = vunpack.c.h.b16 %v337
        %v708 = vunpack.c.l.b16 %v338
        %v709 = vunpack.c.h.b16 %v338
        %v710 = vunpack.c.l.b16 %v339
        %v711 = vunpack.c.h.b16 %v339
        %v712 = vunpack.c.l.b16 %v340
        %v713 = vunpack.c.h.b16 %v340
        %v714 = vunpack.c.l.b16 %v341
        %v715 = vunpack.c.h.b16 %v341
        %v716 = vunpack.c.l.b16 %v342
        %v717 = vunpack.c.h.b16 %v342
        %v718 = vunpack.c.l.b16 %v343
        %v719 = vunpack.c.h.b16 %v343
        %v720 = vunpack.c.l.b16 %v344
        %v721 = vunpack.c.h.b16 %v344
        %v722 = vunpack.c.l.b16 %v345
        %v723 = vunpack.c.h.b16 %v345
        %v724 = vunpack.c.l.b16 %v346
        %v725 = vunpack.c.h.b16 %v346
        %v726 = vunpack.c.l.b16 %v347
        %v727 = vunpack.c.h.b16 %v347
        %v728 = vunpack.c.l.b16 %v348
        %v729 = vunpack.c.h.b16 %v348
        %v730 = vunpack.c.l.b16 %v349
        %v731 = vunpack.c.h.b16 %v349
        %v732 = vunpack.c.l.b16 %v350
        %v733 = vunpack.c.h.b16 %v350
        %v734 = vunpack.c.l.b16 %v351
        %v735 = vunpack.c.h.b16 %v351
        %v736 = vpack.c.b16 %v484, %v480
        %v737 = vpack.c.b16 %v485, %v481
        %v738 = vpack.c.b16 %v486, %v482
        %v739 = vpack.c.b16 %v487, %v483
        %v740 = vpack.c.b16 %v492, %v488
        %v741 = vpack.c.b16 %v493, %v489
        %v742 = vpack.c.b16 %v494, %v490
        %v743 = vpack.c.b16 %v495, %v491
        %v744 = vpack.c.b16 %v500, %v496
        %v745 = vpack.c.b16 %v501, %v497
        %v746 = vpack.c.b16 %v502, %v498
        %v747 = vpack.c.b16 %v503, %v499
        %v748 = vpack.c.b16 %v508, %v504
        %v749 = vpack.c.b16 %v509, %v505
        %v750 = vpack.c.b16 %v510, %v506
        %v751 = vpack.c.b16 %v511, %v507
        %v752 = vpack.c.b16 %v516, %v512
        %v753 = vpack.c.b16 %v517, %v513
        %v754 = vpack.c.b16 %v518, %v514
        %v755 = vpack.c.b16 %v519, %v515
        %v756 = vpack.c.b16 %v524, %v520
        %v757 = vpack.c.b16 %v525, %v521
        %v758 = vpack.c.b16 %v526, %v522
        %v759 = vpack.c.b16 %v527, %v523
        %v760 = vpack.c.b16 %v532, %v528
        %v761 = vpack.c.b16 %v533, %v529
        %v762 = vpack.c.b16 %v534, %v530
        %v763 = vpack.c.b16 %v535, %v531
        %v764 = vpack.c.b16 %v540, %v536
        %v765 = vpack.c.b16 %v541, %v537
        %v766 = vpack.c.b16 %v542, %v538
        %v767 = vpack.c.b16 %v543, %v539
        %v768 = vpack.c.b16 %v548, %v544
        %v769 = vpack.c.b16 %v549, %v545
        %v770 = vpack.c.b16 %v550, %v546
        %v771 = vpack.c.b16 %v551, %v547
        %v772 = vpack.c.b16 %v556, %v552
        %v773 = vpack.c.b16 %v557, %v553
        %v774 = vpack.c.b16 %v558, %v554
        %v775 = vpack.c.b16 %v559, %v555
        %v776 = vpack.c.b16 %v564, %v560
        %v777 = vpack.c.b16 %v565, %v561
        %v778 = vpack.c.b16 %v566, %v562
        %v779 = vpack.c.b16 %v567, %v563
        %v780 = vpack.c.b16 %v572, %v568
        %v781 = vpack.c.b16 %v573, %v569
        %v782 = vpack.c.b16 %v574, %v570
        %v783 = vpack.c.b16 %v575, %v571
        %v784 = vpack.c.b16 %v580, %v576
        %v785 = vpack.c.b16 %v581, %v577
        %v786 = vpack.c.b16 %v582, %v578
        %v787 = vpack.c.b16 %v583, %v579
        %v788 = vpack.c.b16 %v588, %v584
        %v789 = vpack.c.b16 %v589, %v585
        %v790 = vpack.c.b16 %v590, %v586
        %v791 = vpack.c.b16 %v591, %v587
        %v792 = vpack.c.b16 %v596, %v592
        %v793 = vpack.c.b16 %v597, %v593
        %v794 = vpack.c.b16 %v598, %v594
        %v795 = vpack.c.b16 %v599, %v595
        %v796 = vpack.c.b16 %v604, %v600
        %v797 = vpack.c.b16 %v605, %v601
        %v798 = vpack.c.b16 %v606, %v602
        %v799 = vpack.c.b16 %v607, %v603
        %v800 = vpack.c.b16 %v612, %v608
        %v801 = vpack.c.b16 %v613, %v609
        %v802 = vpack.c.b16 %v614, %v610
        %v803 = vpack.c.b16 %v615, %v611
        %v804 = vpack.c.b16 %v620, %v616
        %v805 = vpack.c.b16 %v621, %v617
        %v806 = vpack.c.b16 %v622, %v618
        %v807 = vpack.c.b16 %v623, %v619
        %v808 = vpack.c.b16 %v628, %v624
        %v809 = vpack.c.b16 %v629, %v625
        %v810 = vpack.c.b16 %v630, %v626
        %v811 = vpack.c.b16 %v631, %v627
        %v812 = vpack.c.b16 %v636, %v632
        %v813 = vpack.c.b16 %v637, %v633
        %v814 = vpack.c.b16 %v638, %v634
        %v815 = vpack.c.b16 %v639, %v635
        %v816 = vpack.c.b16 %v644, %v640
        %v817 = vpack.c.b16 %v645, %v641
        %v818 = vpack.c.b16 %v646, %v642
        %v819 = vpack.c.b16 %v647, %v643
        %v820 = vpack.c.b16 %v652, %v648
        %v821 = vpack.c.b16 %v653, %v649
        %v822 = vpack.c.b16 %v654, %v650
        %v823 = vpack.c.b16 %v655, %v651
        %v824 = vpack.c.b16 %v660, %v656
        %v825 = vpack.c.b16 %v661, %v657
        %v826 = vpack.c.b16 %v662, %v658
        %v827 = vpack.c.b16 %v663, %v659
        %v828 = vpack.c.b16 %v668, %v664
        %v829 = vpack.c.b16 %v669, %v665
        %v830 = vpack.c.b16 %v670, %v666
        %v831 = vpack.c.b16 %v671, %v667
        %v832 = vpack.c.b16 %v676, %v672
        %v833 = vpack.c.b16 %v677, %v673
        %v834 = vpack.c.b16 %v678, %v674
        %v835 = vpack.c.b16 %v679, %v675
        %v836 = vpack.c.b16 %v684, %v680
        %v837 = vpack.c.b16 %v685, %v681
        %v838 = vpack.c.b16 %v686, %v682
        %v839 = vpack.c.b16 %v687, %v683
        %v840 = vpack.c.b16 %v692, %v688
        %v841 = vpack.c.b16 %v693, %v689
        %v842 = vpack.c.b16 %v694, %v690
        %v843 = vpack.c.b16 %v695, %v691
        %v844 = vpack.c.b16 %v700, %v696
        %v845 = vpack.c.b16 %v701, %v697
        %v846 = vpack.c.b16 %v702, %v698
        %v847 = vpack.c.b16 %v703, %v699
        %v848 = vpack.c.b16 %v708, %v704
        %v849 = vpack.c.b16 %v709, %v705
        %v850 = vpack.c.b16 %v710, %v706
        %v851 = vpack.c.b16 %v711, %v707
        %v852 = vpack.c.b16 %v716, %v712
        %v853 = vpack.c.b16 %v717, %v713
        %v854 = vpack.c.b16 %v718, %v714
        %v855 = vpack.c.b16 %v719, %v715
        %v856 = vpack.c.b16 %v724, %v720
        %v857 = vpack.c.b16 %v725, %v721
        %v858 = vpack.c.b16 %v726, %v722
        %v859 = vpack.c.b16 %v727, %v723
        %v860 = vpack.c.b16 %v732, %v728
        %v861 = vpack.c.b16 %v733, %v729
        %v862 = vpack.c.b16 %v734, %v730
        %v863 = vpack.c.b16 %v735, %v731
        %992 = vmatprep.subr.bf16.mxu0 %v765
        %993 = vmatpush1.bf16.msra.mxu0 %v764
        %994 = vmatprep.subr.bf16.mxu0 %v761
        %995 = vmatpush1.bf16.msra.mxu0 %v760
        %996 = vmatprep.subr.bf16.mxu0 %v757
        %997 = vmatpush1.bf16.msra.mxu0 %v756
        %998 = vmatprep.subr.bf16.mxu0 %v753
        %999 = vmatpush1.bf16.msra.mxu0 %v752
        %1000 = vmatprep.subr.bf16.mxu0 %v749
        %1001 = vmatpush1.bf16.msra.mxu0 %v748
        %1002 = vmatprep.subr.bf16.mxu0 %v745
        %1003 = vmatpush1.bf16.msra.mxu0 %v744
        %1004 = vmatprep.subr.bf16.mxu0 %v741
        %1005 = vmatpush1.bf16.msra.mxu0 %v740
        %1006 = vmatprep.subr.bf16.mxu0 %v737
        %1007 = vmatpush1.bf16.msra.mxu0 %v736
        %1008 = vmatprep.subr.bf16.mxu0 %v797
        %1009 = vmatpush2.bf16.msra.mxu0 %v796
        %1010 = vmatprep.subr.bf16.mxu0 %v793
        %1011 = vmatpush2.bf16.msra.mxu0 %v792
        %1012 = vmatprep.subr.bf16.mxu0 %v789
        %1013 = vmatpush2.bf16.msra.mxu0 %v788
        %1014 = vmatprep.subr.bf16.mxu0 %v785
        %1015 = vmatpush2.bf16.msra.mxu0 %v784
        %1016 = vmatprep.subr.bf16.mxu0 %v781
        %1017 = vmatpush2.bf16.msra.mxu0 %v780
        %1018 = vmatprep.subr.bf16.mxu0 %v777
        %1019 = vmatpush2.bf16.msra.mxu0 %v776
        %1020 = vmatprep.subr.bf16.mxu0 %v773
        %1021 = vmatpush2.bf16.msra.mxu0 %v772
        %1022 = vmatprep.subr.bf16.mxu0 %v769
        %1023 = vmatpush2.bf16.msra.mxu0 %v768
        %1024 = vmatprep.mubr.bf16.mxu0 %v221
        %1025 = vmatmul.mubr.bf16.gmra.mxu0 %v220
        %v1026 = vpop.f32.mrf.mxu0
        %v1027 = vadd.f32 0.0, %v1026
        %v1028 = vpop.f32.mrf.mxu0
        %v1029 = vadd.f32 0.0, %v1028
        %v1030 = vpop.f32.mrf.mxu0
        %v1031 = vpop.f32.mrf.mxu0
        %1032 = vdwg.mxu0
        %1033 = vmatprep.subr.bf16.mxu0 %v829
        %1034 = vmatpush1.bf16.msra.mxu0 %v828
        %1035 = vmatprep.subr.bf16.mxu0 %v825
        %1036 = vmatpush1.bf16.msra.mxu0 %v824
        %1037 = vmatprep.subr.bf16.mxu0 %v821
        %1038 = vmatpush1.bf16.msra.mxu0 %v820
        %1039 = vmatprep.subr.bf16.mxu0 %v817
        %1040 = vmatpush1.bf16.msra.mxu0 %v816
        %1041 = vmatprep.subr.bf16.mxu0 %v813
        %1042 = vmatpush1.bf16.msra.mxu0 %v812
        %1043 = vmatprep.subr.bf16.mxu0 %v809
        %1044 = vmatpush1.bf16.msra.mxu0 %v808
        %1045 = vmatprep.subr.bf16.mxu0 %v805
        %1046 = vmatpush1.bf16.msra.mxu0 %v804
        %1047 = vmatprep.subr.bf16.mxu0 %v801
        %1048 = vmatpush1.bf16.msra.mxu0 %v800
        %1049 = vmatprep.subr.bf16.mxu0 %v861
        %1050 = vmatpush2.bf16.msra.mxu0 %v860
        %1051 = vmatprep.subr.bf16.mxu0 %v857
        %1052 = vmatpush2.bf16.msra.mxu0 %v856
        %1053 = vmatprep.subr.bf16.mxu0 %v853
        %1054 = vmatpush2.bf16.msra.mxu0 %v852
        %1055 = vmatprep.subr.bf16.mxu0 %v849
        %1056 = vmatpush2.bf16.msra.mxu0 %v848
        %1057 = vmatprep.subr.bf16.mxu0 %v845
        %1058 = vmatpush2.bf16.msra.mxu0 %v844
        %1059 = vmatprep.subr.bf16.mxu0 %v841
        %1060 = vmatpush2.bf16.msra.mxu0 %v840
        %1061 = vmatprep.subr.bf16.mxu0 %v837
        %1062 = vmatpush2.bf16.msra.mxu0 %v836
        %1063 = vmatprep.subr.bf16.mxu0 %v833
        %1064 = vmatpush2.bf16.msra.mxu0 %v832
        %1065 = vmatprep.mubr.bf16.mxu0 %v223
        %1066 = vmatmul.mubr.bf16.gmra.mxu0 %v222
        %v1067 = vpop.f32.mrf.mxu0
        %v1068 = vadd.f32 %v1027, %v1067
        %v1069 = vpop.f32.mrf.mxu0
        %v1070 = vadd.f32 %v1029, %v1069
        %v1071 = vpop.f32.mrf.mxu0
        %v1072 = vpop.f32.mrf.mxu0
        %1073 = vdwg.mxu0
        %1074 = vmatprep.subr.bf16.mxu0 %v767
        %1075 = vmatpush1.bf16.msra.mxu0 %v766
        %1076 = vmatprep.subr.bf16.mxu0 %v763
        %1077 = vmatpush1.bf16.msra.mxu0 %v762
        %1078 = vmatprep.subr.bf16.mxu0 %v759
        %1079 = vmatpush1.bf16.msra.mxu0 %v758
        %1080 = vmatprep.subr.bf16.mxu0 %v755
        %1081 = vmatpush1.bf16.msra.mxu0 %v754
        %1082 = vmatprep.subr.bf16.mxu0 %v751
        %1083 = vmatpush1.bf16.msra.mxu0 %v750
        %1084 = vmatprep.subr.bf16.mxu0 %v747
        %1085 = vmatpush1.bf16.msra.mxu0 %v746
        %1086 = vmatprep.subr.bf16.mxu0 %v743
        %1087 = vmatpush1.bf16.msra.mxu0 %v742
        %1088 = vmatprep.subr.bf16.mxu0 %v739
        %1089 = vmatpush1.bf16.msra.mxu0 %v738
        %1090 = vmatprep.subr.bf16.mxu0 %v799
        %1091 = vmatpush2.bf16.msra.mxu0 %v798
        %1092 = vmatprep.subr.bf16.mxu0 %v795
        %1093 = vmatpush2.bf16.msra.mxu0 %v794
        %1094 = vmatprep.subr.bf16.mxu0 %v791
        %1095 = vmatpush2.bf16.msra.mxu0 %v790
        %1096 = vmatprep.subr.bf16.mxu0 %v787
        %1097 = vmatpush2.bf16.msra.mxu0 %v786
        %1098 = vmatprep.subr.bf16.mxu0 %v783
        %1099 = vmatpush2.bf16.msra.mxu0 %v782
        %1100 = vmatprep.subr.bf16.mxu0 %v779
        %1101 = vmatpush2.bf16.msra.mxu0 %v778
        %1102 = vmatprep.subr.bf16.mxu0 %v775
        %1103 = vmatpush2.bf16.msra.mxu0 %v774
        %1104 = vmatprep.subr.bf16.mxu0 %v771
        %1105 = vmatpush2.bf16.msra.mxu0 %v770
        %1106 = vmatprep.mubr.bf16.mxu0 %v221
        %1107 = vmatmul.mubr.bf16.gmra.mxu0 %v220
        %v1108 = vpop.f32.mrf.mxu0
        %v1109 = vadd.f32 0.0, %v1108
        %v1110 = vpop.f32.mrf.mxu0
        %v1111 = vadd.f32 0.0, %v1110
        %v1112 = vpop.f32.mrf.mxu0
        %v1113 = vpop.f32.mrf.mxu0
        %1114 = vdwg.mxu0
        %1115 = vmatprep.subr.bf16.mxu0 %v831
        %1116 = vmatpush1.bf16.msra.mxu0 %v830
        %1117 = vmatprep.subr.bf16.mxu0 %v827
        %1118 = vmatpush1.bf16.msra.mxu0 %v826
        %1119 = vmatprep.subr.bf16.mxu0 %v823
        %1120 = vmatpush1.bf16.msra.mxu0 %v822
        %1121 = vmatprep.subr.bf16.mxu0 %v819
        %1122 = vmatpush1.bf16.msra.mxu0 %v818
        %1123 = vmatprep.subr.bf16.mxu0 %v815
        %1124 = vmatpush1.bf16.msra.mxu0 %v814
        %1125 = vmatprep.subr.bf16.mxu0 %v811
        %1126 = vmatpush1.bf16.msra.mxu0 %v810
        %1127 = vmatprep.subr.bf16.mxu0 %v807
        %1128 = vmatpush1.bf16.msra.mxu0 %v806
        %1129 = vmatprep.subr.bf16.mxu0 %v803
        %1130 = vmatpush1.bf16.msra.mxu0 %v802
        %1131 = vmatprep.subr.bf16.mxu0 %v863
        %1132 = vmatpush2.bf16.msra.mxu0 %v862
        %1133 = vmatprep.subr.bf16.mxu0 %v859
        %1134 = vmatpush2.bf16.msra.mxu0 %v858
        %1135 = vmatprep.subr.bf16.mxu0 %v855
        %1136 = vmatpush2.bf16.msra.mxu0 %v854
        %1137 = vmatprep.subr.bf16.mxu0 %v851
        %1138 = vmatpush2.bf16.msra.mxu0 %v850
        %1139 = vmatprep.subr.bf16.mxu0 %v847
        %1140 = vmatpush2.bf16.msra.mxu0 %v846
        %1141 = vmatprep.subr.bf16.mxu0 %v843
        %1142 = vmatpush2.bf16.msra.mxu0 %v842
        %1143 = vmatprep.subr.bf16.mxu0 %v839
        %1144 = vmatpush2.bf16.msra.mxu0 %v838
        %1145 = vmatprep.subr.bf16.mxu0 %v835
        %1146 = vmatpush2.bf16.msra.mxu0 %v834
        %1147 = vmatprep.mubr.bf16.mxu0 %v223
        %1148 = vmatmul.mubr.bf16.gmra.mxu0 %v222
        %v1149 = vpop.f32.mrf.mxu0
        %v1150 = vadd.f32 %v1109, %v1149
        %v1151 = vpop.f32.mrf.mxu0
        %v1152 = vadd.f32 %v1111, %v1151
        %v1153 = vpop.f32.mrf.mxu0
        %v1154 = vpop.f32.mrf.mxu0
        %1155 = vdwg.mxu0
        %v1156 = vmax.f32 %v1068, 0.0
        %v1157 = vmax.f32 %v1070, 0.0
        %v1158 = vmax.f32 %v1150, 0.0
        %v1159 = vmax.f32 %v1152, 0.0
        %v1160 = vpack.c.bf16 %v1156, %v1156
        %v1161 = vpack.c.bf16 %v1157, %v1157
        %v1162 = vpack.c.bf16 %v1158, %v1158
        %v1163 = vpack.c.bf16 %v1159, %v1159
        %v1168 = vunpack.c.l.b16 %v1160
        %v1169 = vunpack.c.l.b16 %v1161
        %v1170 = vunpack.c.l.b16 %v1162
        %v1171 = vunpack.c.l.b16 %v1163
        %v1172 = vpack.c.b16 %v1169, %v1168
        %v1173 = vpack.c.b16 %v1171, %v1170
        %1176 = vst [vmem:[#allocation2] sm:$0xff] %v1172
        %1177 = vst [vmem:[#allocation2 + $0x8] sm:$0xff] %v1173
        %v1178 = vld [vmem:[#allocation6 + $0x10] sm:$0xff]
        %v1179 = vld [vmem:[#allocation6 + $0x18] sm:$0xff]
        %v1180 = vld [vmem:[#allocation6 + $0x50] sm:$0xff]
        %v1181 = vld [vmem:[#allocation6 + $0x58] sm:$0xff]
        %v1182 = vld [vmem:[#allocation6 + $0x90] sm:$0xff]
        %v1183 = vld [vmem:[#allocation6 + $0x98] sm:$0xff]
        %v1184 = vld [vmem:[#allocation6 + $0xd0] sm:$0xff]
        %v1185 = vld [vmem:[#allocation6 + $0xd8] sm:$0xff]
        %v1186 = vld [vmem:[#allocation6 + $0x110] sm:$0xff]
        %v1187 = vld [vmem:[#allocation6 + $0x118] sm:$0xff]
        %v1188 = vld [vmem:[#allocation6 + $0x150] sm:$0xff]
        %v1189 = vld [vmem:[#allocation6 + $0x158] sm:$0xff]
        %v1190 = vld [vmem:[#allocation6 + $0x190] sm:$0xff]
        %v1191 = vld [vmem:[#allocation6 + $0x198] sm:$0xff]
        %v1192 = vld [vmem:[#allocation6 + $0x1d0] sm:$0xff]
        %v1193 = vld [vmem:[#allocation6 + $0x1d8] sm:$0xff]
        %v1194 = vld [vmem:[#allocation6 + $0x210] sm:$0xff]
        %v1195 = vld [vmem:[#allocation6 + $0x218] sm:$0xff]
        %v1196 = vld [vmem:[#allocation6 + $0x250] sm:$0xff]
        %v1197 = vld [vmem:[#allocation6 + $0x258] sm:$0xff]
        %v1198 = vld [vmem:[#allocation6 + $0x290] sm:$0xff]
        %v1199 = vld [vmem:[#allocation6 + $0x298] sm:$0xff]
        %v1200 = vld [vmem:[#allocation6 + $0x2d0] sm:$0xff]
        %v1201 = vld [vmem:[#allocation6 + $0x2d8] sm:$0xff]
        %v1202 = vld [vmem:[#allocation6 + $0x310] sm:$0xff]
        %v1203 = vld [vmem:[#allocation6 + $0x318] sm:$0xff]
        %v1204 = vld [vmem:[#allocation6 + $0x350] sm:$0xff]
        %v1205 = vld [vmem:[#allocation6 + $0x358] sm:$0xff]
        %v1206 = vld [vmem:[#allocation6 + $0x390] sm:$0xff]
        %v1207 = vld [vmem:[#allocation6 + $0x398] sm:$0xff]
        %v1208 = vld [vmem:[#allocation6 + $0x3d0] sm:$0xff]
        %v1209 = vld [vmem:[#allocation6 + $0x3d8] sm:$0xff]
        %v1210 = vld [vmem:[#allocation6 + $0x410] sm:$0xff]
        %v1211 = vld [vmem:[#allocation6 + $0x418] sm:$0xff]
        %v1212 = vld [vmem:[#allocation6 + $0x450] sm:$0xff]
        %v1213 = vld [vmem:[#allocation6 + $0x458] sm:$0xff]
        %v1214 = vld [vmem:[#allocation6 + $0x490] sm:$0xff]
        %v1215 = vld [vmem:[#allocation6 + $0x498] sm:$0xff]
        %v1216 = vld [vmem:[#allocation6 + $0x4d0] sm:$0xff]
        %v1217 = vld [vmem:[#allocation6 + $0x4d8] sm:$0xff]
        %v1218 = vld [vmem:[#allocation6 + $0x510] sm:$0xff]
        %v1219 = vld [vmem:[#allocation6 + $0x518] sm:$0xff]
        %v1220 = vld [vmem:[#allocation6 + $0x550] sm:$0xff]
        %v1221 = vld [vmem:[#allocation6 + $0x558] sm:$0xff]
        %v1222 = vld [vmem:[#allocation6 + $0x590] sm:$0xff]
        %v1223 = vld [vmem:[#allocation6 + $0x598] sm:$0xff]
        %v1224 = vld [vmem:[#allocation6 + $0x5d0] sm:$0xff]
        %v1225 = vld [vmem:[#allocation6 + $0x5d8] sm:$0xff]
        %v1226 = vld [vmem:[#allocation6 + $0x610] sm:$0xff]
        %v1227 = vld [vmem:[#allocation6 + $0x618] sm:$0xff]
        %v1228 = vld [vmem:[#allocation6 + $0x650] sm:$0xff]
        %v1229 = vld [vmem:[#allocation6 + $0x658] sm:$0xff]
        %v1230 = vld [vmem:[#allocation6 + $0x690] sm:$0xff]
        %v1231 = vld [vmem:[#allocation6 + $0x698] sm:$0xff]
        %v1232 = vld [vmem:[#allocation6 + $0x6d0] sm:$0xff]
        %v1233 = vld [vmem:[#allocation6 + $0x6d8] sm:$0xff]
        %v1234 = vld [vmem:[#allocation6 + $0x710] sm:$0xff]
        %v1235 = vld [vmem:[#allocation6 + $0x718] sm:$0xff]
        %v1236 = vld [vmem:[#allocation6 + $0x750] sm:$0xff]
        %v1237 = vld [vmem:[#allocation6 + $0x758] sm:$0xff]
        %v1238 = vld [vmem:[#allocation6 + $0x790] sm:$0xff]
        %v1239 = vld [vmem:[#allocation6 + $0x798] sm:$0xff]
        %v1240 = vld [vmem:[#allocation6 + $0x7d0] sm:$0xff]
        %v1241 = vld [vmem:[#allocation6 + $0x7d8] sm:$0xff]
        %v1242 = vld [vmem:[#allocation6 + $0x810] sm:$0xff]
        %v1243 = vld [vmem:[#allocation6 + $0x818] sm:$0xff]
        %v1244 = vld [vmem:[#allocation6 + $0x850] sm:$0xff]
        %v1245 = vld [vmem:[#allocation6 + $0x858] sm:$0xff]
        %v1246 = vld [vmem:[#allocation6 + $0x890] sm:$0xff]
        %v1247 = vld [vmem:[#allocation6 + $0x898] sm:$0xff]
        %v1248 = vld [vmem:[#allocation6 + $0x8d0] sm:$0xff]
        %v1249 = vld [vmem:[#allocation6 + $0x8d8] sm:$0xff]
        %v1250 = vld [vmem:[#allocation6 + $0x910] sm:$0xff]
        %v1251 = vld [vmem:[#allocation6 + $0x918] sm:$0xff]
        %v1252 = vld [vmem:[#allocation6 + $0x950] sm:$0xff]
        %v1253 = vld [vmem:[#allocation6 + $0x958] sm:$0xff]
        %v1254 = vld [vmem:[#allocation6 + $0x990] sm:$0xff]
        %v1255 = vld [vmem:[#allocation6 + $0x998] sm:$0xff]
        %v1256 = vld [vmem:[#allocation6 + $0x9d0] sm:$0xff]
        %v1257 = vld [vmem:[#allocation6 + $0x9d8] sm:$0xff]
        %v1258 = vld [vmem:[#allocation6 + $0xa10] sm:$0xff]
        %v1259 = vld [vmem:[#allocation6 + $0xa18] sm:$0xff]
        %v1260 = vld [vmem:[#allocation6 + $0xa50] sm:$0xff]
        %v1261 = vld [vmem:[#allocation6 + $0xa58] sm:$0xff]
        %v1262 = vld [vmem:[#allocation6 + $0xa90] sm:$0xff]
        %v1263 = vld [vmem:[#allocation6 + $0xa98] sm:$0xff]
        %v1264 = vld [vmem:[#allocation6 + $0xad0] sm:$0xff]
        %v1265 = vld [vmem:[#allocation6 + $0xad8] sm:$0xff]
        %v1266 = vld [vmem:[#allocation6 + $0xb10] sm:$0xff]
        %v1267 = vld [vmem:[#allocation6 + $0xb18] sm:$0xff]
        %v1268 = vld [vmem:[#allocation6 + $0xb50] sm:$0xff]
        %v1269 = vld [vmem:[#allocation6 + $0xb58] sm:$0xff]
        %v1270 = vld [vmem:[#allocation6 + $0xb90] sm:$0xff]
        %v1271 = vld [vmem:[#allocation6 + $0xb98] sm:$0xff]
        %v1272 = vld [vmem:[#allocation6 + $0xbd0] sm:$0xff]
        %v1273 = vld [vmem:[#allocation6 + $0xbd8] sm:$0xff]
        %v1274 = vld [vmem:[#allocation6 + $0xc10] sm:$0xff]
        %v1275 = vld [vmem:[#allocation6 + $0xc18] sm:$0xff]
        %v1276 = vld [vmem:[#allocation6 + $0xc50] sm:$0xff]
        %v1277 = vld [vmem:[#allocation6 + $0xc58] sm:$0xff]
        %v1278 = vld [vmem:[#allocation6 + $0xc90] sm:$0xff]
        %v1279 = vld [vmem:[#allocation6 + $0xc98] sm:$0xff]
        %v1280 = vld [vmem:[#allocation6 + $0xcd0] sm:$0xff]
        %v1281 = vld [vmem:[#allocation6 + $0xcd8] sm:$0xff]
        %v1282 = vld [vmem:[#allocation6 + $0xd10] sm:$0xff]
        %v1283 = vld [vmem:[#allocation6 + $0xd18] sm:$0xff]
        %v1284 = vld [vmem:[#allocation6 + $0xd50] sm:$0xff]
        %v1285 = vld [vmem:[#allocation6 + $0xd58] sm:$0xff]
        %v1286 = vld [vmem:[#allocation6 + $0xd90] sm:$0xff]
        %v1287 = vld [vmem:[#allocation6 + $0xd98] sm:$0xff]
        %v1288 = vld [vmem:[#allocation6 + $0xdd0] sm:$0xff]
        %v1289 = vld [vmem:[#allocation6 + $0xdd8] sm:$0xff]
        %v1290 = vld [vmem:[#allocation6 + $0xe10] sm:$0xff]
        %v1291 = vld [vmem:[#allocation6 + $0xe18] sm:$0xff]
        %v1292 = vld [vmem:[#allocation6 + $0xe50] sm:$0xff]
        %v1293 = vld [vmem:[#allocation6 + $0xe58] sm:$0xff]
        %v1294 = vld [vmem:[#allocation6 + $0xe90] sm:$0xff]
        %v1295 = vld [vmem:[#allocation6 + $0xe98] sm:$0xff]
        %v1296 = vld [vmem:[#allocation6 + $0xed0] sm:$0xff]
        %v1297 = vld [vmem:[#allocation6 + $0xed8] sm:$0xff]
        %v1298 = vld [vmem:[#allocation6 + $0xf10] sm:$0xff]
        %v1299 = vld [vmem:[#allocation6 + $0xf18] sm:$0xff]
        %v1300 = vld [vmem:[#allocation6 + $0xf50] sm:$0xff]
        %v1301 = vld [vmem:[#allocation6 + $0xf58] sm:$0xff]
        %v1302 = vld [vmem:[#allocation6 + $0xf90] sm:$0xff]
        %v1303 = vld [vmem:[#allocation6 + $0xf98] sm:$0xff]
        %v1304 = vld [vmem:[#allocation6 + $0xfd0] sm:$0xff]
        %v1305 = vld [vmem:[#allocation6 + $0xfd8] sm:$0xff]
        %v1434 = vunpack.c.l.b16 %v1178
        %v1435 = vunpack.c.h.b16 %v1178
        %v1436 = vunpack.c.l.b16 %v1179
        %v1437 = vunpack.c.h.b16 %v1179
        %v1438 = vunpack.c.l.b16 %v1180
        %v1439 = vunpack.c.h.b16 %v1180
        %v1440 = vunpack.c.l.b16 %v1181
        %v1441 = vunpack.c.h.b16 %v1181
        %v1442 = vunpack.c.l.b16 %v1182
        %v1443 = vunpack.c.h.b16 %v1182
        %v1444 = vunpack.c.l.b16 %v1183
        %v1445 = vunpack.c.h.b16 %v1183
        %v1446 = vunpack.c.l.b16 %v1184
        %v1447 = vunpack.c.h.b16 %v1184
        %v1448 = vunpack.c.l.b16 %v1185
        %v1449 = vunpack.c.h.b16 %v1185
        %v1450 = vunpack.c.l.b16 %v1186
        %v1451 = vunpack.c.h.b16 %v1186
        %v1452 = vunpack.c.l.b16 %v1187
        %v1453 = vunpack.c.h.b16 %v1187
        %v1454 = vunpack.c.l.b16 %v1188
        %v1455 = vunpack.c.h.b16 %v1188
        %v1456 = vunpack.c.l.b16 %v1189
        %v1457 = vunpack.c.h.b16 %v1189
        %v1458 = vunpack.c.l.b16 %v1190
        %v1459 = vunpack.c.h.b16 %v1190
        %v1460 = vunpack.c.l.b16 %v1191
        %v1461 = vunpack.c.h.b16 %v1191
        %v1462 = vunpack.c.l.b16 %v1192
        %v1463 = vunpack.c.h.b16 %v1192
        %v1464 = vunpack.c.l.b16 %v1193
        %v1465 = vunpack.c.h.b16 %v1193
        %v1466 = vunpack.c.l.b16 %v1194
        %v1467 = vunpack.c.h.b16 %v1194
        %v1468 = vunpack.c.l.b16 %v1195
        %v1469 = vunpack.c.h.b16 %v1195
        %v1470 = vunpack.c.l.b16 %v1196
        %v1471 = vunpack.c.h.b16 %v1196
        %v1472 = vunpack.c.l.b16 %v1197
        %v1473 = vunpack.c.h.b16 %v1197
        %v1474 = vunpack.c.l.b16 %v1198
        %v1475 = vunpack.c.h.b16 %v1198
        %v1476 = vunpack.c.l.b16 %v1199
        %v1477 = vunpack.c.h.b16 %v1199
        %v1478 = vunpack.c.l.b16 %v1200
        %v1479 = vunpack.c.h.b16 %v1200
        %v1480 = vunpack.c.l.b16 %v1201
        %v1481 = vunpack.c.h.b16 %v1201
        %v1482 = vunpack.c.l.b16 %v1202
        %v1483 = vunpack.c.h.b16 %v1202
        %v1484 = vunpack.c.l.b16 %v1203
        %v1485 = vunpack.c.h.b16 %v1203
        %v1486 = vunpack.c.l.b16 %v1204
        %v1487 = vunpack.c.h.b16 %v1204
        %v1488 = vunpack.c.l.b16 %v1205
        %v1489 = vunpack.c.h.b16 %v1205
        %v1490 = vunpack.c.l.b16 %v1206
        %v1491 = vunpack.c.h.b16 %v1206
        %v1492 = vunpack.c.l.b16 %v1207
        %v1493 = vunpack.c.h.b16 %v1207
        %v1494 = vunpack.c.l.b16 %v1208
        %v1495 = vunpack.c.h.b16 %v1208
        %v1496 = vunpack.c.l.b16 %v1209
        %v1497 = vunpack.c.h.b16 %v1209
        %v1498 = vunpack.c.l.b16 %v1210
        %v1499 = vunpack.c.h.b16 %v1210
        %v1500 = vunpack.c.l.b16 %v1211
        %v1501 = vunpack.c.h.b16 %v1211
        %v1502 = vunpack.c.l.b16 %v1212
        %v1503 = vunpack.c.h.b16 %v1212
        %v1504 = vunpack.c.l.b16 %v1213
        %v1505 = vunpack.c.h.b16 %v1213
        %v1506 = vunpack.c.l.b16 %v1214
        %v1507 = vunpack.c.h.b16 %v1214
        %v1508 = vunpack.c.l.b16 %v1215
        %v1509 = vunpack.c.h.b16 %v1215
        %v1510 = vunpack.c.l.b16 %v1216
        %v1511 = vunpack.c.h.b16 %v1216
        %v1512 = vunpack.c.l.b16 %v1217
        %v1513 = vunpack.c.h.b16 %v1217
        %v1514 = vunpack.c.l.b16 %v1218
        %v1515 = vunpack.c.h.b16 %v1218
        %v1516 = vunpack.c.l.b16 %v1219
        %v1517 = vunpack.c.h.b16 %v1219
        %v1518 = vunpack.c.l.b16 %v1220
        %v1519 = vunpack.c.h.b16 %v1220
        %v1520 = vunpack.c.l.b16 %v1221
        %v1521 = vunpack.c.h.b16 %v1221
        %v1522 = vunpack.c.l.b16 %v1222
        %v1523 = vunpack.c.h.b16 %v1222
        %v1524 = vunpack.c.l.b16 %v1223
        %v1525 = vunpack.c.h.b16 %v1223
        %v1526 = vunpack.c.l.b16 %v1224
        %v1527 = vunpack.c.h.b16 %v1224
        %v1528 = vunpack.c.l.b16 %v1225
        %v1529 = vunpack.c.h.b16 %v1225
        %v1530 = vunpack.c.l.b16 %v1226
        %v1531 = vunpack.c.h.b16 %v1226
        %v1532 = vunpack.c.l.b16 %v1227
        %v1533 = vunpack.c.h.b16 %v1227
        %v1534 = vunpack.c.l.b16 %v1228
        %v1535 = vunpack.c.h.b16 %v1228
        %v1536 = vunpack.c.l.b16 %v1229
        %v1537 = vunpack.c.h.b16 %v1229
        %v1538 = vunpack.c.l.b16 %v1230
        %v1539 = vunpack.c.h.b16 %v1230
        %v1540 = vunpack.c.l.b16 %v1231
        %v1541 = vunpack.c.h.b16 %v1231
        %v1542 = vunpack.c.l.b16 %v1232
        %v1543 = vunpack.c.h.b16 %v1232
        %v1544 = vunpack.c.l.b16 %v1233
        %v1545 = vunpack.c.h.b16 %v1233
        %v1546 = vunpack.c.l.b16 %v1234
        %v1547 = vunpack.c.h.b16 %v1234
        %v1548 = vunpack.c.l.b16 %v1235
        %v1549 = vunpack.c.h.b16 %v1235
        %v1550 = vunpack.c.l.b16 %v1236
        %v1551 = vunpack.c.h.b16 %v1236
        %v1552 = vunpack.c.l.b16 %v1237
        %v1553 = vunpack.c.h.b16 %v1237
        %v1554 = vunpack.c.l.b16 %v1238
        %v1555 = vunpack.c.h.b16 %v1238
        %v1556 = vunpack.c.l.b16 %v1239
        %v1557 = vunpack.c.h.b16 %v1239
        %v1558 = vunpack.c.l.b16 %v1240
        %v1559 = vunpack.c.h.b16 %v1240
        %v1560 = vunpack.c.l.b16 %v1241
        %v1561 = vunpack.c.h.b16 %v1241
        %v1562 = vunpack.c.l.b16 %v1242
        %v1563 = vunpack.c.h.b16 %v1242
        %v1564 = vunpack.c.l.b16 %v1243
        %v1565 = vunpack.c.h.b16 %v1243
        %v1566 = vunpack.c.l.b16 %v1244
        %v1567 = vunpack.c.h.b16 %v1244
        %v1568 = vunpack.c.l.b16 %v1245
        %v1569 = vunpack.c.h.b16 %v1245
        %v1570 = vunpack.c.l.b16 %v1246
        %v1571 = vunpack.c.h.b16 %v1246
        %v1572 = vunpack.c.l.b16 %v1247
        %v1573 = vunpack.c.h.b16 %v1247
        %v1574 = vunpack.c.l.b16 %v1248
        %v1575 = vunpack.c.h.b16 %v1248
        %v1576 = vunpack.c.l.b16 %v1249
        %v1577 = vunpack.c.h.b16 %v1249
        %v1578 = vunpack.c.l.b16 %v1250
        %v1579 = vunpack.c.h.b16 %v1250
        %v1580 = vunpack.c.l.b16 %v1251
        %v1581 = vunpack.c.h.b16 %v1251
        %v1582 = vunpack.c.l.b16 %v1252
        %v1583 = vunpack.c.h.b16 %v1252
        %v1584 = vunpack.c.l.b16 %v1253
        %v1585 = vunpack.c.h.b16 %v1253
        %v1586 = vunpack.c.l.b16 %v1254
        %v1587 = vunpack.c.h.b16 %v1254
        %v1588 = vunpack.c.l.b16 %v1255
        %v1589 = vunpack.c.h.b16 %v1255
        %v1590 = vunpack.c.l.b16 %v1256
        %v1591 = vunpack.c.h.b16 %v1256
        %v1592 = vunpack.c.l.b16 %v1257
        %v1593 = vunpack.c.h.b16 %v1257
        %v1594 = vunpack.c.l.b16 %v1258
        %v1595 = vunpack.c.h.b16 %v1258
        %v1596 = vunpack.c.l.b16 %v1259
        %v1597 = vunpack.c.h.b16 %v1259
        %v1598 = vunpack.c.l.b16 %v1260
        %v1599 = vunpack.c.h.b16 %v1260
        %v1600 = vunpack.c.l.b16 %v1261
        %v1601 = vunpack.c.h.b16 %v1261
        %v1602 = vunpack.c.l.b16 %v1262
        %v1603 = vunpack.c.h.b16 %v1262
        %v1604 = vunpack.c.l.b16 %v1263
        %v1605 = vunpack.c.h.b16 %v1263
        %v1606 = vunpack.c.l.b16 %v1264
        %v1607 = vunpack.c.h.b16 %v1264
        %v1608 = vunpack.c.l.b16 %v1265
        %v1609 = vunpack.c.h.b16 %v1265
        %v1610 = vunpack.c.l.b16 %v1266
        %v1611 = vunpack.c.h.b16 %v1266
        %v1612 = vunpack.c.l.b16 %v1267
        %v1613 = vunpack.c.h.b16 %v1267
        %v1614 = vunpack.c.l.b16 %v1268
        %v1615 = vunpack.c.h.b16 %v1268
        %v1616 = vunpack.c.l.b16 %v1269
        %v1617 = vunpack.c.h.b16 %v1269
        %v1618 = vunpack.c.l.b16 %v1270
        %v1619 = vunpack.c.h.b16 %v1270
        %v1620 = vunpack.c.l.b16 %v1271
        %v1621 = vunpack.c.h.b16 %v1271
        %v1622 = vunpack.c.l.b16 %v1272
        %v1623 = vunpack.c.h.b16 %v1272
        %v1624 = vunpack.c.l.b16 %v1273
        %v1625 = vunpack.c.h.b16 %v1273
        %v1626 = vunpack.c.l.b16 %v1274
        %v1627 = vunpack.c.h.b16 %v1274
        %v1628 = vunpack.c.l.b16 %v1275
        %v1629 = vunpack.c.h.b16 %v1275
        %v1630 = vunpack.c.l.b16 %v1276
        %v1631 = vunpack.c.h.b16 %v1276
        %v1632 = vunpack.c.l.b16 %v1277
        %v1633 = vunpack.c.h.b16 %v1277
        %v1634 = vunpack.c.l.b16 %v1278
        %v1635 = vunpack.c.h.b16 %v1278
        %v1636 = vunpack.c.l.b16 %v1279
        %v1637 = vunpack.c.h.b16 %v1279
        %v1638 = vunpack.c.l.b16 %v1280
        %v1639 = vunpack.c.h.b16 %v1280
        %v1640 = vunpack.c.l.b16 %v1281
        %v1641 = vunpack.c.h.b16 %v1281
        %v1642 = vunpack.c.l.b16 %v1282
        %v1643 = vunpack.c.h.b16 %v1282
        %v1644 = vunpack.c.l.b16 %v1283
        %v1645 = vunpack.c.h.b16 %v1283
        %v1646 = vunpack.c.l.b16 %v1284
        %v1647 = vunpack.c.h.b16 %v1284
        %v1648 = vunpack.c.l.b16 %v1285
        %v1649 = vunpack.c.h.b16 %v1285
        %v1650 = vunpack.c.l.b16 %v1286
        %v1651 = vunpack.c.h.b16 %v1286
        %v1652 = vunpack.c.l.b16 %v1287
        %v1653 = vunpack.c.h.b16 %v1287
        %v1654 = vunpack.c.l.b16 %v1288
        %v1655 = vunpack.c.h.b16 %v1288
        %v1656 = vunpack.c.l.b16 %v1289
        %v1657 = vunpack.c.h.b16 %v1289
        %v1658 = vunpack.c.l.b16 %v1290
        %v1659 = vunpack.c.h.b16 %v1290
        %v1660 = vunpack.c.l.b16 %v1291
        %v1661 = vunpack.c.h.b16 %v1291
        %v1662 = vunpack.c.l.b16 %v1292
        %v1663 = vunpack.c.h.b16 %v1292
        %v1664 = vunpack.c.l.b16 %v1293
        %v1665 = vunpack.c.h.b16 %v1293
        %v1666 = vunpack.c.l.b16 %v1294
        %v1667 = vunpack.c.h.b16 %v1294
        %v1668 = vunpack.c.l.b16 %v1295
        %v1669 = vunpack.c.h.b16 %v1295
        %v1670 = vunpack.c.l.b16 %v1296
        %v1671 = vunpack.c.h.b16 %v1296
        %v1672 = vunpack.c.l.b16 %v1297
        %v1673 = vunpack.c.h.b16 %v1297
        %v1674 = vunpack.c.l.b16 %v1298
        %v1675 = vunpack.c.h.b16 %v1298
        %v1676 = vunpack.c.l.b16 %v1299
        %v1677 = vunpack.c.h.b16 %v1299
        %v1678 = vunpack.c.l.b16 %v1300
        %v1679 = vunpack.c.h.b16 %v1300
        %v1680 = vunpack.c.l.b16 %v1301
        %v1681 = vunpack.c.h.b16 %v1301
        %v1682 = vunpack.c.l.b16 %v1302
        %v1683 = vunpack.c.h.b16 %v1302
        %v1684 = vunpack.c.l.b16 %v1303
        %v1685 = vunpack.c.h.b16 %v1303
        %v1686 = vunpack.c.l.b16 %v1304
        %v1687 = vunpack.c.h.b16 %v1304
        %v1688 = vunpack.c.l.b16 %v1305
        %v1689 = vunpack.c.h.b16 %v1305
        %v1690 = vpack.c.b16 %v1438, %v1434
        %v1691 = vpack.c.b16 %v1439, %v1435
        %v1692 = vpack.c.b16 %v1440, %v1436
        %v1693 = vpack.c.b16 %v1441, %v1437
        %v1694 = vpack.c.b16 %v1446, %v1442
        %v1695 = vpack.c.b16 %v1447, %v1443
        %v1696 = vpack.c.b16 %v1448, %v1444
        %v1697 = vpack.c.b16 %v1449, %v1445
        %v1698 = vpack.c.b16 %v1454, %v1450
        %v1699 = vpack.c.b16 %v1455, %v1451
        %v1700 = vpack.c.b16 %v1456, %v1452
        %v1701 = vpack.c.b16 %v1457, %v1453
        %v1702 = vpack.c.b16 %v1462, %v1458
        %v1703 = vpack.c.b16 %v1463, %v1459
        %v1704 = vpack.c.b16 %v1464, %v1460
        %v1705 = vpack.c.b16 %v1465, %v1461
        %v1706 = vpack.c.b16 %v1470, %v1466
        %v1707 = vpack.c.b16 %v1471, %v1467
        %v1708 = vpack.c.b16 %v1472, %v1468
        %v1709 = vpack.c.b16 %v1473, %v1469
        %v1710 = vpack.c.b16 %v1478, %v1474
        %v1711 = vpack.c.b16 %v1479, %v1475
        %v1712 = vpack.c.b16 %v1480, %v1476
        %v1713 = vpack.c.b16 %v1481, %v1477
        %v1714 = vpack.c.b16 %v1486, %v1482
        %v1715 = vpack.c.b16 %v1487, %v1483
        %v1716 = vpack.c.b16 %v1488, %v1484
        %v1717 = vpack.c.b16 %v1489, %v1485
        %v1718 = vpack.c.b16 %v1494, %v1490
        %v1719 = vpack.c.b16 %v1495, %v1491
        %v1720 = vpack.c.b16 %v1496, %v1492
        %v1721 = vpack.c.b16 %v1497, %v1493
        %v1722 = vpack.c.b16 %v1502, %v1498
        %v1723 = vpack.c.b16 %v1503, %v1499
        %v1724 = vpack.c.b16 %v1504, %v1500
        %v1725 = vpack.c.b16 %v1505, %v1501
        %v1726 = vpack.c.b16 %v1510, %v1506
        %v1727 = vpack.c.b16 %v1511, %v1507
        %v1728 = vpack.c.b16 %v1512, %v1508
        %v1729 = vpack.c.b16 %v1513, %v1509
        %v1730 = vpack.c.b16 %v1518, %v1514
        %v1731 = vpack.c.b16 %v1519, %v1515
        %v1732 = vpack.c.b16 %v1520, %v1516
        %v1733 = vpack.c.b16 %v1521, %v1517
        %v1734 = vpack.c.b16 %v1526, %v1522
        %v1735 = vpack.c.b16 %v1527, %v1523
        %v1736 = vpack.c.b16 %v1528, %v1524
        %v1737 = vpack.c.b16 %v1529, %v1525
        %v1738 = vpack.c.b16 %v1534, %v1530
        %v1739 = vpack.c.b16 %v1535, %v1531
        %v1740 = vpack.c.b16 %v1536, %v1532
        %v1741 = vpack.c.b16 %v1537, %v1533
        %v1742 = vpack.c.b16 %v1542, %v1538
        %v1743 = vpack.c.b16 %v1543, %v1539
        %v1744 = vpack.c.b16 %v1544, %v1540
        %v1745 = vpack.c.b16 %v1545, %v1541
        %v1746 = vpack.c.b16 %v1550, %v1546
        %v1747 = vpack.c.b16 %v1551, %v1547
        %v1748 = vpack.c.b16 %v1552, %v1548
        %v1749 = vpack.c.b16 %v1553, %v1549
        %v1750 = vpack.c.b16 %v1558, %v1554
        %v1751 = vpack.c.b16 %v1559, %v1555
        %v1752 = vpack.c.b16 %v1560, %v1556
        %v1753 = vpack.c.b16 %v1561, %v1557
        %v1754 = vpack.c.b16 %v1566, %v1562
        %v1755 = vpack.c.b16 %v1567, %v1563
        %v1756 = vpack.c.b16 %v1568, %v1564
        %v1757 = vpack.c.b16 %v1569, %v1565
        %v1758 = vpack.c.b16 %v1574, %v1570
        %v1759 = vpack.c.b16 %v1575, %v1571
        %v1760 = vpack.c.b16 %v1576, %v1572
        %v1761 = vpack.c.b16 %v1577, %v1573
        %v1762 = vpack.c.b16 %v1582, %v1578
        %v1763 = vpack.c.b16 %v1583, %v1579
        %v1764 = vpack.c.b16 %v1584, %v1580
        %v1765 = vpack.c.b16 %v1585, %v1581
        %v1766 = vpack.c.b16 %v1590, %v1586
        %v1767 = vpack.c.b16 %v1591, %v1587
        %v1768 = vpack.c.b16 %v1592, %v1588
        %v1769 = vpack.c.b16 %v1593, %v1589
        %v1770 = vpack.c.b16 %v1598, %v1594
        %v1771 = vpack.c.b16 %v1599, %v1595
        %v1772 = vpack.c.b16 %v1600, %v1596
        %v1773 = vpack.c.b16 %v1601, %v1597
        %v1774 = vpack.c.b16 %v1606, %v1602
        %v1775 = vpack.c.b16 %v1607, %v1603
        %v1776 = vpack.c.b16 %v1608, %v1604
        %v1777 = vpack.c.b16 %v1609, %v1605
        %v1778 = vpack.c.b16 %v1614, %v1610
        %v1779 = vpack.c.b16 %v1615, %v1611
        %v1780 = vpack.c.b16 %v1616, %v1612
        %v1781 = vpack.c.b16 %v1617, %v1613
        %v1782 = vpack.c.b16 %v1622, %v1618
        %v1783 = vpack.c.b16 %v1623, %v1619
        %v1784 = vpack.c.b16 %v1624, %v1620
        %v1785 = vpack.c.b16 %v1625, %v1621
        %v1786 = vpack.c.b16 %v1630, %v1626
        %v1787 = vpack.c.b16 %v1631, %v1627
        %v1788 = vpack.c.b16 %v1632, %v1628
        %v1789 = vpack.c.b16 %v1633, %v1629
        %v1790 = vpack.c.b16 %v1638, %v1634
        %v1791 = vpack.c.b16 %v1639, %v1635
        %v1792 = vpack.c.b16 %v1640, %v1636
        %v1793 = vpack.c.b16 %v1641, %v1637
        %v1794 = vpack.c.b16 %v1646, %v1642
        %v1795 = vpack.c.b16 %v1647, %v1643
        %v1796 = vpack.c.b16 %v1648, %v1644
        %v1797 = vpack.c.b16 %v1649, %v1645
        %v1798 = vpack.c.b16 %v1654, %v1650
        %v1799 = vpack.c.b16 %v1655, %v1651
        %v1800 = vpack.c.b16 %v1656, %v1652
        %v1801 = vpack.c.b16 %v1657, %v1653
        %v1802 = vpack.c.b16 %v1662, %v1658
        %v1803 = vpack.c.b16 %v1663, %v1659
        %v1804 = vpack.c.b16 %v1664, %v1660
        %v1805 = vpack.c.b16 %v1665, %v1661
        %v1806 = vpack.c.b16 %v1670, %v1666
        %v1807 = vpack.c.b16 %v1671, %v1667
        %v1808 = vpack.c.b16 %v1672, %v1668
        %v1809 = vpack.c.b16 %v1673, %v1669
        %v1810 = vpack.c.b16 %v1678, %v1674
        %v1811 = vpack.c.b16 %v1679, %v1675
        %v1812 = vpack.c.b16 %v1680, %v1676
        %v1813 = vpack.c.b16 %v1681, %v1677
        %v1814 = vpack.c.b16 %v1686, %v1682
        %v1815 = vpack.c.b16 %v1687, %v1683
        %v1816 = vpack.c.b16 %v1688, %v1684
        %v1817 = vpack.c.b16 %v1689, %v1685
        %1946 = vmatprep.subr.bf16.mxu0 %v1719
        %1947 = vmatpush1.bf16.msra.mxu0 %v1718
        %1948 = vmatprep.subr.bf16.mxu0 %v1715
        %1949 = vmatpush1.bf16.msra.mxu0 %v1714
        %1950 = vmatprep.subr.bf16.mxu0 %v1711
        %1951 = vmatpush1.bf16.msra.mxu0 %v1710
        %1952 = vmatprep.subr.bf16.mxu0 %v1707
        %1953 = vmatpush1.bf16.msra.mxu0 %v1706
        %1954 = vmatprep.subr.bf16.mxu0 %v1703
        %1955 = vmatpush1.bf16.msra.mxu0 %v1702
        %1956 = vmatprep.subr.bf16.mxu0 %v1699
        %1957 = vmatpush1.bf16.msra.mxu0 %v1698
        %1958 = vmatprep.subr.bf16.mxu0 %v1695
        %1959 = vmatpush1.bf16.msra.mxu0 %v1694
        %1960 = vmatprep.subr.bf16.mxu0 %v1691
        %1961 = vmatpush1.bf16.msra.mxu0 %v1690
        %1962 = vmatprep.subr.bf16.mxu0 %v1751
        %1963 = vmatpush2.bf16.msra.mxu0 %v1750
        %1964 = vmatprep.subr.bf16.mxu0 %v1747
        %1965 = vmatpush2.bf16.msra.mxu0 %v1746
        %1966 = vmatprep.subr.bf16.mxu0 %v1743
        %1967 = vmatpush2.bf16.msra.mxu0 %v1742
        %1968 = vmatprep.subr.bf16.mxu0 %v1739
        %1969 = vmatpush2.bf16.msra.mxu0 %v1738
        %1970 = vmatprep.subr.bf16.mxu0 %v1735
        %1971 = vmatpush2.bf16.msra.mxu0 %v1734
        %1972 = vmatprep.subr.bf16.mxu0 %v1731
        %1973 = vmatpush2.bf16.msra.mxu0 %v1730
        %1974 = vmatprep.subr.bf16.mxu0 %v1727
        %1975 = vmatpush2.bf16.msra.mxu0 %v1726
        %1976 = vmatprep.subr.bf16.mxu0 %v1723
        %1977 = vmatpush2.bf16.msra.mxu0 %v1722
        %1978 = vmatprep.mubr.bf16.mxu0 %v221
        %1979 = vmatmul.mubr.bf16.gmra.mxu0 %v220
        %v1980 = vpop.f32.mrf.mxu0
        %v1981 = vadd.f32 0.0, %v1980
        %v1982 = vpop.f32.mrf.mxu0
        %v1983 = vadd.f32 0.0, %v1982
        %v1984 = vpop.f32.mrf.mxu0
        %v1985 = vpop.f32.mrf.mxu0
        %1986 = vdwg.mxu0
        %1987 = vmatprep.subr.bf16.mxu0 %v1783
        %1988 = vmatpush1.bf16.msra.mxu0 %v1782
        %1989 = vmatprep.subr.bf16.mxu0 %v1779
        %1990 = vmatpush1.bf16.msra.mxu0 %v1778
        %1991 = vmatprep.subr.bf16.mxu0 %v1775
        %1992 = vmatpush1.bf16.msra.mxu0 %v1774
        %1993 = vmatprep.subr.bf16.mxu0 %v1771
        %1994 = vmatpush1.bf16.msra.mxu0 %v1770
        %1995 = vmatprep.subr.bf16.mxu0 %v1767
        %1996 = vmatpush1.bf16.msra.mxu0 %v1766
        %1997 = vmatprep.subr.bf16.mxu0 %v1763
        %1998 = vmatpush1.bf16.msra.mxu0 %v1762
        %1999 = vmatprep.subr.bf16.mxu0 %v1759
        %2000 = vmatpush1.bf16.msra.mxu0 %v1758
        %2001 = vmatprep.subr.bf16.mxu0 %v1755
        %2002 = vmatpush1.bf16.msra.mxu0 %v1754
        %2003 = vmatprep.subr.bf16.mxu0 %v1815
        %2004 = vmatpush2.bf16.msra.mxu0 %v1814
        %2005 = vmatprep.subr.bf16.mxu0 %v1811
        %2006 = vmatpush2.bf16.msra.mxu0 %v1810
        %2007 = vmatprep.subr.bf16.mxu0 %v1807
        %2008 = vmatpush2.bf16.msra.mxu0 %v1806
        %2009 = vmatprep.subr.bf16.mxu0 %v1803
        %2010 = vmatpush2.bf16.msra.mxu0 %v1802
        %2011 = vmatprep.subr.bf16.mxu0 %v1799
        %2012 = vmatpush2.bf16.msra.mxu0 %v1798
        %2013 = vmatprep.subr.bf16.mxu0 %v1795
        %2014 = vmatpush2.bf16.msra.mxu0 %v1794
        %2015 = vmatprep.subr.bf16.mxu0 %v1791
        %2016 = vmatpush2.bf16.msra.mxu0 %v1790
        %2017 = vmatprep.subr.bf16.mxu0 %v1787
        %2018 = vmatpush2.bf16.msra.mxu0 %v1786
        %2019 = vmatprep.mubr.bf16.mxu0 %v223
        %2020 = vmatmul.mubr.bf16.gmra.mxu0 %v222
        %v2021 = vpop.f32.mrf.mxu0
        %v2022 = vadd.f32 %v1981, %v2021
        %v2023 = vpop.f32.mrf.mxu0
        %v2024 = vadd.f32 %v1983, %v2023
        %v2025 = vpop.f32.mrf.mxu0
        %v2026 = vpop.f32.mrf.mxu0
        %2027 = vdwg.mxu0
        %2028 = vmatprep.subr.bf16.mxu0 %v1721
        %2029 = vmatpush1.bf16.msra.mxu0 %v1720
        %2030 = vmatprep.subr.bf16.mxu0 %v1717
        %2031 = vmatpush1.bf16.msra.mxu0 %v1716
        %2032 = vmatprep.subr.bf16.mxu0 %v1713
        %2033 = vmatpush1.bf16.msra.mxu0 %v1712
        %2034 = vmatprep.subr.bf16.mxu0 %v1709
        %2035 = vmatpush1.bf16.msra.mxu0 %v1708
        %2036 = vmatprep.subr.bf16.mxu0 %v1705
        %2037 = vmatpush1.bf16.msra.mxu0 %v1704
        %2038 = vmatprep.subr.bf16.mxu0 %v1701
        %2039 = vmatpush1.bf16.msra.mxu0 %v1700
        %2040 = vmatprep.subr.bf16.mxu0 %v1697
        %2041 = vmatpush1.bf16.msra.mxu0 %v1696
        %2042 = vmatprep.subr.bf16.mxu0 %v1693
        %2043 = vmatpush1.bf16.msra.mxu0 %v1692
        %2044 = vmatprep.subr.bf16.mxu0 %v1753
        %2045 = vmatpush2.bf16.msra.mxu0 %v1752
        %2046 = vmatprep.subr.bf16.mxu0 %v1749
        %2047 = vmatpush2.bf16.msra.mxu0 %v1748
        %2048 = vmatprep.subr.bf16.mxu0 %v1745
        %2049 = vmatpush2.bf16.msra.mxu0 %v1744
        %2050 = vmatprep.subr.bf16.mxu0 %v1741
        %2051 = vmatpush2.bf16.msra.mxu0 %v1740
        %2052 = vmatprep.subr.bf16.mxu0 %v1737
        %2053 = vmatpush2.bf16.msra.mxu0 %v1736
        %2054 = vmatprep.subr.bf16.mxu0 %v1733
        %2055 = vmatpush2.bf16.msra.mxu0 %v1732
        %2056 = vmatprep.subr.bf16.mxu0 %v1729
        %2057 = vmatpush2.bf16.msra.mxu0 %v1728
        %2058 = vmatprep.subr.bf16.mxu0 %v1725
        %2059 = vmatpush2.bf16.msra.mxu0 %v1724
        %2060 = vmatprep.mubr.bf16.mxu0 %v221
        %2061 = vmatmul.mubr.bf16.gmra.mxu0 %v220
        %v2062 = vpop.f32.mrf.mxu0
        %v2063 = vadd.f32 0.0, %v2062
        %v2064 = vpop.f32.mrf.mxu0
        %v2065 = vadd.f32 0.0, %v2064
        %v2066 = vpop.f32.mrf.mxu0
        %v2067 = vpop.f32.mrf.mxu0
        %2068 = vdwg.mxu0
        %2069 = vmatprep.subr.bf16.mxu0 %v1785
        %2070 = vmatpush1.bf16.msra.mxu0 %v1784
        %2071 = vmatprep.subr.bf16.mxu0 %v1781
        %2072 = vmatpush1.bf16.msra.mxu0 %v1780
        %2073 = vmatprep.subr.bf16.mxu0 %v1777
        %2074 = vmatpush1.bf16.msra.mxu0 %v1776
        %2075 = vmatprep.subr.bf16.mxu0 %v1773
        %2076 = vmatpush1.bf16.msra.mxu0 %v1772
        %2077 = vmatprep.subr.bf16.mxu0 %v1769
        %2078 = vmatpush1.bf16.msra.mxu0 %v1768
        %2079 = vmatprep.subr.bf16.mxu0 %v1765
        %2080 = vmatpush1.bf16.msra.mxu0 %v1764
        %2081 = vmatprep.subr.bf16.mxu0 %v1761
        %2082 = vmatpush1.bf16.msra.mxu0 %v1760
        %2083 = vmatprep.subr.bf16.mxu0 %v1757
        %2084 = vmatpush1.bf16.msra.mxu0 %v1756
        %2085 = vmatprep.subr.bf16.mxu0 %v1817
        %2086 = vmatpush2.bf16.msra.mxu0 %v1816
        %2087 = vmatprep.subr.bf16.mxu0 %v1813
        %2088 = vmatpush2.bf16.msra.mxu0 %v1812
        %2089 = vmatprep.subr.bf16.mxu0 %v1809
        %2090 = vmatpush2.bf16.msra.mxu0 %v1808
        %2091 = vmatprep.subr.bf16.mxu0 %v1805
        %2092 = vmatpush2.bf16.msra.mxu0 %v1804
        %2093 = vmatprep.subr.bf16.mxu0 %v1801
        %2094 = vmatpush2.bf16.msra.mxu0 %v1800
        %2095 = vmatprep.subr.bf16.mxu0 %v1797
        %2096 = vmatpush2.bf16.msra.mxu0 %v1796
        %2097 = vmatprep.subr.bf16.mxu0 %v1793
        %2098 = vmatpush2.bf16.msra.mxu0 %v1792
        %2099 = vmatprep.subr.bf16.mxu0 %v1789
        %2100 = vmatpush2.bf16.msra.mxu0 %v1788
        %2101 = vmatprep.mubr.bf16.mxu0 %v223
        %2102 = vmatmul.mubr.bf16.gmra.mxu0 %v222
        %v2103 = vpop.f32.mrf.mxu0
        %v2104 = vadd.f32 %v2063, %v2103
        %v2105 = vpop.f32.mrf.mxu0
        %v2106 = vadd.f32 %v2065, %v2105
        %v2107 = vpop.f32.mrf.mxu0
        %v2108 = vpop.f32.mrf.mxu0
        %2109 = vdwg.mxu0
        %v2110 = vmax.f32 %v2022, 0.0
        %v2111 = vmax.f32 %v2024, 0.0
        %v2112 = vmax.f32 %v2104, 0.0
        %v2113 = vmax.f32 %v2106, 0.0
        %v2114 = vpack.c.bf16 %v2110, %v2110
        %v2115 = vpack.c.bf16 %v2111, %v2111
        %v2116 = vpack.c.bf16 %v2112, %v2112
        %v2117 = vpack.c.bf16 %v2113, %v2113
        %v2122 = vunpack.c.l.b16 %v2114
        %v2123 = vunpack.c.l.b16 %v2115
        %v2124 = vunpack.c.l.b16 %v2116
        %v2125 = vunpack.c.l.b16 %v2117
        %v2126 = vpack.c.b16 %v2123, %v2122
        %v2127 = vpack.c.b16 %v2125, %v2124
        %2130 = vst [vmem:[#allocation2 + $0x10] sm:$0xff] %v2126
        %2131 = vst [vmem:[#allocation2 + $0x18] sm:$0xff] %v2127
        %v2132 = vld [vmem:[#allocation6 + $0x20] sm:$0xff]
        %v2133 = vld [vmem:[#allocation6 + $0x28] sm:$0xff]
        %v2134 = vld [vmem:[#allocation6 + $0x60] sm:$0xff]
        %v2135 = vld [vmem:[#allocation6 + $0x68] sm:$0xff]
        %v2136 = vld [vmem:[#allocation6 + $0xa0] sm:$0xff]
        %v2137 = vld [vmem:[#allocation6 + $0xa8] sm:$0xff]
        %v2138 = vld [vmem:[#allocation6 + $0xe0] sm:$0xff]
        %v2139 = vld [vmem:[#allocation6 + $0xe8] sm:$0xff]
        %v2140 = vld [vmem:[#allocation6 + $0x120] sm:$0xff]
        %v2141 = vld [vmem:[#allocation6 + $0x128] sm:$0xff]
        %v2142 = vld [vmem:[#allocation6 + $0x160] sm:$0xff]
        %v2143 = vld [vmem:[#allocation6 + $0x168] sm:$0xff]
        %v2144 = vld [vmem:[#allocation6 + $0x1a0] sm:$0xff]
        %v2145 = vld [vmem:[#allocation6 + $0x1a8] sm:$0xff]
        %v2146 = vld [vmem:[#allocation6 + $0x1e0] sm:$0xff]
        %v2147 = vld [vmem:[#allocation6 + $0x1e8] sm:$0xff]
        %v2148 = vld [vmem:[#allocation6 + $0x220] sm:$0xff]
        %v2149 = vld [vmem:[#allocation6 + $0x228] sm:$0xff]
        %v2150 = vld [vmem:[#allocation6 + $0x260] sm:$0xff]
        %v2151 = vld [vmem:[#allocation6 + $0x268] sm:$0xff]
        %v2152 = vld [vmem:[#allocation6 + $0x2a0] sm:$0xff]
        %v2153 = vld [vmem:[#allocation6 + $0x2a8] sm:$0xff]
        %v2154 = vld [vmem:[#allocation6 + $0x2e0] sm:$0xff]
        %v2155 = vld [vmem:[#allocation6 + $0x2e8] sm:$0xff]
        %v2156 = vld [vmem:[#allocation6 + $0x320] sm:$0xff]
        %v2157 = vld [vmem:[#allocation6 + $0x328] sm:$0xff]
        %v2158 = vld [vmem:[#allocation6 + $0x360] sm:$0xff]
        %v2159 = vld [vmem:[#allocation6 + $0x368] sm:$0xff]
        %v2160 = vld [vmem:[#allocation6 + $0x3a0] sm:$0xff]
        %v2161 = vld [vmem:[#allocation6 + $0x3a8] sm:$0xff]
        %v2162 = vld [vmem:[#allocation6 + $0x3e0] sm:$0xff]
        %v2163 = vld [vmem:[#allocation6 + $0x3e8] sm:$0xff]
        %v2164 = vld [vmem:[#allocation6 + $0x420] sm:$0xff]
        %v2165 = vld [vmem:[#allocation6 + $0x428] sm:$0xff]
        %v2166 = vld [vmem:[#allocation6 + $0x460] sm:$0xff]
        %v2167 = vld [vmem:[#allocation6 + $0x468] sm:$0xff]
        %v2168 = vld [vmem:[#allocation6 + $0x4a0] sm:$0xff]
        %v2169 = vld [vmem:[#allocation6 + $0x4a8] sm:$0xff]
        %v2170 = vld [vmem:[#allocation6 + $0x4e0] sm:$0xff]
        %v2171 = vld [vmem:[#allocation6 + $0x4e8] sm:$0xff]
        %v2172 = vld [vmem:[#allocation6 + $0x520] sm:$0xff]
        %v2173 = vld [vmem:[#allocation6 + $0x528] sm:$0xff]
        %v2174 = vld [vmem:[#allocation6 + $0x560] sm:$0xff]
        %v2175 = vld [vmem:[#allocation6 + $0x568] sm:$0xff]
        %v2176 = vld [vmem:[#allocation6 + $0x5a0] sm:$0xff]
        %v2177 = vld [vmem:[#allocation6 + $0x5a8] sm:$0xff]
        %v2178 = vld [vmem:[#allocation6 + $0x5e0] sm:$0xff]
        %v2179 = vld [vmem:[#allocation6 + $0x5e8] sm:$0xff]
        %v2180 = vld [vmem:[#allocation6 + $0x620] sm:$0xff]
        %v2181 = vld [vmem:[#allocation6 + $0x628] sm:$0xff]
        %v2182 = vld [vmem:[#allocation6 + $0x660] sm:$0xff]
        %v2183 = vld [vmem:[#allocation6 + $0x668] sm:$0xff]
        %v2184 = vld [vmem:[#allocation6 + $0x6a0] sm:$0xff]
        %v2185 = vld [vmem:[#allocation6 + $0x6a8] sm:$0xff]
        %v2186 = vld [vmem:[#allocation6 + $0x6e0] sm:$0xff]
        %v2187 = vld [vmem:[#allocation6 + $0x6e8] sm:$0xff]
        %v2188 = vld [vmem:[#allocation6 + $0x720] sm:$0xff]
        %v2189 = vld [vmem:[#allocation6 + $0x728] sm:$0xff]
        %v2190 = vld [vmem:[#allocation6 + $0x760] sm:$0xff]
        %v2191 = vld [vmem:[#allocation6 + $0x768] sm:$0xff]
        %v2192 = vld [vmem:[#allocation6 + $0x7a0] sm:$0xff]
        %v2193 = vld [vmem:[#allocation6 + $0x7a8] sm:$0xff]
        %v2194 = vld [vmem:[#allocation6 + $0x7e0] sm:$0xff]
        %v2195 = vld [vmem:[#allocation6 + $0x7e8] sm:$0xff]
        %v2196 = vld [vmem:[#allocation6 + $0x820] sm:$0xff]
        %v2197 = vld [vmem:[#allocation6 + $0x828] sm:$0xff]
        %v2198 = vld [vmem:[#allocation6 + $0x860] sm:$0xff]
        %v2199 = vld [vmem:[#allocation6 + $0x868] sm:$0xff]
        %v2200 = vld [vmem:[#allocation6 + $0x8a0] sm:$0xff]
        %v2201 = vld [vmem:[#allocation6 + $0x8a8] sm:$0xff]
        %v2202 = vld [vmem:[#allocation6 + $0x8e0] sm:$0xff]
        %v2203 = vld [vmem:[#allocation6 + $0x8e8] sm:$0xff]
        %v2204 = vld [vmem:[#allocation6 + $0x920] sm:$0xff]
        %v2205 = vld [vmem:[#allocation6 + $0x928] sm:$0xff]
        %v2206 = vld [vmem:[#allocation6 + $0x960] sm:$0xff]
        %v2207 = vld [vmem:[#allocation6 + $0x968] sm:$0xff]
        %v2208 = vld [vmem:[#allocation6 + $0x9a0] sm:$0xff]
        %v2209 = vld [vmem:[#allocation6 + $0x9a8] sm:$0xff]
        %v2210 = vld [vmem:[#allocation6 + $0x9e0] sm:$0xff]
        %v2211 = vld [vmem:[#allocation6 + $0x9e8] sm:$0xff]
        %v2212 = vld [vmem:[#allocation6 + $0xa20] sm:$0xff]
        %v2213 = vld [vmem:[#allocation6 + $0xa28] sm:$0xff]
        %v2214 = vld [vmem:[#allocation6 + $0xa60] sm:$0xff]
        %v2215 = vld [vmem:[#allocation6 + $0xa68] sm:$0xff]
        %v2216 = vld [vmem:[#allocation6 + $0xaa0] sm:$0xff]
        %v2217 = vld [vmem:[#allocation6 + $0xaa8] sm:$0xff]
        %v2218 = vld [vmem:[#allocation6 + $0xae0] sm:$0xff]
        %v2219 = vld [vmem:[#allocation6 + $0xae8] sm:$0xff]
        %v2220 = vld [vmem:[#allocation6 + $0xb20] sm:$0xff]
        %v2221 = vld [vmem:[#allocation6 + $0xb28] sm:$0xff]
        %v2222 = vld [vmem:[#allocation6 + $0xb60] sm:$0xff]
        %v2223 = vld [vmem:[#allocation6 + $0xb68] sm:$0xff]
        %v2224 = vld [vmem:[#allocation6 + $0xba0] sm:$0xff]
        %v2225 = vld [vmem:[#allocation6 + $0xba8] sm:$0xff]
        %v2226 = vld [vmem:[#allocation6 + $0xbe0] sm:$0xff]
        %v2227 = vld [vmem:[#allocation6 + $0xbe8] sm:$0xff]
        %v2228 = vld [vmem:[#allocation6 + $0xc20] sm:$0xff]
        %v2229 = vld [vmem:[#allocation6 + $0xc28] sm:$0xff]
        %v2230 = vld [vmem:[#allocation6 + $0xc60] sm:$0xff]
        %v2231 = vld [vmem:[#allocation6 + $0xc68] sm:$0xff]
        %v2232 = vld [vmem:[#allocation6 + $0xca0] sm:$0xff]
        %v2233 = vld [vmem:[#allocation6 + $0xca8] sm:$0xff]
        %v2234 = vld [vmem:[#allocation6 + $0xce0] sm:$0xff]
        %v2235 = vld [vmem:[#allocation6 + $0xce8] sm:$0xff]
        %v2236 = vld [vmem:[#allocation6 + $0xd20] sm:$0xff]
        %v2237 = vld [vmem:[#allocation6 + $0xd28] sm:$0xff]
        %v2238 = vld [vmem:[#allocation6 + $0xd60] sm:$0xff]
        %v2239 = vld [vmem:[#allocation6 + $0xd68] sm:$0xff]
        %v2240 = vld [vmem:[#allocation6 + $0xda0] sm:$0xff]
        %v2241 = vld [vmem:[#allocation6 + $0xda8] sm:$0xff]
        %v2242 = vld [vmem:[#allocation6 + $0xde0] sm:$0xff]
        %v2243 = vld [vmem:[#allocation6 + $0xde8] sm:$0xff]
        %v2244 = vld [vmem:[#allocation6 + $0xe20] sm:$0xff]
        %v2245 = vld [vmem:[#allocation6 + $0xe28] sm:$0xff]
        %v2246 = vld [vmem:[#allocation6 + $0xe60] sm:$0xff]
        %v2247 = vld [vmem:[#allocation6 + $0xe68] sm:$0xff]
        %v2248 = vld [vmem:[#allocation6 + $0xea0] sm:$0xff]
        %v2249 = vld [vmem:[#allocation6 + $0xea8] sm:$0xff]
        %v2250 = vld [vmem:[#allocation6 + $0xee0] sm:$0xff]
        %v2251 = vld [vmem:[#allocation6 + $0xee8] sm:$0xff]
        %v2252 = vld [vmem:[#allocation6 + $0xf20] sm:$0xff]
        %v2253 = vld [vmem:[#allocation6 + $0xf28] sm:$0xff]
        %v2254 = vld [vmem:[#allocation6 + $0xf60] sm:$0xff]
        %v2255 = vld [vmem:[#allocation6 + $0xf68] sm:$0xff]
        %v2256 = vld [vmem:[#allocation6 + $0xfa0] sm:$0xff]
        %v2257 = vld [vmem:[#allocation6 + $0xfa8] sm:$0xff]
        %v2258 = vld [vmem:[#allocation6 + $0xfe0] sm:$0xff]
        %v2259 = vld [vmem:[#allocation6 + $0xfe8] sm:$0xff]
        %v2388 = vunpack.c.l.b16 %v2132
        %v2389 = vunpack.c.h.b16 %v2132
        %v2390 = vunpack.c.l.b16 %v2133
        %v2391 = vunpack.c.h.b16 %v2133
        %v2392 = vunpack.c.l.b16 %v2134
        %v2393 = vunpack.c.h.b16 %v2134
        %v2394 = vunpack.c.l.b16 %v2135
        %v2395 = vunpack.c.h.b16 %v2135
        %v2396 = vunpack.c.l.b16 %v2136
        %v2397 = vunpack.c.h.b16 %v2136
        %v2398 = vunpack.c.l.b16 %v2137
        %v2399 = vunpack.c.h.b16 %v2137
        %v2400 = vunpack.c.l.b16 %v2138
        %v2401 = vunpack.c.h.b16 %v2138
        %v2402 = vunpack.c.l.b16 %v2139
        %v2403 = vunpack.c.h.b16 %v2139
        %v2404 = vunpack.c.l.b16 %v2140
        %v2405 = vunpack.c.h.b16 %v2140
        %v2406 = vunpack.c.l.b16 %v2141
        %v2407 = vunpack.c.h.b16 %v2141
        %v2408 = vunpack.c.l.b16 %v2142
        %v2409 = vunpack.c.h.b16 %v2142
        %v2410 = vunpack.c.l.b16 %v2143
        %v2411 = vunpack.c.h.b16 %v2143
        %v2412 = vunpack.c.l.b16 %v2144
        %v2413 = vunpack.c.h.b16 %v2144
        %v2414 = vunpack.c.l.b16 %v2145
        %v2415 = vunpack.c.h.b16 %v2145
        %v2416 = vunpack.c.l.b16 %v2146
        %v2417 = vunpack.c.h.b16 %v2146
        %v2418 = vunpack.c.l.b16 %v2147
        %v2419 = vunpack.c.h.b16 %v2147
        %v2420 = vunpack.c.l.b16 %v2148
        %v2421 = vunpack.c.h.b16 %v2148
        %v2422 = vunpack.c.l.b16 %v2149
        %v2423 = vunpack.c.h.b16 %v2149
        %v2424 = vunpack.c.l.b16 %v2150
        %v2425 = vunpack.c.h.b16 %v2150
        %v2426 = vunpack.c.l.b16 %v2151
        %v2427 = vunpack.c.h.b16 %v2151
        %v2428 = vunpack.c.l.b16 %v2152
        %v2429 = vunpack.c.h.b16 %v2152
        %v2430 = vunpack.c.l.b16 %v2153
        %v2431 = vunpack.c.h.b16 %v2153
        %v2432 = vunpack.c.l.b16 %v2154
        %v2433 = vunpack.c.h.b16 %v2154
        %v2434 = vunpack.c.l.b16 %v2155
        %v2435 = vunpack.c.h.b16 %v2155
        %v2436 = vunpack.c.l.b16 %v2156
        %v2437 = vunpack.c.h.b16 %v2156
        %v2438 = vunpack.c.l.b16 %v2157
        %v2439 = vunpack.c.h.b16 %v2157
        %v2440 = vunpack.c.l.b16 %v2158
        %v2441 = vunpack.c.h.b16 %v2158
        %v2442 = vunpack.c.l.b16 %v2159
        %v2443 = vunpack.c.h.b16 %v2159
        %v2444 = vunpack.c.l.b16 %v2160
        %v2445 = vunpack.c.h.b16 %v2160
        %v2446 = vunpack.c.l.b16 %v2161
        %v2447 = vunpack.c.h.b16 %v2161
        %v2448 = vunpack.c.l.b16 %v2162
        %v2449 = vunpack.c.h.b16 %v2162
        %v2450 = vunpack.c.l.b16 %v2163
        %v2451 = vunpack.c.h.b16 %v2163
        %v2452 = vunpack.c.l.b16 %v2164
        %v2453 = vunpack.c.h.b16 %v2164
        %v2454 = vunpack.c.l.b16 %v2165
        %v2455 = vunpack.c.h.b16 %v2165
        %v2456 = vunpack.c.l.b16 %v2166
        %v2457 = vunpack.c.h.b16 %v2166
        %v2458 = vunpack.c.l.b16 %v2167
        %v2459 = vunpack.c.h.b16 %v2167
        %v2460 = vunpack.c.l.b16 %v2168
        %v2461 = vunpack.c.h.b16 %v2168
        %v2462 = vunpack.c.l.b16 %v2169
        %v2463 = vunpack.c.h.b16 %v2169
        %v2464 = vunpack.c.l.b16 %v2170
        %v2465 = vunpack.c.h.b16 %v2170
        %v2466 = vunpack.c.l.b16 %v2171
        %v2467 = vunpack.c.h.b16 %v2171
        %v2468 = vunpack.c.l.b16 %v2172
        %v2469 = vunpack.c.h.b16 %v2172
        %v2470 = vunpack.c.l.b16 %v2173
        %v2471 = vunpack.c.h.b16 %v2173
        %v2472 = vunpack.c.l.b16 %v2174
        %v2473 = vunpack.c.h.b16 %v2174
        %v2474 = vunpack.c.l.b16 %v2175
        %v2475 = vunpack.c.h.b16 %v2175
        %v2476 = vunpack.c.l.b16 %v2176
        %v2477 = vunpack.c.h.b16 %v2176
        %v2478 = vunpack.c.l.b16 %v2177
        %v2479 = vunpack.c.h.b16 %v2177
        %v2480 = vunpack.c.l.b16 %v2178
        %v2481 = vunpack.c.h.b16 %v2178
        %v2482 = vunpack.c.l.b16 %v2179
        %v2483 = vunpack.c.h.b16 %v2179
        %v2484 = vunpack.c.l.b16 %v2180
        %v2485 = vunpack.c.h.b16 %v2180
        %v2486 = vunpack.c.l.b16 %v2181
        %v2487 = vunpack.c.h.b16 %v2181
        %v2488 = vunpack.c.l.b16 %v2182
        %v2489 = vunpack.c.h.b16 %v2182
        %v2490 = vunpack.c.l.b16 %v2183
        %v2491 = vunpack.c.h.b16 %v2183
        %v2492 = vunpack.c.l.b16 %v2184
        %v2493 = vunpack.c.h.b16 %v2184
        %v2494 = vunpack.c.l.b16 %v2185
        %v2495 = vunpack.c.h.b16 %v2185
        %v2496 = vunpack.c.l.b16 %v2186
        %v2497 = vunpack.c.h.b16 %v2186
        %v2498 = vunpack.c.l.b16 %v2187
        %v2499 = vunpack.c.h.b16 %v2187
        %v2500 = vunpack.c.l.b16 %v2188
        %v2501 = vunpack.c.h.b16 %v2188
        %v2502 = vunpack.c.l.b16 %v2189
        %v2503 = vunpack.c.h.b16 %v2189
        %v2504 = vunpack.c.l.b16 %v2190
        %v2505 = vunpack.c.h.b16 %v2190
        %v2506 = vunpack.c.l.b16 %v2191
        %v2507 = vunpack.c.h.b16 %v2191
        %v2508 = vunpack.c.l.b16 %v2192
        %v2509 = vunpack.c.h.b16 %v2192
        %v2510 = vunpack.c.l.b16 %v2193
        %v2511 = vunpack.c.h.b16 %v2193
        %v2512 = vunpack.c.l.b16 %v2194
        %v2513 = vunpack.c.h.b16 %v2194
        %v2514 = vunpack.c.l.b16 %v2195
        %v2515 = vunpack.c.h.b16 %v2195
        %v2516 = vunpack.c.l.b16 %v2196
        %v2517 = vunpack.c.h.b16 %v2196
        %v2518 = vunpack.c.l.b16 %v2197
        %v2519 = vunpack.c.h.b16 %v2197
        %v2520 = vunpack.c.l.b16 %v2198
        %v2521 = vunpack.c.h.b16 %v2198
        %v2522 = vunpack.c.l.b16 %v2199
        %v2523 = vunpack.c.h.b16 %v2199
        %v2524 = vunpack.c.l.b16 %v2200
        %v2525 = vunpack.c.h.b16 %v2200
        %v2526 = vunpack.c.l.b16 %v2201
        %v2527 = vunpack.c.h.b16 %v2201
        %v2528 = vunpack.c.l.b16 %v2202
        %v2529 = vunpack.c.h.b16 %v2202
        %v2530 = vunpack.c.l.b16 %v2203
        %v2531 = vunpack.c.h.b16 %v2203
        %v2532 = vunpack.c.l.b16 %v2204
        %v2533 = vunpack.c.h.b16 %v2204
        %v2534 = vunpack.c.l.b16 %v2205
        %v2535 = vunpack.c.h.b16 %v2205
        %v2536 = vunpack.c.l.b16 %v2206
        %v2537 = vunpack.c.h.b16 %v2206
        %v2538 = vunpack.c.l.b16 %v2207
        %v2539 = vunpack.c.h.b16 %v2207
        %v2540 = vunpack.c.l.b16 %v2208
        %v2541 = vunpack.c.h.b16 %v2208
        %v2542 = vunpack.c.l.b16 %v2209
        %v2543 = vunpack.c.h.b16 %v2209
        %v2544 = vunpack.c.l.b16 %v2210
        %v2545 = vunpack.c.h.b16 %v2210
        %v2546 = vunpack.c.l.b16 %v2211
        %v2547 = vunpack.c.h.b16 %v2211
        %v2548 = vunpack.c.l.b16 %v2212
        %v2549 = vunpack.c.h.b16 %v2212
        %v2550 = vunpack.c.l.b16 %v2213
        %v2551 = vunpack.c.h.b16 %v2213
        %v2552 = vunpack.c.l.b16 %v2214
        %v2553 = vunpack.c.h.b16 %v2214
        %v2554 = vunpack.c.l.b16 %v2215
        %v2555 = vunpack.c.h.b16 %v2215
        %v2556 = vunpack.c.l.b16 %v2216
        %v2557 = vunpack.c.h.b16 %v2216
        %v2558 = vunpack.c.l.b16 %v2217
        %v2559 = vunpack.c.h.b16 %v2217
        %v2560 = vunpack.c.l.b16 %v2218
        %v2561 = vunpack.c.h.b16 %v2218
        %v2562 = vunpack.c.l.b16 %v2219
        %v2563 = vunpack.c.h.b16 %v2219
        %v2564 = vunpack.c.l.b16 %v2220
        %v2565 = vunpack.c.h.b16 %v2220
        %v2566 = vunpack.c.l.b16 %v2221
        %v2567 = vunpack.c.h.b16 %v2221
        %v2568 = vunpack.c.l.b16 %v2222
        %v2569 = vunpack.c.h.b16 %v2222
        %v2570 = vunpack.c.l.b16 %v2223
        %v2571 = vunpack.c.h.b16 %v2223
        %v2572 = vunpack.c.l.b16 %v2224
        %v2573 = vunpack.c.h.b16 %v2224
        %v2574 = vunpack.c.l.b16 %v2225
        %v2575 = vunpack.c.h.b16 %v2225
        %v2576 = vunpack.c.l.b16 %v2226
        %v2577 = vunpack.c.h.b16 %v2226
        %v2578 = vunpack.c.l.b16 %v2227
        %v2579 = vunpack.c.h.b16 %v2227
        %v2580 = vunpack.c.l.b16 %v2228
        %v2581 = vunpack.c.h.b16 %v2228
        %v2582 = vunpack.c.l.b16 %v2229
        %v2583 = vunpack.c.h.b16 %v2229
        %v2584 = vunpack.c.l.b16 %v2230
        %v2585 = vunpack.c.h.b16 %v2230
        %v2586 = vunpack.c.l.b16 %v2231
        %v2587 = vunpack.c.h.b16 %v2231
        %v2588 = vunpack.c.l.b16 %v2232
        %v2589 = vunpack.c.h.b16 %v2232
        %v2590 = vunpack.c.l.b16 %v2233
        %v2591 = vunpack.c.h.b16 %v2233
        %v2592 = vunpack.c.l.b16 %v2234
        %v2593 = vunpack.c.h.b16 %v2234
        %v2594 = vunpack.c.l.b16 %v2235
        %v2595 = vunpack.c.h.b16 %v2235
        %v2596 = vunpack.c.l.b16 %v2236
        %v2597 = vunpack.c.h.b16 %v2236
        %v2598 = vunpack.c.l.b16 %v2237
        %v2599 = vunpack.c.h.b16 %v2237
        %v2600 = vunpack.c.l.b16 %v2238
        %v2601 = vunpack.c.h.b16 %v2238
        %v2602 = vunpack.c.l.b16 %v2239
        %v2603 = vunpack.c.h.b16 %v2239
        %v2604 = vunpack.c.l.b16 %v2240
        %v2605 = vunpack.c.h.b16 %v2240
        %v2606 = vunpack.c.l.b16 %v2241
        %v2607 = vunpack.c.h.b16 %v2241
        %v2608 = vunpack.c.l.b16 %v2242
        %v2609 = vunpack.c.h.b16 %v2242
        %v2610 = vunpack.c.l.b16 %v2243
        %v2611 = vunpack.c.h.b16 %v2243
        %v2612 = vunpack.c.l.b16 %v2244
        %v2613 = vunpack.c.h.b16 %v2244
        %v2614 = vunpack.c.l.b16 %v2245
        %v2615 = vunpack.c.h.b16 %v2245
        %v2616 = vunpack.c.l.b16 %v2246
        %v2617 = vunpack.c.h.b16 %v2246
        %v2618 = vunpack.c.l.b16 %v2247
        %v2619 = vunpack.c.h.b16 %v2247
        %v2620 = vunpack.c.l.b16 %v2248
        %v2621 = vunpack.c.h.b16 %v2248
        %v2622 = vunpack.c.l.b16 %v2249
        %v2623 = vunpack.c.h.b16 %v2249
        %v2624 = vunpack.c.l.b16 %v2250
        %v2625 = vunpack.c.h.b16 %v2250
        %v2626 = vunpack.c.l.b16 %v2251
        %v2627 = vunpack.c.h.b16 %v2251
        %v2628 = vunpack.c.l.b16 %v2252
        %v2629 = vunpack.c.h.b16 %v2252
        %v2630 = vunpack.c.l.b16 %v2253
        %v2631 = vunpack.c.h.b16 %v2253
        %v2632 = vunpack.c.l.b16 %v2254
        %v2633 = vunpack.c.h.b16 %v2254
        %v2634 = vunpack.c.l.b16 %v2255
        %v2635 = vunpack.c.h.b16 %v2255
        %v2636 = vunpack.c.l.b16 %v2256
        %v2637 = vunpack.c.h.b16 %v2256
        %v2638 = vunpack.c.l.b16 %v2257
        %v2639 = vunpack.c.h.b16 %v2257
        %v2640 = vunpack.c.l.b16 %v2258
        %v2641 = vunpack.c.h.b16 %v2258
        %v2642 = vunpack.c.l.b16 %v2259
        %v2643 = vunpack.c.h.b16 %v2259
        %v2644 = vpack.c.b16 %v2392, %v2388
        %v2645 = vpack.c.b16 %v2393, %v2389
        %v2646 = vpack.c.b16 %v2394, %v2390
        %v2647 = vpack.c.b16 %v2395, %v2391
        %v2648 = vpack.c.b16 %v2400, %v2396
        %v2649 = vpack.c.b16 %v2401, %v2397
        %v2650 = vpack.c.b16 %v2402, %v2398
        %v2651 = vpack.c.b16 %v2403, %v2399
        %v2652 = vpack.c.b16 %v2408, %v2404
        %v2653 = vpack.c.b16 %v2409, %v2405
        %v2654 = vpack.c.b16 %v2410, %v2406
        %v2655 = vpack.c.b16 %v2411, %v2407
        %v2656 = vpack.c.b16 %v2416, %v2412
        %v2657 = vpack.c.b16 %v2417, %v2413
        %v2658 = vpack.c.b16 %v2418, %v2414
        %v2659 = vpack.c.b16 %v2419, %v2415
        %v2660 = vpack.c.b16 %v2424, %v2420
        %v2661 = vpack.c.b16 %v2425, %v2421
        %v2662 = vpack.c.b16 %v2426, %v2422
        %v2663 = vpack.c.b16 %v2427, %v2423
        %v2664 = vpack.c.b16 %v2432, %v2428
        %v2665 = vpack.c.b16 %v2433, %v2429
        %v2666 = vpack.c.b16 %v2434, %v2430
        %v2667 = vpack.c.b16 %v2435, %v2431
        %v2668 = vpack.c.b16 %v2440, %v2436
        %v2669 = vpack.c.b16 %v2441, %v2437
        %v2670 = vpack.c.b16 %v2442, %v2438
        %v2671 = vpack.c.b16 %v2443, %v2439
        %v2672 = vpack.c.b16 %v2448, %v2444
        %v2673 = vpack.c.b16 %v2449, %v2445
        %v2674 = vpack.c.b16 %v2450, %v2446
        %v2675 = vpack.c.b16 %v2451, %v2447
        %v2676 = vpack.c.b16 %v2456, %v2452
        %v2677 = vpack.c.b16 %v2457, %v2453
        %v2678 = vpack.c.b16 %v2458, %v2454
        %v2679 = vpack.c.b16 %v2459, %v2455
        %v2680 = vpack.c.b16 %v2464, %v2460
        %v2681 = vpack.c.b16 %v2465, %v2461
        %v2682 = vpack.c.b16 %v2466, %v2462
        %v2683 = vpack.c.b16 %v2467, %v2463
        %v2684 = vpack.c.b16 %v2472, %v2468
        %v2685 = vpack.c.b16 %v2473, %v2469
        %v2686 = vpack.c.b16 %v2474, %v2470
        %v2687 = vpack.c.b16 %v2475, %v2471
        %v2688 = vpack.c.b16 %v2480, %v2476
        %v2689 = vpack.c.b16 %v2481, %v2477
        %v2690 = vpack.c.b16 %v2482, %v2478
        %v2691 = vpack.c.b16 %v2483, %v2479
        %v2692 = vpack.c.b16 %v2488, %v2484
        %v2693 = vpack.c.b16 %v2489, %v2485
        %v2694 = vpack.c.b16 %v2490, %v2486
        %v2695 = vpack.c.b16 %v2491, %v2487
        %v2696 = vpack.c.b16 %v2496, %v2492
        %v2697 = vpack.c.b16 %v2497, %v2493
        %v2698 = vpack.c.b16 %v2498, %v2494
        %v2699 = vpack.c.b16 %v2499, %v2495
        %v2700 = vpack.c.b16 %v2504, %v2500
        %v2701 = vpack.c.b16 %v2505, %v2501
        %v2702 = vpack.c.b16 %v2506, %v2502
        %v2703 = vpack.c.b16 %v2507, %v2503
        %v2704 = vpack.c.b16 %v2512, %v2508
        %v2705 = vpack.c.b16 %v2513, %v2509
        %v2706 = vpack.c.b16 %v2514, %v2510
        %v2707 = vpack.c.b16 %v2515, %v2511
        %v2708 = vpack.c.b16 %v2520, %v2516
        %v2709 = vpack.c.b16 %v2521, %v2517
        %v2710 = vpack.c.b16 %v2522, %v2518
        %v2711 = vpack.c.b16 %v2523, %v2519
        %v2712 = vpack.c.b16 %v2528, %v2524
        %v2713 = vpack.c.b16 %v2529, %v2525
        %v2714 = vpack.c.b16 %v2530, %v2526
        %v2715 = vpack.c.b16 %v2531, %v2527
        %v2716 = vpack.c.b16 %v2536, %v2532
        %v2717 = vpack.c.b16 %v2537, %v2533
        %v2718 = vpack.c.b16 %v2538, %v2534
        %v2719 = vpack.c.b16 %v2539, %v2535
        %v2720 = vpack.c.b16 %v2544, %v2540
        %v2721 = vpack.c.b16 %v2545, %v2541
        %v2722 = vpack.c.b16 %v2546, %v2542
        %v2723 = vpack.c.b16 %v2547, %v2543
        %v2724 = vpack.c.b16 %v2552, %v2548
        %v2725 = vpack.c.b16 %v2553, %v2549
        %v2726 = vpack.c.b16 %v2554, %v2550
        %v2727 = vpack.c.b16 %v2555, %v2551
        %v2728 = vpack.c.b16 %v2560, %v2556
        %v2729 = vpack.c.b16 %v2561, %v2557
        %v2730 = vpack.c.b16 %v2562, %v2558
        %v2731 = vpack.c.b16 %v2563, %v2559
        %v2732 = vpack.c.b16 %v2568, %v2564
        %v2733 = vpack.c.b16 %v2569, %v2565
        %v2734 = vpack.c.b16 %v2570, %v2566
        %v2735 = vpack.c.b16 %v2571, %v2567
        %v2736 = vpack.c.b16 %v2576, %v2572
        %v2737 = vpack.c.b16 %v2577, %v2573
        %v2738 = vpack.c.b16 %v2578, %v2574
        %v2739 = vpack.c.b16 %v2579, %v2575
        %v2740 = vpack.c.b16 %v2584, %v2580
        %v2741 = vpack.c.b16 %v2585, %v2581
        %v2742 = vpack.c.b16 %v2586, %v2582
        %v2743 = vpack.c.b16 %v2587, %v2583
        %v2744 = vpack.c.b16 %v2592, %v2588
        %v2745 = vpack.c.b16 %v2593, %v2589
        %v2746 = vpack.c.b16 %v2594, %v2590
        %v2747 = vpack.c.b16 %v2595, %v2591
        %v2748 = vpack.c.b16 %v2600, %v2596
        %v2749 = vpack.c.b16 %v2601, %v2597
        %v2750 = vpack.c.b16 %v2602, %v2598
        %v2751 = vpack.c.b16 %v2603, %v2599
        %v2752 = vpack.c.b16 %v2608, %v2604
        %v2753 = vpack.c.b16 %v2609, %v2605
        %v2754 = vpack.c.b16 %v2610, %v2606
        %v2755 = vpack.c.b16 %v2611, %v2607
        %v2756 = vpack.c.b16 %v2616, %v2612
        %v2757 = vpack.c.b16 %v2617, %v2613
        %v2758 = vpack.c.b16 %v2618, %v2614
        %v2759 = vpack.c.b16 %v2619, %v2615
        %v2760 = vpack.c.b16 %v2624, %v2620
        %v2761 = vpack.c.b16 %v2625, %v2621
        %v2762 = vpack.c.b16 %v2626, %v2622
        %v2763 = vpack.c.b16 %v2627, %v2623
        %v2764 = vpack.c.b16 %v2632, %v2628
        %v2765 = vpack.c.b16 %v2633, %v2629
        %v2766 = vpack.c.b16 %v2634, %v2630
        %v2767 = vpack.c.b16 %v2635, %v2631
        %v2768 = vpack.c.b16 %v2640, %v2636
        %v2769 = vpack.c.b16 %v2641, %v2637
        %v2770 = vpack.c.b16 %v2642, %v2638
        %v2771 = vpack.c.b16 %v2643, %v2639
        %2900 = vmatprep.subr.bf16.mxu0 %v2673
        %2901 = vmatpush1.bf16.msra.mxu0 %v2672
        %2902 = vmatprep.subr.bf16.mxu0 %v2669
        %2903 = vmatpush1.bf16.msra.mxu0 %v2668
        %2904 = vmatprep.subr.bf16.mxu0 %v2665
        %2905 = vmatpush1.bf16.msra.mxu0 %v2664
        %2906 = vmatprep.subr.bf16.mxu0 %v2661
        %2907 = vmatpush1.bf16.msra.mxu0 %v2660
        %2908 = vmatprep.subr.bf16.mxu0 %v2657
        %2909 = vmatpush1.bf16.msra.mxu0 %v2656
        %2910 = vmatprep.subr.bf16.mxu0 %v2653
        %2911 = vmatpush1.bf16.msra.mxu0 %v2652
        %2912 = vmatprep.subr.bf16.mxu0 %v2649
        %2913 = vmatpush1.bf16.msra.mxu0 %v2648
        %2914 = vmatprep.subr.bf16.mxu0 %v2645
        %2915 = vmatpush1.bf16.msra.mxu0 %v2644
        %2916 = vmatprep.subr.bf16.mxu0 %v2705
        %2917 = vmatpush2.bf16.msra.mxu0 %v2704
        %2918 = vmatprep.subr.bf16.mxu0 %v2701
        %2919 = vmatpush2.bf16.msra.mxu0 %v2700
        %2920 = vmatprep.subr.bf16.mxu0 %v2697
        %2921 = vmatpush2.bf16.msra.mxu0 %v2696
        %2922 = vmatprep.subr.bf16.mxu0 %v2693
        %2923 = vmatpush2.bf16.msra.mxu0 %v2692
        %2924 = vmatprep.subr.bf16.mxu0 %v2689
        %2925 = vmatpush2.bf16.msra.mxu0 %v2688
        %2926 = vmatprep.subr.bf16.mxu0 %v2685
        %2927 = vmatpush2.bf16.msra.mxu0 %v2684
        %2928 = vmatprep.subr.bf16.mxu0 %v2681
        %2929 = vmatpush2.bf16.msra.mxu0 %v2680
        %2930 = vmatprep.subr.bf16.mxu0 %v2677
        %2931 = vmatpush2.bf16.msra.mxu0 %v2676
        %2932 = vmatprep.mubr.bf16.mxu0 %v221
        %2933 = vmatmul.mubr.bf16.gmra.mxu0 %v220
        %v2934 = vpop.f32.mrf.mxu0
        %v2935 = vadd.f32 0.0, %v2934
        %v2936 = vpop.f32.mrf.mxu0
        %v2937 = vadd.f32 0.0, %v2936
        %v2938 = vpop.f32.mrf.mxu0
        %v2939 = vpop.f32.mrf.mxu0
        %2940 = vdwg.mxu0
        %2941 = vmatprep.subr.bf16.mxu0 %v2737
        %2942 = vmatpush1.bf16.msra.mxu0 %v2736
        %2943 = vmatprep.subr.bf16.mxu0 %v2733
        %2944 = vmatpush1.bf16.msra.mxu0 %v2732
        %2945 = vmatprep.subr.bf16.mxu0 %v2729
        %2946 = vmatpush1.bf16.msra.mxu0 %v2728
        %2947 = vmatprep.subr.bf16.mxu0 %v2725
        %2948 = vmatpush1.bf16.msra.mxu0 %v2724
        %2949 = vmatprep.subr.bf16.mxu0 %v2721
        %2950 = vmatpush1.bf16.msra.mxu0 %v2720
        %2951 = vmatprep.subr.bf16.mxu0 %v2717
        %2952 = vmatpush1.bf16.msra.mxu0 %v2716
        %2953 = vmatprep.subr.bf16.mxu0 %v2713
        %2954 = vmatpush1.bf16.msra.mxu0 %v2712
        %2955 = vmatprep.subr.bf16.mxu0 %v2709
        %2956 = vmatpush1.bf16.msra.mxu0 %v2708
        %2957 = vmatprep.subr.bf16.mxu0 %v2769
        %2958 = vmatpush2.bf16.msra.mxu0 %v2768
        %2959 = vmatprep.subr.bf16.mxu0 %v2765
        %2960 = vmatpush2.bf16.msra.mxu0 %v2764
        %2961 = vmatprep.subr.bf16.mxu0 %v2761
        %2962 = vmatpush2.bf16.msra.mxu0 %v2760
        %2963 = vmatprep.subr.bf16.mxu0 %v2757
        %2964 = vmatpush2.bf16.msra.mxu0 %v2756
        %2965 = vmatprep.subr.bf16.mxu0 %v2753
        %2966 = vmatpush2.bf16.msra.mxu0 %v2752
        %2967 = vmatprep.subr.bf16.mxu0 %v2749
        %2968 = vmatpush2.bf16.msra.mxu0 %v2748
        %2969 = vmatprep.subr.bf16.mxu0 %v2745
        %2970 = vmatpush2.bf16.msra.mxu0 %v2744
        %2971 = vmatprep.subr.bf16.mxu0 %v2741
        %2972 = vmatpush2.bf16.msra.mxu0 %v2740
        %2973 = vmatprep.mubr.bf16.mxu0 %v223
        %2974 = vmatmul.mubr.bf16.gmra.mxu0 %v222
        %v2975 = vpop.f32.mrf.mxu0
        %v2976 = vadd.f32 %v2935, %v2975
        %v2977 = vpop.f32.mrf.mxu0
        %v2978 = vadd.f32 %v2937, %v2977
        %v2979 = vpop.f32.mrf.mxu0
        %v2980 = vpop.f32.mrf.mxu0
        %2981 = vdwg.mxu0
        %2982 = vmatprep.subr.bf16.mxu0 %v2675
        %2983 = vmatpush1.bf16.msra.mxu0 %v2674
        %2984 = vmatprep.subr.bf16.mxu0 %v2671
        %2985 = vmatpush1.bf16.msra.mxu0 %v2670
        %2986 = vmatprep.subr.bf16.mxu0 %v2667
        %2987 = vmatpush1.bf16.msra.mxu0 %v2666
        %2988 = vmatprep.subr.bf16.mxu0 %v2663
        %2989 = vmatpush1.bf16.msra.mxu0 %v2662
        %2990 = vmatprep.subr.bf16.mxu0 %v2659
        %2991 = vmatpush1.bf16.msra.mxu0 %v2658
        %2992 = vmatprep.subr.bf16.mxu0 %v2655
        %2993 = vmatpush1.bf16.msra.mxu0 %v2654
        %2994 = vmatprep.subr.bf16.mxu0 %v2651
        %2995 = vmatpush1.bf16.msra.mxu0 %v2650
        %2996 = vmatprep.subr.bf16.mxu0 %v2647
        %2997 = vmatpush1.bf16.msra.mxu0 %v2646
        %2998 = vmatprep.subr.bf16.mxu0 %v2707
        %2999 = vmatpush2.bf16.msra.mxu0 %v2706
        %3000 = vmatprep.subr.bf16.mxu0 %v2703
        %3001 = vmatpush2.bf16.msra.mxu0 %v2702
        %3002 = vmatprep.subr.bf16.mxu0 %v2699
        %3003 = vmatpush2.bf16.msra.mxu0 %v2698
        %3004 = vmatprep.subr.bf16.mxu0 %v2695
        %3005 = vmatpush2.bf16.msra.mxu0 %v2694
        %3006 = vmatprep.subr.bf16.mxu0 %v2691
        %3007 = vmatpush2.bf16.msra.mxu0 %v2690
        %3008 = vmatprep.subr.bf16.mxu0 %v2687
        %3009 = vmatpush2.bf16.msra.mxu0 %v2686
        %3010 = vmatprep.subr.bf16.mxu0 %v2683
        %3011 = vmatpush2.bf16.msra.mxu0 %v2682
        %3012 = vmatprep.subr.bf16.mxu0 %v2679
        %3013 = vmatpush2.bf16.msra.mxu0 %v2678
        %3014 = vmatprep.mubr.bf16.mxu0 %v221
        %3015 = vmatmul.mubr.bf16.gmra.mxu0 %v220
        %v3016 = vpop.f32.mrf.mxu0
        %v3017 = vadd.f32 0.0, %v3016
        %v3018 = vpop.f32.mrf.mxu0
        %v3019 = vadd.f32 0.0, %v3018
        %v3020 = vpop.f32.mrf.mxu0
        %v3021 = vpop.f32.mrf.mxu0
        %3022 = vdwg.mxu0
        %3023 = vmatprep.subr.bf16.mxu0 %v2739
        %3024 = vmatpush1.bf16.msra.mxu0 %v2738
        %3025 = vmatprep.subr.bf16.mxu0 %v2735
        %3026 = vmatpush1.bf16.msra.mxu0 %v2734
        %3027 = vmatprep.subr.bf16.mxu0 %v2731
        %3028 = vmatpush1.bf16.msra.mxu0 %v2730
        %3029 = vmatprep.subr.bf16.mxu0 %v2727
        %3030 = vmatpush1.bf16.msra.mxu0 %v2726
        %3031 = vmatprep.subr.bf16.mxu0 %v2723
        %3032 = vmatpush1.bf16.msra.mxu0 %v2722
        %3033 = vmatprep.subr.bf16.mxu0 %v2719
        %3034 = vmatpush1.bf16.msra.mxu0 %v2718
        %3035 = vmatprep.subr.bf16.mxu0 %v2715
        %3036 = vmatpush1.bf16.msra.mxu0 %v2714
        %3037 = vmatprep.subr.bf16.mxu0 %v2711
        %3038 = vmatpush1.bf16.msra.mxu0 %v2710
        %3039 = vmatprep.subr.bf16.mxu0 %v2771
        %3040 = vmatpush2.bf16.msra.mxu0 %v2770
        %3041 = vmatprep.subr.bf16.mxu0 %v2767
        %3042 = vmatpush2.bf16.msra.mxu0 %v2766
        %3043 = vmatprep.subr.bf16.mxu0 %v2763
        %3044 = vmatpush2.bf16.msra.mxu0 %v2762
        %3045 = vmatprep.subr.bf16.mxu0 %v2759
        %3046 = vmatpush2.bf16.msra.mxu0 %v2758
        %3047 = vmatprep.subr.bf16.mxu0 %v2755
        %3048 = vmatpush2.bf16.msra.mxu0 %v2754
        %3049 = vmatprep.subr.bf16.mxu0 %v2751
        %3050 = vmatpush2.bf16.msra.mxu0 %v2750
        %3051 = vmatprep.subr.bf16.mxu0 %v2747
        %3052 = vmatpush2.bf16.msra.mxu0 %v2746
        %3053 = vmatprep.subr.bf16.mxu0 %v2743
        %3054 = vmatpush2.bf16.msra.mxu0 %v2742
        %3055 = vmatprep.mubr.bf16.mxu0 %v223
        %3056 = vmatmul.mubr.bf16.gmra.mxu0 %v222
        %v3057 = vpop.f32.mrf.mxu0
        %v3058 = vadd.f32 %v3017, %v3057
        %v3059 = vpop.f32.mrf.mxu0
        %v3060 = vadd.f32 %v3019, %v3059
        %v3061 = vpop.f32.mrf.mxu0
        %v3062 = vpop.f32.mrf.mxu0
        %3063 = vdwg.mxu0
        %v3064 = vmax.f32 %v2976, 0.0
        %v3065 = vmax.f32 %v2978, 0.0
        %v3066 = vmax.f32 %v3058, 0.0
        %v3067 = vmax.f32 %v3060, 0.0
        %v3068 = vpack.c.bf16 %v3064, %v3064
        %v3069 = vpack.c.bf16 %v3065, %v3065
        %v3070 = vpack.c.bf16 %v3066, %v3066
        %v3071 = vpack.c.bf16 %v3067, %v3067
        %v3076 = vunpack.c.l.b16 %v3068
        %v3077 = vunpack.c.l.b16 %v3069
        %v3078 = vunpack.c.l.b16 %v3070
        %v3079 = vunpack.c.l.b16 %v3071
        %v3080 = vpack.c.b16 %v3077, %v3076
        %v3081 = vpack.c.b16 %v3079, %v3078
        %3084 = vst [vmem:[#allocation2 + $0x20] sm:$0xff] %v3080
        %3085 = vst [vmem:[#allocation2 + $0x28] sm:$0xff] %v3081
        %v3086 = vld [vmem:[#allocation6 + $0x30] sm:$0xff]
        %v3087 = vld [vmem:[#allocation6 + $0x38] sm:$0xff]
        %v3088 = vld [vmem:[#allocation6 + $0x70] sm:$0xff]
        %v3089 = vld [vmem:[#allocation6 + $0x78] sm:$0xff]
        %v3090 = vld [vmem:[#allocation6 + $0xb0] sm:$0xff]
        %v3091 = vld [vmem:[#allocation6 + $0xb8] sm:$0xff]
        %v3092 = vld [vmem:[#allocation6 + $0xf0] sm:$0xff]
        %v3093 = vld [vmem:[#allocation6 + $0xf8] sm:$0xff]
        %v3094 = vld [vmem:[#allocation6 + $0x130] sm:$0xff]
        %v3095 = vld [vmem:[#allocation6 + $0x138] sm:$0xff]
        %v3096 = vld [vmem:[#allocation6 + $0x170] sm:$0xff]
        %v3097 = vld [vmem:[#allocation6 + $0x178] sm:$0xff]
        %v3098 = vld [vmem:[#allocation6 + $0x1b0] sm:$0xff]
        %v3099 = vld [vmem:[#allocation6 + $0x1b8] sm:$0xff]
        %v3100 = vld [vmem:[#allocation6 + $0x1f0] sm:$0xff]
        %v3101 = vld [vmem:[#allocation6 + $0x1f8] sm:$0xff]
        %v3102 = vld [vmem:[#allocation6 + $0x230] sm:$0xff]
        %v3103 = vld [vmem:[#allocation6 + $0x238] sm:$0xff]
        %v3104 = vld [vmem:[#allocation6 + $0x270] sm:$0xff]
        %v3105 = vld [vmem:[#allocation6 + $0x278] sm:$0xff]
        %v3106 = vld [vmem:[#allocation6 + $0x2b0] sm:$0xff]
        %v3107 = vld [vmem:[#allocation6 + $0x2b8] sm:$0xff]
        %v3108 = vld [vmem:[#allocation6 + $0x2f0] sm:$0xff]
        %v3109 = vld [vmem:[#allocation6 + $0x2f8] sm:$0xff]
        %v3110 = vld [vmem:[#allocation6 + $0x330] sm:$0xff]
        %v3111 = vld [vmem:[#allocation6 + $0x338] sm:$0xff]
        %v3112 = vld [vmem:[#allocation6 + $0x370] sm:$0xff]
        %v3113 = vld [vmem:[#allocation6 + $0x378] sm:$0xff]
        %v3114 = vld [vmem:[#allocation6 + $0x3b0] sm:$0xff]
        %v3115 = vld [vmem:[#allocation6 + $0x3b8] sm:$0xff]
        %v3116 = vld [vmem:[#allocation6 + $0x3f0] sm:$0xff]
        %v3117 = vld [vmem:[#allocation6 + $0x3f8] sm:$0xff]
        %v3118 = vld [vmem:[#allocation6 + $0x430] sm:$0xff]
        %v3119 = vld [vmem:[#allocation6 + $0x438] sm:$0xff]
        %v3120 = vld [vmem:[#allocation6 + $0x470] sm:$0xff]
        %v3121 = vld [vmem:[#allocation6 + $0x478] sm:$0xff]
        %v3122 = vld [vmem:[#allocation6 + $0x4b0] sm:$0xff]
        %v3123 = vld [vmem:[#allocation6 + $0x4b8] sm:$0xff]
        %v3124 = vld [vmem:[#allocation6 + $0x4f0] sm:$0xff]
        %v3125 = vld [vmem:[#allocation6 + $0x4f8] sm:$0xff]
        %v3126 = vld [vmem:[#allocation6 + $0x530] sm:$0xff]
        %v3127 = vld [vmem:[#allocation6 + $0x538] sm:$0xff]
        %v3128 = vld [vmem:[#allocation6 + $0x570] sm:$0xff]
        %v3129 = vld [vmem:[#allocation6 + $0x578] sm:$0xff]
        %v3130 = vld [vmem:[#allocation6 + $0x5b0] sm:$0xff]
        %v3131 = vld [vmem:[#allocation6 + $0x5b8] sm:$0xff]
        %v3132 = vld [vmem:[#allocation6 + $0x5f0] sm:$0xff]
        %v3133 = vld [vmem:[#allocation6 + $0x5f8] sm:$0xff]
        %v3134 = vld [vmem:[#allocation6 + $0x630] sm:$0xff]
        %v3135 = vld [vmem:[#allocation6 + $0x638] sm:$0xff]
        %v3136 = vld [vmem:[#allocation6 + $0x670] sm:$0xff]
        %v3137 = vld [vmem:[#allocation6 + $0x678] sm:$0xff]
        %v3138 = vld [vmem:[#allocation6 + $0x6b0] sm:$0xff]
        %v3139 = vld [vmem:[#allocation6 + $0x6b8] sm:$0xff]
        %v3140 = vld [vmem:[#allocation6 + $0x6f0] sm:$0xff]
        %v3141 = vld [vmem:[#allocation6 + $0x6f8] sm:$0xff]
        %v3142 = vld [vmem:[#allocation6 + $0x730] sm:$0xff]
        %v3143 = vld [vmem:[#allocation6 + $0x738] sm:$0xff]
        %v3144 = vld [vmem:[#allocation6 + $0x770] sm:$0xff]
        %v3145 = vld [vmem:[#allocation6 + $0x778] sm:$0xff]
        %v3146 = vld [vmem:[#allocation6 + $0x7b0] sm:$0xff]
        %v3147 = vld [vmem:[#allocation6 + $0x7b8] sm:$0xff]
        %v3148 = vld [vmem:[#allocation6 + $0x7f0] sm:$0xff]
        %v3149 = vld [vmem:[#allocation6 + $0x7f8] sm:$0xff]
        %v3150 = vld [vmem:[#allocation6 + $0x830] sm:$0xff]
        %v3151 = vld [vmem:[#allocation6 + $0x838] sm:$0xff]
        %v3152 = vld [vmem:[#allocation6 + $0x870] sm:$0xff]
        %v3153 = vld [vmem:[#allocation6 + $0x878] sm:$0xff]
        %v3154 = vld [vmem:[#allocation6 + $0x8b0] sm:$0xff]
        %v3155 = vld [vmem:[#allocation6 + $0x8b8] sm:$0xff]
        %v3156 = vld [vmem:[#allocation6 + $0x8f0] sm:$0xff]
        %v3157 = vld [vmem:[#allocation6 + $0x8f8] sm:$0xff]
        %v3158 = vld [vmem:[#allocation6 + $0x930] sm:$0xff]
        %v3159 = vld [vmem:[#allocation6 + $0x938] sm:$0xff]
        %v3160 = vld [vmem:[#allocation6 + $0x970] sm:$0xff]
        %v3161 = vld [vmem:[#allocation6 + $0x978] sm:$0xff]
        %v3162 = vld [vmem:[#allocation6 + $0x9b0] sm:$0xff]
        %v3163 = vld [vmem:[#allocation6 + $0x9b8] sm:$0xff]
        %v3164 = vld [vmem:[#allocation6 + $0x9f0] sm:$0xff]
        %v3165 = vld [vmem:[#allocation6 + $0x9f8] sm:$0xff]
        %v3166 = vld [vmem:[#allocation6 + $0xa30] sm:$0xff]
        %v3167 = vld [vmem:[#allocation6 + $0xa38] sm:$0xff]
        %v3168 = vld [vmem:[#allocation6 + $0xa70] sm:$0xff]
        %v3169 = vld [vmem:[#allocation6 + $0xa78] sm:$0xff]
        %v3170 = vld [vmem:[#allocation6 + $0xab0] sm:$0xff]
        %v3171 = vld [vmem:[#allocation6 + $0xab8] sm:$0xff]
        %v3172 = vld [vmem:[#allocation6 + $0xaf0] sm:$0xff]
        %v3173 = vld [vmem:[#allocation6 + $0xaf8] sm:$0xff]
        %v3174 = vld [vmem:[#allocation6 + $0xb30] sm:$0xff]
        %v3175 = vld [vmem:[#allocation6 + $0xb38] sm:$0xff]
        %v3176 = vld [vmem:[#allocation6 + $0xb70] sm:$0xff]
        %v3177 = vld [vmem:[#allocation6 + $0xb78] sm:$0xff]
        %v3178 = vld [vmem:[#allocation6 + $0xbb0] sm:$0xff]
        %v3179 = vld [vmem:[#allocation6 + $0xbb8] sm:$0xff]
        %v3180 = vld [vmem:[#allocation6 + $0xbf0] sm:$0xff]
        %v3181 = vld [vmem:[#allocation6 + $0xbf8] sm:$0xff]
        %v3182 = vld [vmem:[#allocation6 + $0xc30] sm:$0xff]
        %v3183 = vld [vmem:[#allocation6 + $0xc38] sm:$0xff]
        %v3184 = vld [vmem:[#allocation6 + $0xc70] sm:$0xff]
        %v3185 = vld [vmem:[#allocation6 + $0xc78] sm:$0xff]
        %v3186 = vld [vmem:[#allocation6 + $0xcb0] sm:$0xff]
        %v3187 = vld [vmem:[#allocation6 + $0xcb8] sm:$0xff]
        %v3188 = vld [vmem:[#allocation6 + $0xcf0] sm:$0xff]
        %v3189 = vld [vmem:[#allocation6 + $0xcf8] sm:$0xff]
        %v3190 = vld [vmem:[#allocation6 + $0xd30] sm:$0xff]
        %v3191 = vld [vmem:[#allocation6 + $0xd38] sm:$0xff]
        %v3192 = vld [vmem:[#allocation6 + $0xd70] sm:$0xff]
        %v3193 = vld [vmem:[#allocation6 + $0xd78] sm:$0xff]
        %v3194 = vld [vmem:[#allocation6 + $0xdb0] sm:$0xff]
        %v3195 = vld [vmem:[#allocation6 + $0xdb8] sm:$0xff]
        %v3196 = vld [vmem:[#allocation6 + $0xdf0] sm:$0xff]
        %v3197 = vld [vmem:[#allocation6 + $0xdf8] sm:$0xff]
        %v3198 = vld [vmem:[#allocation6 + $0xe30] sm:$0xff]
        %v3199 = vld [vmem:[#allocation6 + $0xe38] sm:$0xff]
        %v3200 = vld [vmem:[#allocation6 + $0xe70] sm:$0xff]
        %v3201 = vld [vmem:[#allocation6 + $0xe78] sm:$0xff]
        %v3202 = vld [vmem:[#allocation6 + $0xeb0] sm:$0xff]
        %v3203 = vld [vmem:[#allocation6 + $0xeb8] sm:$0xff]
        %v3204 = vld [vmem:[#allocation6 + $0xef0] sm:$0xff]
        %v3205 = vld [vmem:[#allocation6 + $0xef8] sm:$0xff]
        %v3206 = vld [vmem:[#allocation6 + $0xf30] sm:$0xff]
        %v3207 = vld [vmem:[#allocation6 + $0xf38] sm:$0xff]
        %v3208 = vld [vmem:[#allocation6 + $0xf70] sm:$0xff]
        %v3209 = vld [vmem:[#allocation6 + $0xf78] sm:$0xff]
        %v3210 = vld [vmem:[#allocation6 + $0xfb0] sm:$0xff]
        %v3211 = vld [vmem:[#allocation6 + $0xfb8] sm:$0xff]
        %v3212 = vld [vmem:[#allocation6 + $0xff0] sm:$0xff]
        %v3213 = vld [vmem:[#allocation6 + $0xff8] sm:$0xff]
        %v3342 = vunpack.c.l.b16 %v3086
        %v3343 = vunpack.c.h.b16 %v3086
        %v3344 = vunpack.c.l.b16 %v3087
        %v3345 = vunpack.c.h.b16 %v3087
        %v3346 = vunpack.c.l.b16 %v3088
        %v3347 = vunpack.c.h.b16 %v3088
        %v3348 = vunpack.c.l.b16 %v3089
        %v3349 = vunpack.c.h.b16 %v3089
        %v3350 = vunpack.c.l.b16 %v3090
        %v3351 = vunpack.c.h.b16 %v3090
        %v3352 = vunpack.c.l.b16 %v3091
        %v3353 = vunpack.c.h.b16 %v3091
        %v3354 = vunpack.c.l.b16 %v3092
        %v3355 = vunpack.c.h.b16 %v3092
        %v3356 = vunpack.c.l.b16 %v3093
        %v3357 = vunpack.c.h.b16 %v3093
        %v3358 = vunpack.c.l.b16 %v3094
        %v3359 = vunpack.c.h.b16 %v3094
        %v3360 = vunpack.c.l.b16 %v3095
        %v3361 = vunpack.c.h.b16 %v3095
        %v3362 = vunpack.c.l.b16 %v3096
        %v3363 = vunpack.c.h.b16 %v3096
        %v3364 = vunpack.c.l.b16 %v3097
        %v3365 = vunpack.c.h.b16 %v3097
        %v3366 = vunpack.c.l.b16 %v3098
        %v3367 = vunpack.c.h.b16 %v3098
        %v3368 = vunpack.c.l.b16 %v3099
        %v3369 = vunpack.c.h.b16 %v3099
        %v3370 = vunpack.c.l.b16 %v3100
        %v3371 = vunpack.c.h.b16 %v3100
        %v3372 = vunpack.c.l.b16 %v3101
        %v3373 = vunpack.c.h.b16 %v3101
        %v3374 = vunpack.c.l.b16 %v3102
        %v3375 = vunpack.c.h.b16 %v3102
        %v3376 = vunpack.c.l.b16 %v3103
        %v3377 = vunpack.c.h.b16 %v3103
        %v3378 = vunpack.c.l.b16 %v3104
        %v3379 = vunpack.c.h.b16 %v3104
        %v3380 = vunpack.c.l.b16 %v3105
        %v3381 = vunpack.c.h.b16 %v3105
        %v3382 = vunpack.c.l.b16 %v3106
        %v3383 = vunpack.c.h.b16 %v3106
        %v3384 = vunpack.c.l.b16 %v3107
        %v3385 = vunpack.c.h.b16 %v3107
        %v3386 = vunpack.c.l.b16 %v3108
        %v3387 = vunpack.c.h.b16 %v3108
        %v3388 = vunpack.c.l.b16 %v3109
        %v3389 = vunpack.c.h.b16 %v3109
        %v3390 = vunpack.c.l.b16 %v3110
        %v3391 = vunpack.c.h.b16 %v3110
        %v3392 = vunpack.c.l.b16 %v3111
        %v3393 = vunpack.c.h.b16 %v3111
        %v3394 = vunpack.c.l.b16 %v3112
        %v3395 = vunpack.c.h.b16 %v3112
        %v3396 = vunpack.c.l.b16 %v3113
        %v3397 = vunpack.c.h.b16 %v3113
        %v3398 = vunpack.c.l.b16 %v3114
        %v3399 = vunpack.c.h.b16 %v3114
        %v3400 = vunpack.c.l.b16 %v3115
        %v3401 = vunpack.c.h.b16 %v3115
        %v3402 = vunpack.c.l.b16 %v3116
        %v3403 = vunpack.c.h.b16 %v3116
        %v3404 = vunpack.c.l.b16 %v3117
        %v3405 = vunpack.c.h.b16 %v3117
        %v3406 = vunpack.c.l.b16 %v3118
        %v3407 = vunpack.c.h.b16 %v3118
        %v3408 = vunpack.c.l.b16 %v3119
        %v3409 = vunpack.c.h.b16 %v3119
        %v3410 = vunpack.c.l.b16 %v3120
        %v3411 = vunpack.c.h.b16 %v3120
        %v3412 = vunpack.c.l.b16 %v3121
        %v3413 = vunpack.c.h.b16 %v3121
        %v3414 = vunpack.c.l.b16 %v3122
        %v3415 = vunpack.c.h.b16 %v3122
        %v3416 = vunpack.c.l.b16 %v3123
        %v3417 = vunpack.c.h.b16 %v3123
        %v3418 = vunpack.c.l.b16 %v3124
        %v3419 = vunpack.c.h.b16 %v3124
        %v3420 = vunpack.c.l.b16 %v3125
        %v3421 = vunpack.c.h.b16 %v3125
        %v3422 = vunpack.c.l.b16 %v3126
        %v3423 = vunpack.c.h.b16 %v3126
        %v3424 = vunpack.c.l.b16 %v3127
        %v3425 = vunpack.c.h.b16 %v3127
        %v3426 = vunpack.c.l.b16 %v3128
        %v3427 = vunpack.c.h.b16 %v3128
        %v3428 = vunpack.c.l.b16 %v3129
        %v3429 = vunpack.c.h.b16 %v3129
        %v3430 = vunpack.c.l.b16 %v3130
        %v3431 = vunpack.c.h.b16 %v3130
        %v3432 = vunpack.c.l.b16 %v3131
        %v3433 = vunpack.c.h.b16 %v3131
        %v3434 = vunpack.c.l.b16 %v3132
        %v3435 = vunpack.c.h.b16 %v3132
        %v3436 = vunpack.c.l.b16 %v3133
        %v3437 = vunpack.c.h.b16 %v3133
        %v3438 = vunpack.c.l.b16 %v3134
        %v3439 = vunpack.c.h.b16 %v3134
        %v3440 = vunpack.c.l.b16 %v3135
        %v3441 = vunpack.c.h.b16 %v3135
        %v3442 = vunpack.c.l.b16 %v3136
        %v3443 = vunpack.c.h.b16 %v3136
        %v3444 = vunpack.c.l.b16 %v3137
        %v3445 = vunpack.c.h.b16 %v3137
        %v3446 = vunpack.c.l.b16 %v3138
        %v3447 = vunpack.c.h.b16 %v3138
        %v3448 = vunpack.c.l.b16 %v3139
        %v3449 = vunpack.c.h.b16 %v3139
        %v3450 = vunpack.c.l.b16 %v3140
        %v3451 = vunpack.c.h.b16 %v3140
        %v3452 = vunpack.c.l.b16 %v3141
        %v3453 = vunpack.c.h.b16 %v3141
        %v3454 = vunpack.c.l.b16 %v3142
        %v3455 = vunpack.c.h.b16 %v3142
        %v3456 = vunpack.c.l.b16 %v3143
        %v3457 = vunpack.c.h.b16 %v3143
        %v3458 = vunpack.c.l.b16 %v3144
        %v3459 = vunpack.c.h.b16 %v3144
        %v3460 = vunpack.c.l.b16 %v3145
        %v3461 = vunpack.c.h.b16 %v3145
        %v3462 = vunpack.c.l.b16 %v3146
        %v3463 = vunpack.c.h.b16 %v3146
        %v3464 = vunpack.c.l.b16 %v3147
        %v3465 = vunpack.c.h.b16 %v3147
        %v3466 = vunpack.c.l.b16 %v3148
        %v3467 = vunpack.c.h.b16 %v3148
        %v3468 = vunpack.c.l.b16 %v3149
        %v3469 = vunpack.c.h.b16 %v3149
        %v3470 = vunpack.c.l.b16 %v3150
        %v3471 = vunpack.c.h.b16 %v3150
        %v3472 = vunpack.c.l.b16 %v3151
        %v3473 = vunpack.c.h.b16 %v3151
        %v3474 = vunpack.c.l.b16 %v3152
        %v3475 = vunpack.c.h.b16 %v3152
        %v3476 = vunpack.c.l.b16 %v3153
        %v3477 = vunpack.c.h.b16 %v3153
        %v3478 = vunpack.c.l.b16 %v3154
        %v3479 = vunpack.c.h.b16 %v3154
        %v3480 = vunpack.c.l.b16 %v3155
        %v3481 = vunpack.c.h.b16 %v3155
        %v3482 = vunpack.c.l.b16 %v3156
        %v3483 = vunpack.c.h.b16 %v3156
        %v3484 = vunpack.c.l.b16 %v3157
        %v3485 = vunpack.c.h.b16 %v3157
        %v3486 = vunpack.c.l.b16 %v3158
        %v3487 = vunpack.c.h.b16 %v3158
        %v3488 = vunpack.c.l.b16 %v3159
        %v3489 = vunpack.c.h.b16 %v3159
        %v3490 = vunpack.c.l.b16 %v3160
        %v3491 = vunpack.c.h.b16 %v3160
        %v3492 = vunpack.c.l.b16 %v3161
        %v3493 = vunpack.c.h.b16 %v3161
        %v3494 = vunpack.c.l.b16 %v3162
        %v3495 = vunpack.c.h.b16 %v3162
        %v3496 = vunpack.c.l.b16 %v3163
        %v3497 = vunpack.c.h.b16 %v3163
        %v3498 = vunpack.c.l.b16 %v3164
        %v3499 = vunpack.c.h.b16 %v3164
        %v3500 = vunpack.c.l.b16 %v3165
        %v3501 = vunpack.c.h.b16 %v3165
        %v3502 = vunpack.c.l.b16 %v3166
        %v3503 = vunpack.c.h.b16 %v3166
        %v3504 = vunpack.c.l.b16 %v3167
        %v3505 = vunpack.c.h.b16 %v3167
        %v3506 = vunpack.c.l.b16 %v3168
        %v3507 = vunpack.c.h.b16 %v3168
        %v3508 = vunpack.c.l.b16 %v3169
        %v3509 = vunpack.c.h.b16 %v3169
        %v3510 = vunpack.c.l.b16 %v3170
        %v3511 = vunpack.c.h.b16 %v3170
        %v3512 = vunpack.c.l.b16 %v3171
        %v3513 = vunpack.c.h.b16 %v3171
        %v3514 = vunpack.c.l.b16 %v3172
        %v3515 = vunpack.c.h.b16 %v3172
        %v3516 = vunpack.c.l.b16 %v3173
        %v3517 = vunpack.c.h.b16 %v3173
        %v3518 = vunpack.c.l.b16 %v3174
        %v3519 = vunpack.c.h.b16 %v3174
        %v3520 = vunpack.c.l.b16 %v3175
        %v3521 = vunpack.c.h.b16 %v3175
        %v3522 = vunpack.c.l.b16 %v3176
        %v3523 = vunpack.c.h.b16 %v3176
        %v3524 = vunpack.c.l.b16 %v3177
        %v3525 = vunpack.c.h.b16 %v3177
        %v3526 = vunpack.c.l.b16 %v3178
        %v3527 = vunpack.c.h.b16 %v3178
        %v3528 = vunpack.c.l.b16 %v3179
        %v3529 = vunpack.c.h.b16 %v3179
        %v3530 = vunpack.c.l.b16 %v3180
        %v3531 = vunpack.c.h.b16 %v3180
        %v3532 = vunpack.c.l.b16 %v3181
        %v3533 = vunpack.c.h.b16 %v3181
        %v3534 = vunpack.c.l.b16 %v3182
        %v3535 = vunpack.c.h.b16 %v3182
        %v3536 = vunpack.c.l.b16 %v3183
        %v3537 = vunpack.c.h.b16 %v3183
        %v3538 = vunpack.c.l.b16 %v3184
        %v3539 = vunpack.c.h.b16 %v3184
        %v3540 = vunpack.c.l.b16 %v3185
        %v3541 = vunpack.c.h.b16 %v3185
        %v3542 = vunpack.c.l.b16 %v3186
        %v3543 = vunpack.c.h.b16 %v3186
        %v3544 = vunpack.c.l.b16 %v3187
        %v3545 = vunpack.c.h.b16 %v3187
        %v3546 = vunpack.c.l.b16 %v3188
        %v3547 = vunpack.c.h.b16 %v3188
        %v3548 = vunpack.c.l.b16 %v3189
        %v3549 = vunpack.c.h.b16 %v3189
        %v3550 = vunpack.c.l.b16 %v3190
        %v3551 = vunpack.c.h.b16 %v3190
        %v3552 = vunpack.c.l.b16 %v3191
        %v3553 = vunpack.c.h.b16 %v3191
        %v3554 = vunpack.c.l.b16 %v3192
        %v3555 = vunpack.c.h.b16 %v3192
        %v3556 = vunpack.c.l.b16 %v3193
        %v3557 = vunpack.c.h.b16 %v3193
        %v3558 = vunpack.c.l.b16 %v3194
        %v3559 = vunpack.c.h.b16 %v3194
        %v3560 = vunpack.c.l.b16 %v3195
        %v3561 = vunpack.c.h.b16 %v3195
        %v3562 = vunpack.c.l.b16 %v3196
        %v3563 = vunpack.c.h.b16 %v3196
        %v3564 = vunpack.c.l.b16 %v3197
        %v3565 = vunpack.c.h.b16 %v3197
        %v3566 = vunpack.c.l.b16 %v3198
        %v3567 = vunpack.c.h.b16 %v3198
        %v3568 = vunpack.c.l.b16 %v3199
        %v3569 = vunpack.c.h.b16 %v3199
        %v3570 = vunpack.c.l.b16 %v3200
        %v3571 = vunpack.c.h.b16 %v3200
        %v3572 = vunpack.c.l.b16 %v3201
        %v3573 = vunpack.c.h.b16 %v3201
        %v3574 = vunpack.c.l.b16 %v3202
        %v3575 = vunpack.c.h.b16 %v3202
        %v3576 = vunpack.c.l.b16 %v3203
        %v3577 = vunpack.c.h.b16 %v3203
        %v3578 = vunpack.c.l.b16 %v3204
        %v3579 = vunpack.c.h.b16 %v3204
        %v3580 = vunpack.c.l.b16 %v3205
        %v3581 = vunpack.c.h.b16 %v3205
        %v3582 = vunpack.c.l.b16 %v3206
        %v3583 = vunpack.c.h.b16 %v3206
        %v3584 = vunpack.c.l.b16 %v3207
        %v3585 = vunpack.c.h.b16 %v3207
        %v3586 = vunpack.c.l.b16 %v3208
        %v3587 = vunpack.c.h.b16 %v3208
        %v3588 = vunpack.c.l.b16 %v3209
        %v3589 = vunpack.c.h.b16 %v3209
        %v3590 = vunpack.c.l.b16 %v3210
        %v3591 = vunpack.c.h.b16 %v3210
        %v3592 = vunpack.c.l.b16 %v3211
        %v3593 = vunpack.c.h.b16 %v3211
        %v3594 = vunpack.c.l.b16 %v3212
        %v3595 = vunpack.c.h.b16 %v3212
        %v3596 = vunpack.c.l.b16 %v3213
        %v3597 = vunpack.c.h.b16 %v3213
        %v3598 = vpack.c.b16 %v3346, %v3342
        %v3599 = vpack.c.b16 %v3347, %v3343
        %v3600 = vpack.c.b16 %v3348, %v3344
        %v3601 = vpack.c.b16 %v3349, %v3345
        %v3602 = vpack.c.b16 %v3354, %v3350
        %v3603 = vpack.c.b16 %v3355, %v3351
        %v3604 = vpack.c.b16 %v3356, %v3352
        %v3605 = vpack.c.b16 %v3357, %v3353
        %v3606 = vpack.c.b16 %v3362, %v3358
        %v3607 = vpack.c.b16 %v3363, %v3359
        %v3608 = vpack.c.b16 %v3364, %v3360
        %v3609 = vpack.c.b16 %v3365, %v3361
        %v3610 = vpack.c.b16 %v3370, %v3366
        %v3611 = vpack.c.b16 %v3371, %v3367
        %v3612 = vpack.c.b16 %v3372, %v3368
        %v3613 = vpack.c.b16 %v3373, %v3369
        %v3614 = vpack.c.b16 %v3378, %v3374
        %v3615 = vpack.c.b16 %v3379, %v3375
        %v3616 = vpack.c.b16 %v3380, %v3376
        %v3617 = vpack.c.b16 %v3381, %v3377
        %v3618 = vpack.c.b16 %v3386, %v3382
        %v3619 = vpack.c.b16 %v3387, %v3383
        %v3620 = vpack.c.b16 %v3388, %v3384
        %v3621 = vpack.c.b16 %v3389, %v3385
        %v3622 = vpack.c.b16 %v3394, %v3390
        %v3623 = vpack.c.b16 %v3395, %v3391
        %v3624 = vpack.c.b16 %v3396, %v3392
        %v3625 = vpack.c.b16 %v3397, %v3393
        %v3626 = vpack.c.b16 %v3402, %v3398
        %v3627 = vpack.c.b16 %v3403, %v3399
        %v3628 = vpack.c.b16 %v3404, %v3400
        %v3629 = vpack.c.b16 %v3405, %v3401
        %v3630 = vpack.c.b16 %v3410, %v3406
        %v3631 = vpack.c.b16 %v3411, %v3407
        %v3632 = vpack.c.b16 %v3412, %v3408
        %v3633 = vpack.c.b16 %v3413, %v3409
        %v3634 = vpack.c.b16 %v3418, %v3414
        %v3635 = vpack.c.b16 %v3419, %v3415
        %v3636 = vpack.c.b16 %v3420, %v3416
        %v3637 = vpack.c.b16 %v3421, %v3417
        %v3638 = vpack.c.b16 %v3426, %v3422
        %v3639 = vpack.c.b16 %v3427, %v3423
        %v3640 = vpack.c.b16 %v3428, %v3424
        %v3641 = vpack.c.b16 %v3429, %v3425
        %v3642 = vpack.c.b16 %v3434, %v3430
        %v3643 = vpack.c.b16 %v3435, %v3431
        %v3644 = vpack.c.b16 %v3436, %v3432
        %v3645 = vpack.c.b16 %v3437, %v3433
        %v3646 = vpack.c.b16 %v3442, %v3438
        %v3647 = vpack.c.b16 %v3443, %v3439
        %v3648 = vpack.c.b16 %v3444, %v3440
        %v3649 = vpack.c.b16 %v3445, %v3441
        %v3650 = vpack.c.b16 %v3450, %v3446
        %v3651 = vpack.c.b16 %v3451, %v3447
        %v3652 = vpack.c.b16 %v3452, %v3448
        %v3653 = vpack.c.b16 %v3453, %v3449
        %v3654 = vpack.c.b16 %v3458, %v3454
        %v3655 = vpack.c.b16 %v3459, %v3455
        %v3656 = vpack.c.b16 %v3460, %v3456
        %v3657 = vpack.c.b16 %v3461, %v3457
        %v3658 = vpack.c.b16 %v3466, %v3462
        %v3659 = vpack.c.b16 %v3467, %v3463
        %v3660 = vpack.c.b16 %v3468, %v3464
        %v3661 = vpack.c.b16 %v3469, %v3465
        %v3662 = vpack.c.b16 %v3474, %v3470
        %v3663 = vpack.c.b16 %v3475, %v3471
        %v3664 = vpack.c.b16 %v3476, %v3472
        %v3665 = vpack.c.b16 %v3477, %v3473
        %v3666 = vpack.c.b16 %v3482, %v3478
        %v3667 = vpack.c.b16 %v3483, %v3479
        %v3668 = vpack.c.b16 %v3484, %v3480
        %v3669 = vpack.c.b16 %v3485, %v3481
        %v3670 = vpack.c.b16 %v3490, %v3486
        %v3671 = vpack.c.b16 %v3491, %v3487
        %v3672 = vpack.c.b16 %v3492, %v3488
        %v3673 = vpack.c.b16 %v3493, %v3489
        %v3674 = vpack.c.b16 %v3498, %v3494
        %v3675 = vpack.c.b16 %v3499, %v3495
        %v3676 = vpack.c.b16 %v3500, %v3496
        %v3677 = vpack.c.b16 %v3501, %v3497
        %v3678 = vpack.c.b16 %v3506, %v3502
        %v3679 = vpack.c.b16 %v3507, %v3503
        %v3680 = vpack.c.b16 %v3508, %v3504
        %v3681 = vpack.c.b16 %v3509, %v3505
        %v3682 = vpack.c.b16 %v3514, %v3510
        %v3683 = vpack.c.b16 %v3515, %v3511
        %v3684 = vpack.c.b16 %v3516, %v3512
        %v3685 = vpack.c.b16 %v3517, %v3513
        %v3686 = vpack.c.b16 %v3522, %v3518
        %v3687 = vpack.c.b16 %v3523, %v3519
        %v3688 = vpack.c.b16 %v3524, %v3520
        %v3689 = vpack.c.b16 %v3525, %v3521
        %v3690 = vpack.c.b16 %v3530, %v3526
        %v3691 = vpack.c.b16 %v3531, %v3527
        %v3692 = vpack.c.b16 %v3532, %v3528
        %v3693 = vpack.c.b16 %v3533, %v3529
        %v3694 = vpack.c.b16 %v3538, %v3534
        %v3695 = vpack.c.b16 %v3539, %v3535
        %v3696 = vpack.c.b16 %v3540, %v3536
        %v3697 = vpack.c.b16 %v3541, %v3537
        %v3698 = vpack.c.b16 %v3546, %v3542
        %v3699 = vpack.c.b16 %v3547, %v3543
        %v3700 = vpack.c.b16 %v3548, %v3544
        %v3701 = vpack.c.b16 %v3549, %v3545
        %v3702 = vpack.c.b16 %v3554, %v3550
        %v3703 = vpack.c.b16 %v3555, %v3551
        %v3704 = vpack.c.b16 %v3556, %v3552
        %v3705 = vpack.c.b16 %v3557, %v3553
        %v3706 = vpack.c.b16 %v3562, %v3558
        %v3707 = vpack.c.b16 %v3563, %v3559
        %v3708 = vpack.c.b16 %v3564, %v3560
        %v3709 = vpack.c.b16 %v3565, %v3561
        %v3710 = vpack.c.b16 %v3570, %v3566
        %v3711 = vpack.c.b16 %v3571, %v3567
        %v3712 = vpack.c.b16 %v3572, %v3568
        %v3713 = vpack.c.b16 %v3573, %v3569
        %v3714 = vpack.c.b16 %v3578, %v3574
        %v3715 = vpack.c.b16 %v3579, %v3575
        %v3716 = vpack.c.b16 %v3580, %v3576
        %v3717 = vpack.c.b16 %v3581, %v3577
        %v3718 = vpack.c.b16 %v3586, %v3582
        %v3719 = vpack.c.b16 %v3587, %v3583
        %v3720 = vpack.c.b16 %v3588, %v3584
        %v3721 = vpack.c.b16 %v3589, %v3585
        %v3722 = vpack.c.b16 %v3594, %v3590
        %v3723 = vpack.c.b16 %v3595, %v3591
        %v3724 = vpack.c.b16 %v3596, %v3592
        %v3725 = vpack.c.b16 %v3597, %v3593
        %3854 = vmatprep.subr.bf16.mxu0 %v3627
        %3855 = vmatpush1.bf16.msra.mxu0 %v3626
        %3856 = vmatprep.subr.bf16.mxu0 %v3623
        %3857 = vmatpush1.bf16.msra.mxu0 %v3622
        %3858 = vmatprep.subr.bf16.mxu0 %v3619
        %3859 = vmatpush1.bf16.msra.mxu0 %v3618
        %3860 = vmatprep.subr.bf16.mxu0 %v3615
        %3861 = vmatpush1.bf16.msra.mxu0 %v3614
        %3862 = vmatprep.subr.bf16.mxu0 %v3611
        %3863 = vmatpush1.bf16.msra.mxu0 %v3610
        %3864 = vmatprep.subr.bf16.mxu0 %v3607
        %3865 = vmatpush1.bf16.msra.mxu0 %v3606
        %3866 = vmatprep.subr.bf16.mxu0 %v3603
        %3867 = vmatpush1.bf16.msra.mxu0 %v3602
        %3868 = vmatprep.subr.bf16.mxu0 %v3599
        %3869 = vmatpush1.bf16.msra.mxu0 %v3598
        %3870 = vmatprep.subr.bf16.mxu0 %v3659
        %3871 = vmatpush2.bf16.msra.mxu0 %v3658
        %3872 = vmatprep.subr.bf16.mxu0 %v3655
        %3873 = vmatpush2.bf16.msra.mxu0 %v3654
        %3874 = vmatprep.subr.bf16.mxu0 %v3651
        %3875 = vmatpush2.bf16.msra.mxu0 %v3650
        %3876 = vmatprep.subr.bf16.mxu0 %v3647
        %3877 = vmatpush2.bf16.msra.mxu0 %v3646
        %3878 = vmatprep.subr.bf16.mxu0 %v3643
        %3879 = vmatpush2.bf16.msra.mxu0 %v3642
        %3880 = vmatprep.subr.bf16.mxu0 %v3639
        %3881 = vmatpush2.bf16.msra.mxu0 %v3638
        %3882 = vmatprep.subr.bf16.mxu0 %v3635
        %3883 = vmatpush2.bf16.msra.mxu0 %v3634
        %3884 = vmatprep.subr.bf16.mxu0 %v3631
        %3885 = vmatpush2.bf16.msra.mxu0 %v3630
        %3886 = vmatprep.mubr.bf16.mxu0 %v221
        %3887 = vmatmul.mubr.bf16.gmra.mxu0 %v220
        %v3888 = vpop.f32.mrf.mxu0
        %v3889 = vadd.f32 0.0, %v3888
        %v3890 = vpop.f32.mrf.mxu0
        %v3891 = vadd.f32 0.0, %v3890
        %v3892 = vpop.f32.mrf.mxu0
        %v3893 = vpop.f32.mrf.mxu0
        %3894 = vdwg.mxu0
        %3895 = vmatprep.subr.bf16.mxu0 %v3691
        %3896 = vmatpush1.bf16.msra.mxu0 %v3690
        %3897 = vmatprep.subr.bf16.mxu0 %v3687
        %3898 = vmatpush1.bf16.msra.mxu0 %v3686
        %3899 = vmatprep.subr.bf16.mxu0 %v3683
        %3900 = vmatpush1.bf16.msra.mxu0 %v3682
        %3901 = vmatprep.subr.bf16.mxu0 %v3679
        %3902 = vmatpush1.bf16.msra.mxu0 %v3678
        %3903 = vmatprep.subr.bf16.mxu0 %v3675
        %3904 = vmatpush1.bf16.msra.mxu0 %v3674
        %3905 = vmatprep.subr.bf16.mxu0 %v3671
        %3906 = vmatpush1.bf16.msra.mxu0 %v3670
        %3907 = vmatprep.subr.bf16.mxu0 %v3667
        %3908 = vmatpush1.bf16.msra.mxu0 %v3666
        %3909 = vmatprep.subr.bf16.mxu0 %v3663
        %3910 = vmatpush1.bf16.msra.mxu0 %v3662
        %3911 = vmatprep.subr.bf16.mxu0 %v3723
        %3912 = vmatpush2.bf16.msra.mxu0 %v3722
        %3913 = vmatprep.subr.bf16.mxu0 %v3719
        %3914 = vmatpush2.bf16.msra.mxu0 %v3718
        %3915 = vmatprep.subr.bf16.mxu0 %v3715
        %3916 = vmatpush2.bf16.msra.mxu0 %v3714
        %3917 = vmatprep.subr.bf16.mxu0 %v3711
        %3918 = vmatpush2.bf16.msra.mxu0 %v3710
        %3919 = vmatprep.subr.bf16.mxu0 %v3707
        %3920 = vmatpush2.bf16.msra.mxu0 %v3706
        %3921 = vmatprep.subr.bf16.mxu0 %v3703
        %3922 = vmatpush2.bf16.msra.mxu0 %v3702
        %3923 = vmatprep.subr.bf16.mxu0 %v3699
        %3924 = vmatpush2.bf16.msra.mxu0 %v3698
        %3925 = vmatprep.subr.bf16.mxu0 %v3695
        %3926 = vmatpush2.bf16.msra.mxu0 %v3694
        %3927 = vmatprep.mubr.bf16.mxu0 %v223
        %3928 = vmatmul.mubr.bf16.gmra.mxu0 %v222
        %v3929 = vpop.f32.mrf.mxu0
        %v3930 = vadd.f32 %v3889, %v3929
        %v3931 = vpop.f32.mrf.mxu0
        %v3932 = vadd.f32 %v3891, %v3931
        %v3933 = vpop.f32.mrf.mxu0
        %v3934 = vpop.f32.mrf.mxu0
        %3935 = vdwg.mxu0
        %3936 = vmatprep.subr.bf16.mxu0 %v3629
        %3937 = vmatpush1.bf16.msra.mxu0 %v3628
        %3938 = vmatprep.subr.bf16.mxu0 %v3625
        %3939 = vmatpush1.bf16.msra.mxu0 %v3624
        %3940 = vmatprep.subr.bf16.mxu0 %v3621
        %3941 = vmatpush1.bf16.msra.mxu0 %v3620
        %3942 = vmatprep.subr.bf16.mxu0 %v3617
        %3943 = vmatpush1.bf16.msra.mxu0 %v3616
        %3944 = vmatprep.subr.bf16.mxu0 %v3613
        %3945 = vmatpush1.bf16.msra.mxu0 %v3612
        %3946 = vmatprep.subr.bf16.mxu0 %v3609
        %3947 = vmatpush1.bf16.msra.mxu0 %v3608
        %3948 = vmatprep.subr.bf16.mxu0 %v3605
        %3949 = vmatpush1.bf16.msra.mxu0 %v3604
        %3950 = vmatprep.subr.bf16.mxu0 %v3601
        %3951 = vmatpush1.bf16.msra.mxu0 %v3600
        %3952 = vmatprep.subr.bf16.mxu0 %v3661
        %3953 = vmatpush2.bf16.msra.mxu0 %v3660
        %3954 = vmatprep.subr.bf16.mxu0 %v3657
        %3955 = vmatpush2.bf16.msra.mxu0 %v3656
        %3956 = vmatprep.subr.bf16.mxu0 %v3653
        %3957 = vmatpush2.bf16.msra.mxu0 %v3652
        %3958 = vmatprep.subr.bf16.mxu0 %v3649
        %3959 = vmatpush2.bf16.msra.mxu0 %v3648
        %3960 = vmatprep.subr.bf16.mxu0 %v3645
        %3961 = vmatpush2.bf16.msra.mxu0 %v3644
        %3962 = vmatprep.subr.bf16.mxu0 %v3641
        %3963 = vmatpush2.bf16.msra.mxu0 %v3640
        %3964 = vmatprep.subr.bf16.mxu0 %v3637
        %3965 = vmatpush2.bf16.msra.mxu0 %v3636
        %3966 = vmatprep.subr.bf16.mxu0 %v3633
        %3967 = vmatpush2.bf16.msra.mxu0 %v3632
        %3968 = vmatprep.mubr.bf16.mxu0 %v221
        %3969 = vmatmul.mubr.bf16.gmra.mxu0 %v220
        %v3970 = vpop.f32.mrf.mxu0
        %v3971 = vadd.f32 0.0, %v3970
        %v3972 = vpop.f32.mrf.mxu0
        %v3973 = vadd.f32 0.0, %v3972
        %v3974 = vpop.f32.mrf.mxu0
        %v3975 = vpop.f32.mrf.mxu0
        %3976 = vdwg.mxu0
        %3977 = vmatprep.subr.bf16.mxu0 %v3693
        %3978 = vmatpush1.bf16.msra.mxu0 %v3692
        %3979 = vmatprep.subr.bf16.mxu0 %v3689
        %3980 = vmatpush1.bf16.msra.mxu0 %v3688
        %3981 = vmatprep.subr.bf16.mxu0 %v3685
        %3982 = vmatpush1.bf16.msra.mxu0 %v3684
        %3983 = vmatprep.subr.bf16.mxu0 %v3681
        %3984 = vmatpush1.bf16.msra.mxu0 %v3680
        %3985 = vmatprep.subr.bf16.mxu0 %v3677
        %3986 = vmatpush1.bf16.msra.mxu0 %v3676
        %3987 = vmatprep.subr.bf16.mxu0 %v3673
        %3988 = vmatpush1.bf16.msra.mxu0 %v3672
        %3989 = vmatprep.subr.bf16.mxu0 %v3669
        %3990 = vmatpush1.bf16.msra.mxu0 %v3668
        %3991 = vmatprep.subr.bf16.mxu0 %v3665
        %3992 = vmatpush1.bf16.msra.mxu0 %v3664
        %3993 = vmatprep.subr.bf16.mxu0 %v3725
        %3994 = vmatpush2.bf16.msra.mxu0 %v3724
        %3995 = vmatprep.subr.bf16.mxu0 %v3721
        %3996 = vmatpush2.bf16.msra.mxu0 %v3720
        %3997 = vmatprep.subr.bf16.mxu0 %v3717
        %3998 = vmatpush2.bf16.msra.mxu0 %v3716
        %3999 = vmatprep.subr.bf16.mxu0 %v3713
        %4000 = vmatpush2.bf16.msra.mxu0 %v3712
        %4001 = vmatprep.subr.bf16.mxu0 %v3709
        %4002 = vmatpush2.bf16.msra.mxu0 %v3708
        %4003 = vmatprep.subr.bf16.mxu0 %v3705
        %4004 = vmatpush2.bf16.msra.mxu0 %v3704
        %4005 = vmatprep.subr.bf16.mxu0 %v3701
        %4006 = vmatpush2.bf16.msra.mxu0 %v3700
        %4007 = vmatprep.subr.bf16.mxu0 %v3697
        %4008 = vmatpush2.bf16.msra.mxu0 %v3696
        %4009 = vmatprep.mubr.bf16.mxu0 %v223
        %4010 = vmatmul.mubr.bf16.gmra.mxu0 %v222
        %v4011 = vpop.f32.mrf.mxu0
        %v4012 = vadd.f32 %v3971, %v4011
        %v4013 = vpop.f32.mrf.mxu0
        %v4014 = vadd.f32 %v3973, %v4013
        %v4015 = vpop.f32.mrf.mxu0
        %v4016 = vpop.f32.mrf.mxu0
        %4017 = vdwg.mxu0
        %v4018 = vmax.f32 %v3930, 0.0
        %v4019 = vmax.f32 %v3932, 0.0
        %v4020 = vmax.f32 %v4012, 0.0
        %v4021 = vmax.f32 %v4014, 0.0
        %v4022 = vpack.c.bf16 %v4018, %v4018
        %v4023 = vpack.c.bf16 %v4019, %v4019
        %v4024 = vpack.c.bf16 %v4020, %v4020
        %v4025 = vpack.c.bf16 %v4021, %v4021
        %v4030 = vunpack.c.l.b16 %v4022
        %v4031 = vunpack.c.l.b16 %v4023
        %v4032 = vunpack.c.l.b16 %v4024
        %v4033 = vunpack.c.l.b16 %v4025
        %v4034 = vpack.c.b16 %v4031, %v4030
        %v4035 = vpack.c.b16 %v4033, %v4032
        %4038 = vst [vmem:[#allocation2 + $0x30] sm:$0xff] %v4034
        %4039 = vst [vmem:[#allocation2 + $0x38] sm:$0xff] %v4035
        %v4040 = vld [vmem:[#allocation2] sm:$0xff]
        %v4041 = vld [vmem:[#allocation2 + $0x8] sm:$0xff]
        %v4042 = vld [vmem:[#allocation2 + $0x10] sm:$0xff]
        %v4043 = vld [vmem:[#allocation2 + $0x18] sm:$0xff]
        %v4044 = vld [vmem:[#allocation2 + $0x20] sm:$0xff]
        %v4045 = vld [vmem:[#allocation2 + $0x28] sm:$0xff]
        %v4046 = vld [vmem:[#allocation2 + $0x30] sm:$0xff]
        %v4047 = vld [vmem:[#allocation2 + $0x38] sm:$0xff]
        %v4048 = vld [vmem:[#allocation8] sm:$0xff]
        %v4049 = vld [vmem:[#allocation8 + $0x8] sm:$0xff]
        %v4050 = vld [vmem:[#allocation8 + $0x10] sm:$0xff]
        %v4051 = vld [vmem:[#allocation8 + $0x18] sm:$0xff]
        %v4052 = vld [vmem:[#allocation8 + $0x20] sm:$0xff]
        %v4053 = vld [vmem:[#allocation8 + $0x28] sm:$0xff]
        %v4054 = vld [vmem:[#allocation8 + $0x30] sm:$0xff]
        %v4055 = vld [vmem:[#allocation8 + $0x38] sm:$0xff]
        %v4056 = vld [vmem:[#allocation8 + $0x40] sm:$0xff]
        %v4057 = vld [vmem:[#allocation8 + $0x48] sm:$0xff]
        %v4058 = vld [vmem:[#allocation8 + $0x50] sm:$0xff]
        %v4059 = vld [vmem:[#allocation8 + $0x58] sm:$0xff]
        %v4060 = vld [vmem:[#allocation8 + $0x60] sm:$0xff]
        %v4061 = vld [vmem:[#allocation8 + $0x68] sm:$0xff]
        %v4062 = vld [vmem:[#allocation8 + $0x70] sm:$0xff]
        %v4063 = vld [vmem:[#allocation8 + $0x78] sm:$0xff]
        %v4064 = vld [vmem:[#allocation8 + $0x80] sm:$0xff]
        %v4065 = vld [vmem:[#allocation8 + $0x88] sm:$0xff]
        %v4066 = vld [vmem:[#allocation8 + $0x90] sm:$0xff]
        %v4067 = vld [vmem:[#allocation8 + $0x98] sm:$0xff]
        %v4068 = vld [vmem:[#allocation8 + $0xa0] sm:$0xff]
        %v4069 = vld [vmem:[#allocation8 + $0xa8] sm:$0xff]
        %v4070 = vld [vmem:[#allocation8 + $0xb0] sm:$0xff]
        %v4071 = vld [vmem:[#allocation8 + $0xb8] sm:$0xff]
        %v4072 = vld [vmem:[#allocation8 + $0xc0] sm:$0xff]
        %v4073 = vld [vmem:[#allocation8 + $0xc8] sm:$0xff]
        %v4074 = vld [vmem:[#allocation8 + $0xd0] sm:$0xff]
        %v4075 = vld [vmem:[#allocation8 + $0xd8] sm:$0xff]
        %v4076 = vld [vmem:[#allocation8 + $0xe0] sm:$0xff]
        %v4077 = vld [vmem:[#allocation8 + $0xe8] sm:$0xff]
        %v4078 = vld [vmem:[#allocation8 + $0xf0] sm:$0xff]
        %v4079 = vld [vmem:[#allocation8 + $0xf8] sm:$0xff]
        %v4080 = vld [vmem:[#allocation8 + $0x100] sm:$0xff]
        %v4081 = vld [vmem:[#allocation8 + $0x108] sm:$0xff]
        %v4082 = vld [vmem:[#allocation8 + $0x110] sm:$0xff]
        %v4083 = vld [vmem:[#allocation8 + $0x118] sm:$0xff]
        %v4084 = vld [vmem:[#allocation8 + $0x120] sm:$0xff]
        %v4085 = vld [vmem:[#allocation8 + $0x128] sm:$0xff]
        %v4086 = vld [vmem:[#allocation8 + $0x130] sm:$0xff]
        %v4087 = vld [vmem:[#allocation8 + $0x138] sm:$0xff]
        %v4088 = vld [vmem:[#allocation8 + $0x140] sm:$0xff]
        %v4089 = vld [vmem:[#allocation8 + $0x148] sm:$0xff]
        %v4090 = vld [vmem:[#allocation8 + $0x150] sm:$0xff]
        %v4091 = vld [vmem:[#allocation8 + $0x158] sm:$0xff]
        %v4092 = vld [vmem:[#allocation8 + $0x160] sm:$0xff]
        %v4093 = vld [vmem:[#allocation8 + $0x168] sm:$0xff]
        %v4094 = vld [vmem:[#allocation8 + $0x170] sm:$0xff]
        %v4095 = vld [vmem:[#allocation8 + $0x178] sm:$0xff]
        %v4096 = vld [vmem:[#allocation8 + $0x180] sm:$0xff]
        %v4097 = vld [vmem:[#allocation8 + $0x188] sm:$0xff]
        %v4098 = vld [vmem:[#allocation8 + $0x190] sm:$0xff]
        %v4099 = vld [vmem:[#allocation8 + $0x198] sm:$0xff]
        %v4100 = vld [vmem:[#allocation8 + $0x1a0] sm:$0xff]
        %v4101 = vld [vmem:[#allocation8 + $0x1a8] sm:$0xff]
        %v4102 = vld [vmem:[#allocation8 + $0x1b0] sm:$0xff]
        %v4103 = vld [vmem:[#allocation8 + $0x1b8] sm:$0xff]
        %v4104 = vld [vmem:[#allocation8 + $0x1c0] sm:$0xff]
        %v4105 = vld [vmem:[#allocation8 + $0x1c8] sm:$0xff]
        %v4106 = vld [vmem:[#allocation8 + $0x1d0] sm:$0xff]
        %v4107 = vld [vmem:[#allocation8 + $0x1d8] sm:$0xff]
        %v4108 = vld [vmem:[#allocation8 + $0x1e0] sm:$0xff]
        %v4109 = vld [vmem:[#allocation8 + $0x1e8] sm:$0xff]
        %v4110 = vld [vmem:[#allocation8 + $0x1f0] sm:$0xff]
        %v4111 = vld [vmem:[#allocation8 + $0x1f8] sm:$0xff]
        %v4112 = vld [vmem:[#allocation8 + $0x200] sm:$0xff]
        %v4113 = vld [vmem:[#allocation8 + $0x208] sm:$0xff]
        %v4114 = vld [vmem:[#allocation8 + $0x210] sm:$0xff]
        %v4115 = vld [vmem:[#allocation8 + $0x218] sm:$0xff]
        %v4116 = vld [vmem:[#allocation8 + $0x220] sm:$0xff]
        %v4117 = vld [vmem:[#allocation8 + $0x228] sm:$0xff]
        %v4118 = vld [vmem:[#allocation8 + $0x230] sm:$0xff]
        %v4119 = vld [vmem:[#allocation8 + $0x238] sm:$0xff]
        %v4120 = vld [vmem:[#allocation8 + $0x240] sm:$0xff]
        %v4121 = vld [vmem:[#allocation8 + $0x248] sm:$0xff]
        %v4122 = vld [vmem:[#allocation8 + $0x250] sm:$0xff]
        %v4123 = vld [vmem:[#allocation8 + $0x258] sm:$0xff]
        %v4124 = vld [vmem:[#allocation8 + $0x260] sm:$0xff]
        %v4125 = vld [vmem:[#allocation8 + $0x268] sm:$0xff]
        %v4126 = vld [vmem:[#allocation8 + $0x270] sm:$0xff]
        %v4127 = vld [vmem:[#allocation8 + $0x278] sm:$0xff]
        %v4128 = vld [vmem:[#allocation8 + $0x280] sm:$0xff]
        %v4129 = vld [vmem:[#allocation8 + $0x288] sm:$0xff]
        %v4130 = vld [vmem:[#allocation8 + $0x290] sm:$0xff]
        %v4131 = vld [vmem:[#allocation8 + $0x298] sm:$0xff]
        %v4132 = vld [vmem:[#allocation8 + $0x2a0] sm:$0xff]
        %v4133 = vld [vmem:[#allocation8 + $0x2a8] sm:$0xff]
        %v4134 = vld [vmem:[#allocation8 + $0x2b0] sm:$0xff]
        %v4135 = vld [vmem:[#allocation8 + $0x2b8] sm:$0xff]
        %v4136 = vld [vmem:[#allocation8 + $0x2c0] sm:$0xff]
        %v4137 = vld [vmem:[#allocation8 + $0x2c8] sm:$0xff]
        %v4138 = vld [vmem:[#allocation8 + $0x2d0] sm:$0xff]
        %v4139 = vld [vmem:[#allocation8 + $0x2d8] sm:$0xff]
        %v4140 = vld [vmem:[#allocation8 + $0x2e0] sm:$0xff]
        %v4141 = vld [vmem:[#allocation8 + $0x2e8] sm:$0xff]
        %v4142 = vld [vmem:[#allocation8 + $0x2f0] sm:$0xff]
        %v4143 = vld [vmem:[#allocation8 + $0x2f8] sm:$0xff]
        %v4144 = vld [vmem:[#allocation8 + $0x300] sm:$0xff]
        %v4145 = vld [vmem:[#allocation8 + $0x308] sm:$0xff]
        %v4146 = vld [vmem:[#allocation8 + $0x310] sm:$0xff]
        %v4147 = vld [vmem:[#allocation8 + $0x318] sm:$0xff]
        %v4148 = vld [vmem:[#allocation8 + $0x320] sm:$0xff]
        %v4149 = vld [vmem:[#allocation8 + $0x328] sm:$0xff]
        %v4150 = vld [vmem:[#allocation8 + $0x330] sm:$0xff]
        %v4151 = vld [vmem:[#allocation8 + $0x338] sm:$0xff]
        %v4152 = vld [vmem:[#allocation8 + $0x340] sm:$0xff]
        %v4153 = vld [vmem:[#allocation8 + $0x348] sm:$0xff]
        %v4154 = vld [vmem:[#allocation8 + $0x350] sm:$0xff]
        %v4155 = vld [vmem:[#allocation8 + $0x358] sm:$0xff]
        %v4156 = vld [vmem:[#allocation8 + $0x360] sm:$0xff]
        %v4157 = vld [vmem:[#allocation8 + $0x368] sm:$0xff]
        %v4158 = vld [vmem:[#allocation8 + $0x370] sm:$0xff]
        %v4159 = vld [vmem:[#allocation8 + $0x378] sm:$0xff]
        %v4160 = vld [vmem:[#allocation8 + $0x380] sm:$0xff]
        %v4161 = vld [vmem:[#allocation8 + $0x388] sm:$0xff]
        %v4162 = vld [vmem:[#allocation8 + $0x390] sm:$0xff]
        %v4163 = vld [vmem:[#allocation8 + $0x398] sm:$0xff]
        %v4164 = vld [vmem:[#allocation8 + $0x3a0] sm:$0xff]
        %v4165 = vld [vmem:[#allocation8 + $0x3a8] sm:$0xff]
        %v4166 = vld [vmem:[#allocation8 + $0x3b0] sm:$0xff]
        %v4167 = vld [vmem:[#allocation8 + $0x3b8] sm:$0xff]
        %v4168 = vld [vmem:[#allocation8 + $0x3c0] sm:$0xff]
        %v4169 = vld [vmem:[#allocation8 + $0x3c8] sm:$0xff]
        %v4170 = vld [vmem:[#allocation8 + $0x3d0] sm:$0xff]
        %v4171 = vld [vmem:[#allocation8 + $0x3d8] sm:$0xff]
        %v4172 = vld [vmem:[#allocation8 + $0x3e0] sm:$0xff]
        %v4173 = vld [vmem:[#allocation8 + $0x3e8] sm:$0xff]
        %v4174 = vld [vmem:[#allocation8 + $0x3f0] sm:$0xff]
        %v4175 = vld [vmem:[#allocation8 + $0x3f8] sm:$0xff]
        %v4176 = vld [vmem:[#allocation8 + $0x400] sm:$0xff]
        %v4177 = vld [vmem:[#allocation8 + $0x408] sm:$0xff]
        %v4178 = vld [vmem:[#allocation8 + $0x410] sm:$0xff]
        %v4179 = vld [vmem:[#allocation8 + $0x418] sm:$0xff]
        %v4180 = vld [vmem:[#allocation8 + $0x420] sm:$0xff]
        %v4181 = vld [vmem:[#allocation8 + $0x428] sm:$0xff]
        %v4182 = vld [vmem:[#allocation8 + $0x430] sm:$0xff]
        %v4183 = vld [vmem:[#allocation8 + $0x438] sm:$0xff]
        %v4184 = vld [vmem:[#allocation8 + $0x440] sm:$0xff]
        %v4185 = vld [vmem:[#allocation8 + $0x448] sm:$0xff]
        %v4186 = vld [vmem:[#allocation8 + $0x450] sm:$0xff]
        %v4187 = vld [vmem:[#allocation8 + $0x458] sm:$0xff]
        %v4188 = vld [vmem:[#allocation8 + $0x460] sm:$0xff]
        %v4189 = vld [vmem:[#allocation8 + $0x468] sm:$0xff]
        %v4190 = vld [vmem:[#allocation8 + $0x470] sm:$0xff]
        %v4191 = vld [vmem:[#allocation8 + $0x478] sm:$0xff]
        %v4192 = vld [vmem:[#allocation8 + $0x480] sm:$0xff]
        %v4193 = vld [vmem:[#allocation8 + $0x488] sm:$0xff]
        %v4194 = vld [vmem:[#allocation8 + $0x490] sm:$0xff]
        %v4195 = vld [vmem:[#allocation8 + $0x498] sm:$0xff]
        %v4196 = vld [vmem:[#allocation8 + $0x4a0] sm:$0xff]
        %v4197 = vld [vmem:[#allocation8 + $0x4a8] sm:$0xff]
        %v4198 = vld [vmem:[#allocation8 + $0x4b0] sm:$0xff]
        %v4199 = vld [vmem:[#allocation8 + $0x4b8] sm:$0xff]
        %v4200 = vld [vmem:[#allocation8 + $0x4c0] sm:$0xff]
        %v4201 = vld [vmem:[#allocation8 + $0x4c8] sm:$0xff]
        %v4202 = vld [vmem:[#allocation8 + $0x4d0] sm:$0xff]
        %v4203 = vld [vmem:[#allocation8 + $0x4d8] sm:$0xff]
        %v4204 = vld [vmem:[#allocation8 + $0x4e0] sm:$0xff]
        %v4205 = vld [vmem:[#allocation8 + $0x4e8] sm:$0xff]
        %v4206 = vld [vmem:[#allocation8 + $0x4f0] sm:$0xff]
        %v4207 = vld [vmem:[#allocation8 + $0x4f8] sm:$0xff]
        %v4208 = vld [vmem:[#allocation8 + $0x500] sm:$0xff]
        %v4209 = vld [vmem:[#allocation8 + $0x508] sm:$0xff]
        %v4210 = vld [vmem:[#allocation8 + $0x510] sm:$0xff]
        %v4211 = vld [vmem:[#allocation8 + $0x518] sm:$0xff]
        %v4212 = vld [vmem:[#allocation8 + $0x520] sm:$0xff]
        %v4213 = vld [vmem:[#allocation8 + $0x528] sm:$0xff]
        %v4214 = vld [vmem:[#allocation8 + $0x530] sm:$0xff]
        %v4215 = vld [vmem:[#allocation8 + $0x538] sm:$0xff]
        %v4216 = vld [vmem:[#allocation8 + $0x540] sm:$0xff]
        %v4217 = vld [vmem:[#allocation8 + $0x548] sm:$0xff]
        %v4218 = vld [vmem:[#allocation8 + $0x550] sm:$0xff]
        %v4219 = vld [vmem:[#allocation8 + $0x558] sm:$0xff]
        %v4220 = vld [vmem:[#allocation8 + $0x560] sm:$0xff]
        %v4221 = vld [vmem:[#allocation8 + $0x568] sm:$0xff]
        %v4222 = vld [vmem:[#allocation8 + $0x570] sm:$0xff]
        %v4223 = vld [vmem:[#allocation8 + $0x578] sm:$0xff]
        %v4224 = vld [vmem:[#allocation8 + $0x580] sm:$0xff]
        %v4225 = vld [vmem:[#allocation8 + $0x588] sm:$0xff]
        %v4226 = vld [vmem:[#allocation8 + $0x590] sm:$0xff]
        %v4227 = vld [vmem:[#allocation8 + $0x598] sm:$0xff]
        %v4228 = vld [vmem:[#allocation8 + $0x5a0] sm:$0xff]
        %v4229 = vld [vmem:[#allocation8 + $0x5a8] sm:$0xff]
        %v4230 = vld [vmem:[#allocation8 + $0x5b0] sm:$0xff]
        %v4231 = vld [vmem:[#allocation8 + $0x5b8] sm:$0xff]
        %v4232 = vld [vmem:[#allocation8 + $0x5c0] sm:$0xff]
        %v4233 = vld [vmem:[#allocation8 + $0x5c8] sm:$0xff]
        %v4234 = vld [vmem:[#allocation8 + $0x5d0] sm:$0xff]
        %v4235 = vld [vmem:[#allocation8 + $0x5d8] sm:$0xff]
        %v4236 = vld [vmem:[#allocation8 + $0x5e0] sm:$0xff]
        %v4237 = vld [vmem:[#allocation8 + $0x5e8] sm:$0xff]
        %v4238 = vld [vmem:[#allocation8 + $0x5f0] sm:$0xff]
        %v4239 = vld [vmem:[#allocation8 + $0x5f8] sm:$0xff]
        %v4240 = vld [vmem:[#allocation8 + $0x600] sm:$0xff]
        %v4241 = vld [vmem:[#allocation8 + $0x608] sm:$0xff]
        %v4242 = vld [vmem:[#allocation8 + $0x610] sm:$0xff]
        %v4243 = vld [vmem:[#allocation8 + $0x618] sm:$0xff]
        %v4244 = vld [vmem:[#allocation8 + $0x620] sm:$0xff]
        %v4245 = vld [vmem:[#allocation8 + $0x628] sm:$0xff]
        %v4246 = vld [vmem:[#allocation8 + $0x630] sm:$0xff]
        %v4247 = vld [vmem:[#allocation8 + $0x638] sm:$0xff]
        %v4248 = vld [vmem:[#allocation8 + $0x640] sm:$0xff]
        %v4249 = vld [vmem:[#allocation8 + $0x648] sm:$0xff]
        %v4250 = vld [vmem:[#allocation8 + $0x650] sm:$0xff]
        %v4251 = vld [vmem:[#allocation8 + $0x658] sm:$0xff]
        %v4252 = vld [vmem:[#allocation8 + $0x660] sm:$0xff]
        %v4253 = vld [vmem:[#allocation8 + $0x668] sm:$0xff]
        %v4254 = vld [vmem:[#allocation8 + $0x670] sm:$0xff]
        %v4255 = vld [vmem:[#allocation8 + $0x678] sm:$0xff]
        %v4256 = vld [vmem:[#allocation8 + $0x680] sm:$0xff]
        %v4257 = vld [vmem:[#allocation8 + $0x688] sm:$0xff]
        %v4258 = vld [vmem:[#allocation8 + $0x690] sm:$0xff]
        %v4259 = vld [vmem:[#allocation8 + $0x698] sm:$0xff]
        %v4260 = vld [vmem:[#allocation8 + $0x6a0] sm:$0xff]
        %v4261 = vld [vmem:[#allocation8 + $0x6a8] sm:$0xff]
        %v4262 = vld [vmem:[#allocation8 + $0x6b0] sm:$0xff]
        %v4263 = vld [vmem:[#allocation8 + $0x6b8] sm:$0xff]
        %v4264 = vld [vmem:[#allocation8 + $0x6c0] sm:$0xff]
        %v4265 = vld [vmem:[#allocation8 + $0x6c8] sm:$0xff]
        %v4266 = vld [vmem:[#allocation8 + $0x6d0] sm:$0xff]
        %v4267 = vld [vmem:[#allocation8 + $0x6d8] sm:$0xff]
        %v4268 = vld [vmem:[#allocation8 + $0x6e0] sm:$0xff]
        %v4269 = vld [vmem:[#allocation8 + $0x6e8] sm:$0xff]
        %v4270 = vld [vmem:[#allocation8 + $0x6f0] sm:$0xff]
        %v4271 = vld [vmem:[#allocation8 + $0x6f8] sm:$0xff]
        %v4272 = vld [vmem:[#allocation8 + $0x700] sm:$0xff]
        %v4273 = vld [vmem:[#allocation8 + $0x708] sm:$0xff]
        %v4274 = vld [vmem:[#allocation8 + $0x710] sm:$0xff]
        %v4275 = vld [vmem:[#allocation8 + $0x718] sm:$0xff]
        %v4276 = vld [vmem:[#allocation8 + $0x720] sm:$0xff]
        %v4277 = vld [vmem:[#allocation8 + $0x728] sm:$0xff]
        %v4278 = vld [vmem:[#allocation8 + $0x730] sm:$0xff]
        %v4279 = vld [vmem:[#allocation8 + $0x738] sm:$0xff]
        %v4280 = vld [vmem:[#allocation8 + $0x740] sm:$0xff]
        %v4281 = vld [vmem:[#allocation8 + $0x748] sm:$0xff]
        %v4282 = vld [vmem:[#allocation8 + $0x750] sm:$0xff]
        %v4283 = vld [vmem:[#allocation8 + $0x758] sm:$0xff]
        %v4284 = vld [vmem:[#allocation8 + $0x760] sm:$0xff]
        %v4285 = vld [vmem:[#allocation8 + $0x768] sm:$0xff]
        %v4286 = vld [vmem:[#allocation8 + $0x770] sm:$0xff]
        %v4287 = vld [vmem:[#allocation8 + $0x778] sm:$0xff]
        %v4288 = vld [vmem:[#allocation8 + $0x780] sm:$0xff]
        %v4289 = vld [vmem:[#allocation8 + $0x788] sm:$0xff]
        %v4290 = vld [vmem:[#allocation8 + $0x790] sm:$0xff]
        %v4291 = vld [vmem:[#allocation8 + $0x798] sm:$0xff]
        %v4292 = vld [vmem:[#allocation8 + $0x7a0] sm:$0xff]
        %v4293 = vld [vmem:[#allocation8 + $0x7a8] sm:$0xff]
        %v4294 = vld [vmem:[#allocation8 + $0x7b0] sm:$0xff]
        %v4295 = vld [vmem:[#allocation8 + $0x7b8] sm:$0xff]
        %v4296 = vld [vmem:[#allocation8 + $0x7c0] sm:$0xff]
        %v4297 = vld [vmem:[#allocation8 + $0x7c8] sm:$0xff]
        %v4298 = vld [vmem:[#allocation8 + $0x7d0] sm:$0xff]
        %v4299 = vld [vmem:[#allocation8 + $0x7d8] sm:$0xff]
        %v4300 = vld [vmem:[#allocation8 + $0x7e0] sm:$0xff]
        %v4301 = vld [vmem:[#allocation8 + $0x7e8] sm:$0xff]
        %v4302 = vld [vmem:[#allocation8 + $0x7f0] sm:$0xff]
        %v4303 = vld [vmem:[#allocation8 + $0x7f8] sm:$0xff]
        %v4304 = vld [vmem:[#allocation8 + $0x800] sm:$0xff]
        %v4305 = vld [vmem:[#allocation8 + $0x808] sm:$0xff]
        %v4306 = vld [vmem:[#allocation8 + $0x810] sm:$0xff]
        %v4307 = vld [vmem:[#allocation8 + $0x818] sm:$0xff]
        %v4308 = vld [vmem:[#allocation8 + $0x820] sm:$0xff]
        %v4309 = vld [vmem:[#allocation8 + $0x828] sm:$0xff]
        %v4310 = vld [vmem:[#allocation8 + $0x830] sm:$0xff]
        %v4311 = vld [vmem:[#allocation8 + $0x838] sm:$0xff]
        %v4312 = vld [vmem:[#allocation8 + $0x840] sm:$0xff]
        %v4313 = vld [vmem:[#allocation8 + $0x848] sm:$0xff]
        %v4314 = vld [vmem:[#allocation8 + $0x850] sm:$0xff]
        %v4315 = vld [vmem:[#allocation8 + $0x858] sm:$0xff]
        %v4316 = vld [vmem:[#allocation8 + $0x860] sm:$0xff]
        %v4317 = vld [vmem:[#allocation8 + $0x868] sm:$0xff]
        %v4318 = vld [vmem:[#allocation8 + $0x870] sm:$0xff]
        %v4319 = vld [vmem:[#allocation8 + $0x878] sm:$0xff]
        %v4320 = vld [vmem:[#allocation8 + $0x880] sm:$0xff]
        %v4321 = vld [vmem:[#allocation8 + $0x888] sm:$0xff]
        %v4322 = vld [vmem:[#allocation8 + $0x890] sm:$0xff]
        %v4323 = vld [vmem:[#allocation8 + $0x898] sm:$0xff]
        %v4324 = vld [vmem:[#allocation8 + $0x8a0] sm:$0xff]
        %v4325 = vld [vmem:[#allocation8 + $0x8a8] sm:$0xff]
        %v4326 = vld [vmem:[#allocation8 + $0x8b0] sm:$0xff]
        %v4327 = vld [vmem:[#allocation8 + $0x8b8] sm:$0xff]
        %v4328 = vld [vmem:[#allocation8 + $0x8c0] sm:$0xff]
        %v4329 = vld [vmem:[#allocation8 + $0x8c8] sm:$0xff]
        %v4330 = vld [vmem:[#allocation8 + $0x8d0] sm:$0xff]
        %v4331 = vld [vmem:[#allocation8 + $0x8d8] sm:$0xff]
        %v4332 = vld [vmem:[#allocation8 + $0x8e0] sm:$0xff]
        %v4333 = vld [vmem:[#allocation8 + $0x8e8] sm:$0xff]
        %v4334 = vld [vmem:[#allocation8 + $0x8f0] sm:$0xff]
        %v4335 = vld [vmem:[#allocation8 + $0x8f8] sm:$0xff]
        %v4336 = vld [vmem:[#allocation8 + $0x900] sm:$0xff]
        %v4337 = vld [vmem:[#allocation8 + $0x908] sm:$0xff]
        %v4338 = vld [vmem:[#allocation8 + $0x910] sm:$0xff]
        %v4339 = vld [vmem:[#allocation8 + $0x918] sm:$0xff]
        %v4340 = vld [vmem:[#allocation8 + $0x920] sm:$0xff]
        %v4341 = vld [vmem:[#allocation8 + $0x928] sm:$0xff]
        %v4342 = vld [vmem:[#allocation8 + $0x930] sm:$0xff]
        %v4343 = vld [vmem:[#allocation8 + $0x938] sm:$0xff]
        %v4344 = vld [vmem:[#allocation8 + $0x940] sm:$0xff]
        %v4345 = vld [vmem:[#allocation8 + $0x948] sm:$0xff]
        %v4346 = vld [vmem:[#allocation8 + $0x950] sm:$0xff]
        %v4347 = vld [vmem:[#allocation8 + $0x958] sm:$0xff]
        %v4348 = vld [vmem:[#allocation8 + $0x960] sm:$0xff]
        %v4349 = vld [vmem:[#allocation8 + $0x968] sm:$0xff]
        %v4350 = vld [vmem:[#allocation8 + $0x970] sm:$0xff]
        %v4351 = vld [vmem:[#allocation8 + $0x978] sm:$0xff]
        %v4352 = vld [vmem:[#allocation8 + $0x980] sm:$0xff]
        %v4353 = vld [vmem:[#allocation8 + $0x988] sm:$0xff]
        %v4354 = vld [vmem:[#allocation8 + $0x990] sm:$0xff]
        %v4355 = vld [vmem:[#allocation8 + $0x998] sm:$0xff]
        %v4356 = vld [vmem:[#allocation8 + $0x9a0] sm:$0xff]
        %v4357 = vld [vmem:[#allocation8 + $0x9a8] sm:$0xff]
        %v4358 = vld [vmem:[#allocation8 + $0x9b0] sm:$0xff]
        %v4359 = vld [vmem:[#allocation8 + $0x9b8] sm:$0xff]
        %v4360 = vld [vmem:[#allocation8 + $0x9c0] sm:$0xff]
        %v4361 = vld [vmem:[#allocation8 + $0x9c8] sm:$0xff]
        %v4362 = vld [vmem:[#allocation8 + $0x9d0] sm:$0xff]
        %v4363 = vld [vmem:[#allocation8 + $0x9d8] sm:$0xff]
        %v4364 = vld [vmem:[#allocation8 + $0x9e0] sm:$0xff]
        %v4365 = vld [vmem:[#allocation8 + $0x9e8] sm:$0xff]
        %v4366 = vld [vmem:[#allocation8 + $0x9f0] sm:$0xff]
        %v4367 = vld [vmem:[#allocation8 + $0x9f8] sm:$0xff]
        %v4368 = vld [vmem:[#allocation8 + $0xa00] sm:$0xff]
        %v4369 = vld [vmem:[#allocation8 + $0xa08] sm:$0xff]
        %v4370 = vld [vmem:[#allocation8 + $0xa10] sm:$0xff]
        %v4371 = vld [vmem:[#allocation8 + $0xa18] sm:$0xff]
        %v4372 = vld [vmem:[#allocation8 + $0xa20] sm:$0xff]
        %v4373 = vld [vmem:[#allocation8 + $0xa28] sm:$0xff]
        %v4374 = vld [vmem:[#allocation8 + $0xa30] sm:$0xff]
        %v4375 = vld [vmem:[#allocation8 + $0xa38] sm:$0xff]
        %v4376 = vld [vmem:[#allocation8 + $0xa40] sm:$0xff]
        %v4377 = vld [vmem:[#allocation8 + $0xa48] sm:$0xff]
        %v4378 = vld [vmem:[#allocation8 + $0xa50] sm:$0xff]
        %v4379 = vld [vmem:[#allocation8 + $0xa58] sm:$0xff]
        %v4380 = vld [vmem:[#allocation8 + $0xa60] sm:$0xff]
        %v4381 = vld [vmem:[#allocation8 + $0xa68] sm:$0xff]
        %v4382 = vld [vmem:[#allocation8 + $0xa70] sm:$0xff]
        %v4383 = vld [vmem:[#allocation8 + $0xa78] sm:$0xff]
        %v4384 = vld [vmem:[#allocation8 + $0xa80] sm:$0xff]
        %v4385 = vld [vmem:[#allocation8 + $0xa88] sm:$0xff]
        %v4386 = vld [vmem:[#allocation8 + $0xa90] sm:$0xff]
        %v4387 = vld [vmem:[#allocation8 + $0xa98] sm:$0xff]
        %v4388 = vld [vmem:[#allocation8 + $0xaa0] sm:$0xff]
        %v4389 = vld [vmem:[#allocation8 + $0xaa8] sm:$0xff]
        %v4390 = vld [vmem:[#allocation8 + $0xab0] sm:$0xff]
        %v4391 = vld [vmem:[#allocation8 + $0xab8] sm:$0xff]
        %v4392 = vld [vmem:[#allocation8 + $0xac0] sm:$0xff]
        %v4393 = vld [vmem:[#allocation8 + $0xac8] sm:$0xff]
        %v4394 = vld [vmem:[#allocation8 + $0xad0] sm:$0xff]
        %v4395 = vld [vmem:[#allocation8 + $0xad8] sm:$0xff]
        %v4396 = vld [vmem:[#allocation8 + $0xae0] sm:$0xff]
        %v4397 = vld [vmem:[#allocation8 + $0xae8] sm:$0xff]
        %v4398 = vld [vmem:[#allocation8 + $0xaf0] sm:$0xff]
        %v4399 = vld [vmem:[#allocation8 + $0xaf8] sm:$0xff]
        %v4400 = vld [vmem:[#allocation8 + $0xb00] sm:$0xff]
        %v4401 = vld [vmem:[#allocation8 + $0xb08] sm:$0xff]
        %v4402 = vld [vmem:[#allocation8 + $0xb10] sm:$0xff]
        %v4403 = vld [vmem:[#allocation8 + $0xb18] sm:$0xff]
        %v4404 = vld [vmem:[#allocation8 + $0xb20] sm:$0xff]
        %v4405 = vld [vmem:[#allocation8 + $0xb28] sm:$0xff]
        %v4406 = vld [vmem:[#allocation8 + $0xb30] sm:$0xff]
        %v4407 = vld [vmem:[#allocation8 + $0xb38] sm:$0xff]
        %v4408 = vld [vmem:[#allocation8 + $0xb40] sm:$0xff]
        %v4409 = vld [vmem:[#allocation8 + $0xb48] sm:$0xff]
        %v4410 = vld [vmem:[#allocation8 + $0xb50] sm:$0xff]
        %v4411 = vld [vmem:[#allocation8 + $0xb58] sm:$0xff]
        %v4412 = vld [vmem:[#allocation8 + $0xb60] sm:$0xff]
        %v4413 = vld [vmem:[#allocation8 + $0xb68] sm:$0xff]
        %v4414 = vld [vmem:[#allocation8 + $0xb70] sm:$0xff]
        %v4415 = vld [vmem:[#allocation8 + $0xb78] sm:$0xff]
        %v4416 = vld [vmem:[#allocation8 + $0xb80] sm:$0xff]
        %v4417 = vld [vmem:[#allocation8 + $0xb88] sm:$0xff]
        %v4418 = vld [vmem:[#allocation8 + $0xb90] sm:$0xff]
        %v4419 = vld [vmem:[#allocation8 + $0xb98] sm:$0xff]
        %v4420 = vld [vmem:[#allocation8 + $0xba0] sm:$0xff]
        %v4421 = vld [vmem:[#allocation8 + $0xba8] sm:$0xff]
        %v4422 = vld [vmem:[#allocation8 + $0xbb0] sm:$0xff]
        %v4423 = vld [vmem:[#allocation8 + $0xbb8] sm:$0xff]
        %v4424 = vld [vmem:[#allocation8 + $0xbc0] sm:$0xff]
        %v4425 = vld [vmem:[#allocation8 + $0xbc8] sm:$0xff]
        %v4426 = vld [vmem:[#allocation8 + $0xbd0] sm:$0xff]
        %v4427 = vld [vmem:[#allocation8 + $0xbd8] sm:$0xff]
        %v4428 = vld [vmem:[#allocation8 + $0xbe0] sm:$0xff]
        %v4429 = vld [vmem:[#allocation8 + $0xbe8] sm:$0xff]
        %v4430 = vld [vmem:[#allocation8 + $0xbf0] sm:$0xff]
        %v4431 = vld [vmem:[#allocation8 + $0xbf8] sm:$0xff]
        %v4432 = vld [vmem:[#allocation8 + $0xc00] sm:$0xff]
        %v4433 = vld [vmem:[#allocation8 + $0xc08] sm:$0xff]
        %v4434 = vld [vmem:[#allocation8 + $0xc10] sm:$0xff]
        %v4435 = vld [vmem:[#allocation8 + $0xc18] sm:$0xff]
        %v4436 = vld [vmem:[#allocation8 + $0xc20] sm:$0xff]
        %v4437 = vld [vmem:[#allocation8 + $0xc28] sm:$0xff]
        %v4438 = vld [vmem:[#allocation8 + $0xc30] sm:$0xff]
        %v4439 = vld [vmem:[#allocation8 + $0xc38] sm:$0xff]
        %v4440 = vld [vmem:[#allocation8 + $0xc40] sm:$0xff]
        %v4441 = vld [vmem:[#allocation8 + $0xc48] sm:$0xff]
        %v4442 = vld [vmem:[#allocation8 + $0xc50] sm:$0xff]
        %v4443 = vld [vmem:[#allocation8 + $0xc58] sm:$0xff]
        %v4444 = vld [vmem:[#allocation8 + $0xc60] sm:$0xff]
        %v4445 = vld [vmem:[#allocation8 + $0xc68] sm:$0xff]
        %v4446 = vld [vmem:[#allocation8 + $0xc70] sm:$0xff]
        %v4447 = vld [vmem:[#allocation8 + $0xc78] sm:$0xff]
        %v4448 = vld [vmem:[#allocation8 + $0xc80] sm:$0xff]
        %v4449 = vld [vmem:[#allocation8 + $0xc88] sm:$0xff]
        %v4450 = vld [vmem:[#allocation8 + $0xc90] sm:$0xff]
        %v4451 = vld [vmem:[#allocation8 + $0xc98] sm:$0xff]
        %v4452 = vld [vmem:[#allocation8 + $0xca0] sm:$0xff]
        %v4453 = vld [vmem:[#allocation8 + $0xca8] sm:$0xff]
        %v4454 = vld [vmem:[#allocation8 + $0xcb0] sm:$0xff]
        %v4455 = vld [vmem:[#allocation8 + $0xcb8] sm:$0xff]
        %v4456 = vld [vmem:[#allocation8 + $0xcc0] sm:$0xff]
        %v4457 = vld [vmem:[#allocation8 + $0xcc8] sm:$0xff]
        %v4458 = vld [vmem:[#allocation8 + $0xcd0] sm:$0xff]
        %v4459 = vld [vmem:[#allocation8 + $0xcd8] sm:$0xff]
        %v4460 = vld [vmem:[#allocation8 + $0xce0] sm:$0xff]
        %v4461 = vld [vmem:[#allocation8 + $0xce8] sm:$0xff]
        %v4462 = vld [vmem:[#allocation8 + $0xcf0] sm:$0xff]
        %v4463 = vld [vmem:[#allocation8 + $0xcf8] sm:$0xff]
        %v4464 = vld [vmem:[#allocation8 + $0xd00] sm:$0xff]
        %v4465 = vld [vmem:[#allocation8 + $0xd08] sm:$0xff]
        %v4466 = vld [vmem:[#allocation8 + $0xd10] sm:$0xff]
        %v4467 = vld [vmem:[#allocation8 + $0xd18] sm:$0xff]
        %v4468 = vld [vmem:[#allocation8 + $0xd20] sm:$0xff]
        %v4469 = vld [vmem:[#allocation8 + $0xd28] sm:$0xff]
        %v4470 = vld [vmem:[#allocation8 + $0xd30] sm:$0xff]
        %v4471 = vld [vmem:[#allocation8 + $0xd38] sm:$0xff]
        %v4472 = vld [vmem:[#allocation8 + $0xd40] sm:$0xff]
        %v4473 = vld [vmem:[#allocation8 + $0xd48] sm:$0xff]
        %v4474 = vld [vmem:[#allocation8 + $0xd50] sm:$0xff]
        %v4475 = vld [vmem:[#allocation8 + $0xd58] sm:$0xff]
        %v4476 = vld [vmem:[#allocation8 + $0xd60] sm:$0xff]
        %v4477 = vld [vmem:[#allocation8 + $0xd68] sm:$0xff]
        %v4478 = vld [vmem:[#allocation8 + $0xd70] sm:$0xff]
        %v4479 = vld [vmem:[#allocation8 + $0xd78] sm:$0xff]
        %v4480 = vld [vmem:[#allocation8 + $0xd80] sm:$0xff]
        %v4481 = vld [vmem:[#allocation8 + $0xd88] sm:$0xff]
        %v4482 = vld [vmem:[#allocation8 + $0xd90] sm:$0xff]
        %v4483 = vld [vmem:[#allocation8 + $0xd98] sm:$0xff]
        %v4484 = vld [vmem:[#allocation8 + $0xda0] sm:$0xff]
        %v4485 = vld [vmem:[#allocation8 + $0xda8] sm:$0xff]
        %v4486 = vld [vmem:[#allocation8 + $0xdb0] sm:$0xff]
        %v4487 = vld [vmem:[#allocation8 + $0xdb8] sm:$0xff]
        %v4488 = vld [vmem:[#allocation8 + $0xdc0] sm:$0xff]
        %v4489 = vld [vmem:[#allocation8 + $0xdc8] sm:$0xff]
        %v4490 = vld [vmem:[#allocation8 + $0xdd0] sm:$0xff]
        %v4491 = vld [vmem:[#allocation8 + $0xdd8] sm:$0xff]
        %v4492 = vld [vmem:[#allocation8 + $0xde0] sm:$0xff]
        %v4493 = vld [vmem:[#allocation8 + $0xde8] sm:$0xff]
        %v4494 = vld [vmem:[#allocation8 + $0xdf0] sm:$0xff]
        %v4495 = vld [vmem:[#allocation8 + $0xdf8] sm:$0xff]
        %v4496 = vld [vmem:[#allocation8 + $0xe00] sm:$0xff]
        %v4497 = vld [vmem:[#allocation8 + $0xe08] sm:$0xff]
        %v4498 = vld [vmem:[#allocation8 + $0xe10] sm:$0xff]
        %v4499 = vld [vmem:[#allocation8 + $0xe18] sm:$0xff]
        %v4500 = vld [vmem:[#allocation8 + $0xe20] sm:$0xff]
        %v4501 = vld [vmem:[#allocation8 + $0xe28] sm:$0xff]
        %v4502 = vld [vmem:[#allocation8 + $0xe30] sm:$0xff]
        %v4503 = vld [vmem:[#allocation8 + $0xe38] sm:$0xff]
        %v4504 = vld [vmem:[#allocation8 + $0xe40] sm:$0xff]
        %v4505 = vld [vmem:[#allocation8 + $0xe48] sm:$0xff]
        %v4506 = vld [vmem:[#allocation8 + $0xe50] sm:$0xff]
        %v4507 = vld [vmem:[#allocation8 + $0xe58] sm:$0xff]
        %v4508 = vld [vmem:[#allocation8 + $0xe60] sm:$0xff]
        %v4509 = vld [vmem:[#allocation8 + $0xe68] sm:$0xff]
        %v4510 = vld [vmem:[#allocation8 + $0xe70] sm:$0xff]
        %v4511 = vld [vmem:[#allocation8 + $0xe78] sm:$0xff]
        %v4512 = vld [vmem:[#allocation8 + $0xe80] sm:$0xff]
        %v4513 = vld [vmem:[#allocation8 + $0xe88] sm:$0xff]
        %v4514 = vld [vmem:[#allocation8 + $0xe90] sm:$0xff]
        %v4515 = vld [vmem:[#allocation8 + $0xe98] sm:$0xff]
        %v4516 = vld [vmem:[#allocation8 + $0xea0] sm:$0xff]
        %v4517 = vld [vmem:[#allocation8 + $0xea8] sm:$0xff]
        %v4518 = vld [vmem:[#allocation8 + $0xeb0] sm:$0xff]
        %v4519 = vld [vmem:[#allocation8 + $0xeb8] sm:$0xff]
        %v4520 = vld [vmem:[#allocation8 + $0xec0] sm:$0xff]
        %v4521 = vld [vmem:[#allocation8 + $0xec8] sm:$0xff]
        %v4522 = vld [vmem:[#allocation8 + $0xed0] sm:$0xff]
        %v4523 = vld [vmem:[#allocation8 + $0xed8] sm:$0xff]
        %v4524 = vld [vmem:[#allocation8 + $0xee0] sm:$0xff]
        %v4525 = vld [vmem:[#allocation8 + $0xee8] sm:$0xff]
        %v4526 = vld [vmem:[#allocation8 + $0xef0] sm:$0xff]
        %v4527 = vld [vmem:[#allocation8 + $0xef8] sm:$0xff]
        %v4528 = vld [vmem:[#allocation8 + $0xf00] sm:$0xff]
        %v4529 = vld [vmem:[#allocation8 + $0xf08] sm:$0xff]
        %v4530 = vld [vmem:[#allocation8 + $0xf10] sm:$0xff]
        %v4531 = vld [vmem:[#allocation8 + $0xf18] sm:$0xff]
        %v4532 = vld [vmem:[#allocation8 + $0xf20] sm:$0xff]
        %v4533 = vld [vmem:[#allocation8 + $0xf28] sm:$0xff]
        %v4534 = vld [vmem:[#allocation8 + $0xf30] sm:$0xff]
        %v4535 = vld [vmem:[#allocation8 + $0xf38] sm:$0xff]
        %v4536 = vld [vmem:[#allocation8 + $0xf40] sm:$0xff]
        %v4537 = vld [vmem:[#allocation8 + $0xf48] sm:$0xff]
        %v4538 = vld [vmem:[#allocation8 + $0xf50] sm:$0xff]
        %v4539 = vld [vmem:[#allocation8 + $0xf58] sm:$0xff]
        %v4540 = vld [vmem:[#allocation8 + $0xf60] sm:$0xff]
        %v4541 = vld [vmem:[#allocation8 + $0xf68] sm:$0xff]
        %v4542 = vld [vmem:[#allocation8 + $0xf70] sm:$0xff]
        %v4543 = vld [vmem:[#allocation8 + $0xf78] sm:$0xff]
        %v4544 = vld [vmem:[#allocation8 + $0xf80] sm:$0xff]
        %v4545 = vld [vmem:[#allocation8 + $0xf88] sm:$0xff]
        %v4546 = vld [vmem:[#allocation8 + $0xf90] sm:$0xff]
        %v4547 = vld [vmem:[#allocation8 + $0xf98] sm:$0xff]
        %v4548 = vld [vmem:[#allocation8 + $0xfa0] sm:$0xff]
        %v4549 = vld [vmem:[#allocation8 + $0xfa8] sm:$0xff]
        %v4550 = vld [vmem:[#allocation8 + $0xfb0] sm:$0xff]
        %v4551 = vld [vmem:[#allocation8 + $0xfb8] sm:$0xff]
        %v4552 = vld [vmem:[#allocation8 + $0xfc0] sm:$0xff]
        %v4553 = vld [vmem:[#allocation8 + $0xfc8] sm:$0xff]
        %v4554 = vld [vmem:[#allocation8 + $0xfd0] sm:$0xff]
        %v4555 = vld [vmem:[#allocation8 + $0xfd8] sm:$0xff]
        %v4556 = vld [vmem:[#allocation8 + $0xfe0] sm:$0xff]
        %v4557 = vld [vmem:[#allocation8 + $0xfe8] sm:$0xff]
        %v4558 = vld [vmem:[#allocation8 + $0xff0] sm:$0xff]
        %v4559 = vld [vmem:[#allocation8 + $0xff8] sm:$0xff]
        %v4568 = vunpack.c.l.b16 %v4040
        %v4569 = vunpack.c.h.b16 %v4040
        %v4570 = vunpack.c.l.b16 %v4041
        %v4571 = vunpack.c.h.b16 %v4041
        %v4572 = vunpack.c.l.b16 %v4042
        %v4573 = vunpack.c.h.b16 %v4042
        %v4574 = vunpack.c.l.b16 %v4043
        %v4575 = vunpack.c.h.b16 %v4043
        %v4576 = vunpack.c.l.b16 %v4044
        %v4577 = vunpack.c.h.b16 %v4044
        %v4578 = vunpack.c.l.b16 %v4045
        %v4579 = vunpack.c.h.b16 %v4045
        %v4580 = vunpack.c.l.b16 %v4046
        %v4581 = vunpack.c.h.b16 %v4046
        %v4582 = vunpack.c.l.b16 %v4047
        %v4583 = vunpack.c.h.b16 %v4047
        %v4584 = vpack.c.b16 %v4568, %v4568
        %v4585 = vpack.c.b16 %v4569, %v4569
        %v4586 = vpack.c.b16 %v4570, %v4570
        %v4587 = vpack.c.b16 %v4571, %v4571
        %v4588 = vpack.c.b16 %v4572, %v4572
        %v4589 = vpack.c.b16 %v4573, %v4573
        %v4590 = vpack.c.b16 %v4574, %v4574
        %v4591 = vpack.c.b16 %v4575, %v4575
        %v4592 = vpack.c.b16 %v4576, %v4576
        %v4593 = vpack.c.b16 %v4577, %v4577
        %v4594 = vpack.c.b16 %v4578, %v4578
        %v4595 = vpack.c.b16 %v4579, %v4579
        %v4596 = vpack.c.b16 %v4580, %v4580
        %v4597 = vpack.c.b16 %v4581, %v4581
        %v4598 = vpack.c.b16 %v4582, %v4582
        %v4599 = vpack.c.b16 %v4583, %v4583
        %v5128 = vunpack.c.l.b16 %v4048
        %v5129 = vunpack.c.h.b16 %v4048
        %v5130 = vunpack.c.l.b16 %v4049
        %v5131 = vunpack.c.h.b16 %v4049
        %v5132 = vunpack.c.l.b16 %v4050
        %v5133 = vunpack.c.h.b16 %v4050
        %v5134 = vunpack.c.l.b16 %v4051
        %v5135 = vunpack.c.h.b16 %v4051
        %v5136 = vunpack.c.l.b16 %v4052
        %v5137 = vunpack.c.h.b16 %v4052
        %v5138 = vunpack.c.l.b16 %v4053
        %v5139 = vunpack.c.h.b16 %v4053
        %v5140 = vunpack.c.l.b16 %v4054
        %v5141 = vunpack.c.h.b16 %v4054
        %v5142 = vunpack.c.l.b16 %v4055
        %v5143 = vunpack.c.h.b16 %v4055
        %v5144 = vunpack.c.l.b16 %v4056
        %v5145 = vunpack.c.h.b16 %v4056
        %v5146 = vunpack.c.l.b16 %v4057
        %v5147 = vunpack.c.h.b16 %v4057
        %v5148 = vunpack.c.l.b16 %v4058
        %v5149 = vunpack.c.h.b16 %v4058
        %v5150 = vunpack.c.l.b16 %v4059
        %v5151 = vunpack.c.h.b16 %v4059
        %v5152 = vunpack.c.l.b16 %v4060
        %v5153 = vunpack.c.h.b16 %v4060
        %v5154 = vunpack.c.l.b16 %v4061
        %v5155 = vunpack.c.h.b16 %v4061
        %v5156 = vunpack.c.l.b16 %v4062
        %v5157 = vunpack.c.h.b16 %v4062
        %v5158 = vunpack.c.l.b16 %v4063
        %v5159 = vunpack.c.h.b16 %v4063
        %v5160 = vunpack.c.l.b16 %v4064
        %v5161 = vunpack.c.h.b16 %v4064
        %v5162 = vunpack.c.l.b16 %v4065
        %v5163 = vunpack.c.h.b16 %v4065
        %v5164 = vunpack.c.l.b16 %v4066
        %v5165 = vunpack.c.h.b16 %v4066
        %v5166 = vunpack.c.l.b16 %v4067
        %v5167 = vunpack.c.h.b16 %v4067
        %v5168 = vunpack.c.l.b16 %v4068
        %v5169 = vunpack.c.h.b16 %v4068
        %v5170 = vunpack.c.l.b16 %v4069
        %v5171 = vunpack.c.h.b16 %v4069
        %v5172 = vunpack.c.l.b16 %v4070
        %v5173 = vunpack.c.h.b16 %v4070
        %v5174 = vunpack.c.l.b16 %v4071
        %v5175 = vunpack.c.h.b16 %v4071
        %v5176 = vunpack.c.l.b16 %v4072
        %v5177 = vunpack.c.h.b16 %v4072
        %v5178 = vunpack.c.l.b16 %v4073
        %v5179 = vunpack.c.h.b16 %v4073
        %v5180 = vunpack.c.l.b16 %v4074
        %v5181 = vunpack.c.h.b16 %v4074
        %v5182 = vunpack.c.l.b16 %v4075
        %v5183 = vunpack.c.h.b16 %v4075
        %v5184 = vunpack.c.l.b16 %v4076
        %v5185 = vunpack.c.h.b16 %v4076
        %v5186 = vunpack.c.l.b16 %v4077
        %v5187 = vunpack.c.h.b16 %v4077
        %v5188 = vunpack.c.l.b16 %v4078
        %v5189 = vunpack.c.h.b16 %v4078
        %v5190 = vunpack.c.l.b16 %v4079
        %v5191 = vunpack.c.h.b16 %v4079
        %v5192 = vunpack.c.l.b16 %v4080
        %v5193 = vunpack.c.h.b16 %v4080
        %v5194 = vunpack.c.l.b16 %v4081
        %v5195 = vunpack.c.h.b16 %v4081
        %v5196 = vunpack.c.l.b16 %v4082
        %v5197 = vunpack.c.h.b16 %v4082
        %v5198 = vunpack.c.l.b16 %v4083
        %v5199 = vunpack.c.h.b16 %v4083
        %v5200 = vunpack.c.l.b16 %v4084
        %v5201 = vunpack.c.h.b16 %v4084
        %v5202 = vunpack.c.l.b16 %v4085
        %v5203 = vunpack.c.h.b16 %v4085
        %v5204 = vunpack.c.l.b16 %v4086
        %v5205 = vunpack.c.h.b16 %v4086
        %v5206 = vunpack.c.l.b16 %v4087
        %v5207 = vunpack.c.h.b16 %v4087
        %v5208 = vunpack.c.l.b16 %v4088
        %v5209 = vunpack.c.h.b16 %v4088
        %v5210 = vunpack.c.l.b16 %v4089
        %v5211 = vunpack.c.h.b16 %v4089
        %v5212 = vunpack.c.l.b16 %v4090
        %v5213 = vunpack.c.h.b16 %v4090
        %v5214 = vunpack.c.l.b16 %v4091
        %v5215 = vunpack.c.h.b16 %v4091
        %v5216 = vunpack.c.l.b16 %v4092
        %v5217 = vunpack.c.h.b16 %v4092
        %v5218 = vunpack.c.l.b16 %v4093
        %v5219 = vunpack.c.h.b16 %v4093
        %v5220 = vunpack.c.l.b16 %v4094
        %v5221 = vunpack.c.h.b16 %v4094
        %v5222 = vunpack.c.l.b16 %v4095
        %v5223 = vunpack.c.h.b16 %v4095
        %v5224 = vunpack.c.l.b16 %v4096
        %v5225 = vunpack.c.h.b16 %v4096
        %v5226 = vunpack.c.l.b16 %v4097
        %v5227 = vunpack.c.h.b16 %v4097
        %v5228 = vunpack.c.l.b16 %v4098
        %v5229 = vunpack.c.h.b16 %v4098
        %v5230 = vunpack.c.l.b16 %v4099
        %v5231 = vunpack.c.h.b16 %v4099
        %v5232 = vunpack.c.l.b16 %v4100
        %v5233 = vunpack.c.h.b16 %v4100
        %v5234 = vunpack.c.l.b16 %v4101
        %v5235 = vunpack.c.h.b16 %v4101
        %v5236 = vunpack.c.l.b16 %v4102
        %v5237 = vunpack.c.h.b16 %v4102
        %v5238 = vunpack.c.l.b16 %v4103
        %v5239 = vunpack.c.h.b16 %v4103
        %v5240 = vunpack.c.l.b16 %v4104
        %v5241 = vunpack.c.h.b16 %v4104
        %v5242 = vunpack.c.l.b16 %v4105
        %v5243 = vunpack.c.h.b16 %v4105
        %v5244 = vunpack.c.l.b16 %v4106
        %v5245 = vunpack.c.h.b16 %v4106
        %v5246 = vunpack.c.l.b16 %v4107
        %v5247 = vunpack.c.h.b16 %v4107
        %v5248 = vunpack.c.l.b16 %v4108
        %v5249 = vunpack.c.h.b16 %v4108
        %v5250 = vunpack.c.l.b16 %v4109
        %v5251 = vunpack.c.h.b16 %v4109
        %v5252 = vunpack.c.l.b16 %v4110
        %v5253 = vunpack.c.h.b16 %v4110
        %v5254 = vunpack.c.l.b16 %v4111
        %v5255 = vunpack.c.h.b16 %v4111
        %v5256 = vunpack.c.l.b16 %v4112
        %v5257 = vunpack.c.h.b16 %v4112
        %v5258 = vunpack.c.l.b16 %v4113
        %v5259 = vunpack.c.h.b16 %v4113
        %v5260 = vunpack.c.l.b16 %v4114
        %v5261 = vunpack.c.h.b16 %v4114
        %v5262 = vunpack.c.l.b16 %v4115
        %v5263 = vunpack.c.h.b16 %v4115
        %v5264 = vunpack.c.l.b16 %v4116
        %v5265 = vunpack.c.h.b16 %v4116
        %v5266 = vunpack.c.l.b16 %v4117
        %v5267 = vunpack.c.h.b16 %v4117
        %v5268 = vunpack.c.l.b16 %v4118
        %v5269 = vunpack.c.h.b16 %v4118
        %v5270 = vunpack.c.l.b16 %v4119
        %v5271 = vunpack.c.h.b16 %v4119
        %v5272 = vunpack.c.l.b16 %v4120
        %v5273 = vunpack.c.h.b16 %v4120
        %v5274 = vunpack.c.l.b16 %v4121
        %v5275 = vunpack.c.h.b16 %v4121
        %v5276 = vunpack.c.l.b16 %v4122
        %v5277 = vunpack.c.h.b16 %v4122
        %v5278 = vunpack.c.l.b16 %v4123
        %v5279 = vunpack.c.h.b16 %v4123
        %v5280 = vunpack.c.l.b16 %v4124
        %v5281 = vunpack.c.h.b16 %v4124
        %v5282 = vunpack.c.l.b16 %v4125
        %v5283 = vunpack.c.h.b16 %v4125
        %v5284 = vunpack.c.l.b16 %v4126
        %v5285 = vunpack.c.h.b16 %v4126
        %v5286 = vunpack.c.l.b16 %v4127
        %v5287 = vunpack.c.h.b16 %v4127
        %v5288 = vunpack.c.l.b16 %v4128
        %v5289 = vunpack.c.h.b16 %v4128
        %v5290 = vunpack.c.l.b16 %v4129
        %v5291 = vunpack.c.h.b16 %v4129
        %v5292 = vunpack.c.l.b16 %v4130
        %v5293 = vunpack.c.h.b16 %v4130
        %v5294 = vunpack.c.l.b16 %v4131
        %v5295 = vunpack.c.h.b16 %v4131
        %v5296 = vunpack.c.l.b16 %v4132
        %v5297 = vunpack.c.h.b16 %v4132
        %v5298 = vunpack.c.l.b16 %v4133
        %v5299 = vunpack.c.h.b16 %v4133
        %v5300 = vunpack.c.l.b16 %v4134
        %v5301 = vunpack.c.h.b16 %v4134
        %v5302 = vunpack.c.l.b16 %v4135
        %v5303 = vunpack.c.h.b16 %v4135
        %v5304 = vunpack.c.l.b16 %v4136
        %v5305 = vunpack.c.h.b16 %v4136
        %v5306 = vunpack.c.l.b16 %v4137
        %v5307 = vunpack.c.h.b16 %v4137
        %v5308 = vunpack.c.l.b16 %v4138
        %v5309 = vunpack.c.h.b16 %v4138
        %v5310 = vunpack.c.l.b16 %v4139
        %v5311 = vunpack.c.h.b16 %v4139
        %v5312 = vunpack.c.l.b16 %v4140
        %v5313 = vunpack.c.h.b16 %v4140
        %v5314 = vunpack.c.l.b16 %v4141
        %v5315 = vunpack.c.h.b16 %v4141
        %v5316 = vunpack.c.l.b16 %v4142
        %v5317 = vunpack.c.h.b16 %v4142
        %v5318 = vunpack.c.l.b16 %v4143
        %v5319 = vunpack.c.h.b16 %v4143
        %v5320 = vunpack.c.l.b16 %v4144
        %v5321 = vunpack.c.h.b16 %v4144
        %v5322 = vunpack.c.l.b16 %v4145
        %v5323 = vunpack.c.h.b16 %v4145
        %v5324 = vunpack.c.l.b16 %v4146
        %v5325 = vunpack.c.h.b16 %v4146
        %v5326 = vunpack.c.l.b16 %v4147
        %v5327 = vunpack.c.h.b16 %v4147
        %v5328 = vunpack.c.l.b16 %v4148
        %v5329 = vunpack.c.h.b16 %v4148
        %v5330 = vunpack.c.l.b16 %v4149
        %v5331 = vunpack.c.h.b16 %v4149
        %v5332 = vunpack.c.l.b16 %v4150
        %v5333 = vunpack.c.h.b16 %v4150
        %v5334 = vunpack.c.l.b16 %v4151
        %v5335 = vunpack.c.h.b16 %v4151
        %v5336 = vunpack.c.l.b16 %v4152
        %v5337 = vunpack.c.h.b16 %v4152
        %v5338 = vunpack.c.l.b16 %v4153
        %v5339 = vunpack.c.h.b16 %v4153
        %v5340 = vunpack.c.l.b16 %v4154
        %v5341 = vunpack.c.h.b16 %v4154
        %v5342 = vunpack.c.l.b16 %v4155
        %v5343 = vunpack.c.h.b16 %v4155
        %v5344 = vunpack.c.l.b16 %v4156
        %v5345 = vunpack.c.h.b16 %v4156
        %v5346 = vunpack.c.l.b16 %v4157
        %v5347 = vunpack.c.h.b16 %v4157
        %v5348 = vunpack.c.l.b16 %v4158
        %v5349 = vunpack.c.h.b16 %v4158
        %v5350 = vunpack.c.l.b16 %v4159
        %v5351 = vunpack.c.h.b16 %v4159
        %v5352 = vunpack.c.l.b16 %v4160
        %v5353 = vunpack.c.h.b16 %v4160
        %v5354 = vunpack.c.l.b16 %v4161
        %v5355 = vunpack.c.h.b16 %v4161
        %v5356 = vunpack.c.l.b16 %v4162
        %v5357 = vunpack.c.h.b16 %v4162
        %v5358 = vunpack.c.l.b16 %v4163
        %v5359 = vunpack.c.h.b16 %v4163
        %v5360 = vunpack.c.l.b16 %v4164
        %v5361 = vunpack.c.h.b16 %v4164
        %v5362 = vunpack.c.l.b16 %v4165
        %v5363 = vunpack.c.h.b16 %v4165
        %v5364 = vunpack.c.l.b16 %v4166
        %v5365 = vunpack.c.h.b16 %v4166
        %v5366 = vunpack.c.l.b16 %v4167
        %v5367 = vunpack.c.h.b16 %v4167
        %v5368 = vunpack.c.l.b16 %v4168
        %v5369 = vunpack.c.h.b16 %v4168
        %v5370 = vunpack.c.l.b16 %v4169
        %v5371 = vunpack.c.h.b16 %v4169
        %v5372 = vunpack.c.l.b16 %v4170
        %v5373 = vunpack.c.h.b16 %v4170
        %v5374 = vunpack.c.l.b16 %v4171
        %v5375 = vunpack.c.h.b16 %v4171
        %v5376 = vunpack.c.l.b16 %v4172
        %v5377 = vunpack.c.h.b16 %v4172
        %v5378 = vunpack.c.l.b16 %v4173
        %v5379 = vunpack.c.h.b16 %v4173
        %v5380 = vunpack.c.l.b16 %v4174
        %v5381 = vunpack.c.h.b16 %v4174
        %v5382 = vunpack.c.l.b16 %v4175
        %v5383 = vunpack.c.h.b16 %v4175
        %v5384 = vunpack.c.l.b16 %v4176
        %v5385 = vunpack.c.h.b16 %v4176
        %v5386 = vunpack.c.l.b16 %v4177
        %v5387 = vunpack.c.h.b16 %v4177
        %v5388 = vunpack.c.l.b16 %v4178
        %v5389 = vunpack.c.h.b16 %v4178
        %v5390 = vunpack.c.l.b16 %v4179
        %v5391 = vunpack.c.h.b16 %v4179
        %v5392 = vunpack.c.l.b16 %v4180
        %v5393 = vunpack.c.h.b16 %v4180
        %v5394 = vunpack.c.l.b16 %v4181
        %v5395 = vunpack.c.h.b16 %v4181
        %v5396 = vunpack.c.l.b16 %v4182
        %v5397 = vunpack.c.h.b16 %v4182
        %v5398 = vunpack.c.l.b16 %v4183
        %v5399 = vunpack.c.h.b16 %v4183
        %v5400 = vunpack.c.l.b16 %v4184
        %v5401 = vunpack.c.h.b16 %v4184
        %v5402 = vunpack.c.l.b16 %v4185
        %v5403 = vunpack.c.h.b16 %v4185
        %v5404 = vunpack.c.l.b16 %v4186
        %v5405 = vunpack.c.h.b16 %v4186
        %v5406 = vunpack.c.l.b16 %v4187
        %v5407 = vunpack.c.h.b16 %v4187
        %v5408 = vunpack.c.l.b16 %v4188
        %v5409 = vunpack.c.h.b16 %v4188
        %v5410 = vunpack.c.l.b16 %v4189
        %v5411 = vunpack.c.h.b16 %v4189
        %v5412 = vunpack.c.l.b16 %v4190
        %v5413 = vunpack.c.h.b16 %v4190
        %v5414 = vunpack.c.l.b16 %v4191
        %v5415 = vunpack.c.h.b16 %v4191
        %v5416 = vunpack.c.l.b16 %v4192
        %v5417 = vunpack.c.h.b16 %v4192
        %v5418 = vunpack.c.l.b16 %v4193
        %v5419 = vunpack.c.h.b16 %v4193
        %v5420 = vunpack.c.l.b16 %v4194
        %v5421 = vunpack.c.h.b16 %v4194
        %v5422 = vunpack.c.l.b16 %v4195
        %v5423 = vunpack.c.h.b16 %v4195
        %v5424 = vunpack.c.l.b16 %v4196
        %v5425 = vunpack.c.h.b16 %v4196
        %v5426 = vunpack.c.l.b16 %v4197
        %v5427 = vunpack.c.h.b16 %v4197
        %v5428 = vunpack.c.l.b16 %v4198
        %v5429 = vunpack.c.h.b16 %v4198
        %v5430 = vunpack.c.l.b16 %v4199
        %v5431 = vunpack.c.h.b16 %v4199
        %v5432 = vunpack.c.l.b16 %v4200
        %v5433 = vunpack.c.h.b16 %v4200
        %v5434 = vunpack.c.l.b16 %v4201
        %v5435 = vunpack.c.h.b16 %v4201
        %v5436 = vunpack.c.l.b16 %v4202
        %v5437 = vunpack.c.h.b16 %v4202
        %v5438 = vunpack.c.l.b16 %v4203
        %v5439 = vunpack.c.h.b16 %v4203
        %v5440 = vunpack.c.l.b16 %v4204
        %v5441 = vunpack.c.h.b16 %v4204
        %v5442 = vunpack.c.l.b16 %v4205
        %v5443 = vunpack.c.h.b16 %v4205
        %v5444 = vunpack.c.l.b16 %v4206
        %v5445 = vunpack.c.h.b16 %v4206
        %v5446 = vunpack.c.l.b16 %v4207
        %v5447 = vunpack.c.h.b16 %v4207
        %v5448 = vunpack.c.l.b16 %v4208
        %v5449 = vunpack.c.h.b16 %v4208
        %v5450 = vunpack.c.l.b16 %v4209
        %v5451 = vunpack.c.h.b16 %v4209
        %v5452 = vunpack.c.l.b16 %v4210
        %v5453 = vunpack.c.h.b16 %v4210
        %v5454 = vunpack.c.l.b16 %v4211
        %v5455 = vunpack.c.h.b16 %v4211
        %v5456 = vunpack.c.l.b16 %v4212
        %v5457 = vunpack.c.h.b16 %v4212
        %v5458 = vunpack.c.l.b16 %v4213
        %v5459 = vunpack.c.h.b16 %v4213
        %v5460 = vunpack.c.l.b16 %v4214
        %v5461 = vunpack.c.h.b16 %v4214
        %v5462 = vunpack.c.l.b16 %v4215
        %v5463 = vunpack.c.h.b16 %v4215
        %v5464 = vunpack.c.l.b16 %v4216
        %v5465 = vunpack.c.h.b16 %v4216
        %v5466 = vunpack.c.l.b16 %v4217
        %v5467 = vunpack.c.h.b16 %v4217
        %v5468 = vunpack.c.l.b16 %v4218
        %v5469 = vunpack.c.h.b16 %v4218
        %v5470 = vunpack.c.l.b16 %v4219
        %v5471 = vunpack.c.h.b16 %v4219
        %v5472 = vunpack.c.l.b16 %v4220
        %v5473 = vunpack.c.h.b16 %v4220
        %v5474 = vunpack.c.l.b16 %v4221
        %v5475 = vunpack.c.h.b16 %v4221
        %v5476 = vunpack.c.l.b16 %v4222
        %v5477 = vunpack.c.h.b16 %v4222
        %v5478 = vunpack.c.l.b16 %v4223
        %v5479 = vunpack.c.h.b16 %v4223
        %v5480 = vunpack.c.l.b16 %v4224
        %v5481 = vunpack.c.h.b16 %v4224
        %v5482 = vunpack.c.l.b16 %v4225
        %v5483 = vunpack.c.h.b16 %v4225
        %v5484 = vunpack.c.l.b16 %v4226
        %v5485 = vunpack.c.h.b16 %v4226
        %v5486 = vunpack.c.l.b16 %v4227
        %v5487 = vunpack.c.h.b16 %v4227
        %v5488 = vunpack.c.l.b16 %v4228
        %v5489 = vunpack.c.h.b16 %v4228
        %v5490 = vunpack.c.l.b16 %v4229
        %v5491 = vunpack.c.h.b16 %v4229
        %v5492 = vunpack.c.l.b16 %v4230
        %v5493 = vunpack.c.h.b16 %v4230
        %v5494 = vunpack.c.l.b16 %v4231
        %v5495 = vunpack.c.h.b16 %v4231
        %v5496 = vunpack.c.l.b16 %v4232
        %v5497 = vunpack.c.h.b16 %v4232
        %v5498 = vunpack.c.l.b16 %v4233
        %v5499 = vunpack.c.h.b16 %v4233
        %v5500 = vunpack.c.l.b16 %v4234
        %v5501 = vunpack.c.h.b16 %v4234
        %v5502 = vunpack.c.l.b16 %v4235
        %v5503 = vunpack.c.h.b16 %v4235
        %v5504 = vunpack.c.l.b16 %v4236
        %v5505 = vunpack.c.h.b16 %v4236
        %v5506 = vunpack.c.l.b16 %v4237
        %v5507 = vunpack.c.h.b16 %v4237
        %v5508 = vunpack.c.l.b16 %v4238
        %v5509 = vunpack.c.h.b16 %v4238
        %v5510 = vunpack.c.l.b16 %v4239
        %v5511 = vunpack.c.h.b16 %v4239
        %v5512 = vunpack.c.l.b16 %v4240
        %v5513 = vunpack.c.h.b16 %v4240
        %v5514 = vunpack.c.l.b16 %v4241
        %v5515 = vunpack.c.h.b16 %v4241
        %v5516 = vunpack.c.l.b16 %v4242
        %v5517 = vunpack.c.h.b16 %v4242
        %v5518 = vunpack.c.l.b16 %v4243
        %v5519 = vunpack.c.h.b16 %v4243
        %v5520 = vunpack.c.l.b16 %v4244
        %v5521 = vunpack.c.h.b16 %v4244
        %v5522 = vunpack.c.l.b16 %v4245
        %v5523 = vunpack.c.h.b16 %v4245
        %v5524 = vunpack.c.l.b16 %v4246
        %v5525 = vunpack.c.h.b16 %v4246
        %v5526 = vunpack.c.l.b16 %v4247
        %v5527 = vunpack.c.h.b16 %v4247
        %v5528 = vunpack.c.l.b16 %v4248
        %v5529 = vunpack.c.h.b16 %v4248
        %v5530 = vunpack.c.l.b16 %v4249
        %v5531 = vunpack.c.h.b16 %v4249
        %v5532 = vunpack.c.l.b16 %v4250
        %v5533 = vunpack.c.h.b16 %v4250
        %v5534 = vunpack.c.l.b16 %v4251
        %v5535 = vunpack.c.h.b16 %v4251
        %v5536 = vunpack.c.l.b16 %v4252
        %v5537 = vunpack.c.h.b16 %v4252
        %v5538 = vunpack.c.l.b16 %v4253
        %v5539 = vunpack.c.h.b16 %v4253
        %v5540 = vunpack.c.l.b16 %v4254
        %v5541 = vunpack.c.h.b16 %v4254
        %v5542 = vunpack.c.l.b16 %v4255
        %v5543 = vunpack.c.h.b16 %v4255
        %v5544 = vunpack.c.l.b16 %v4256
        %v5545 = vunpack.c.h.b16 %v4256
        %v5546 = vunpack.c.l.b16 %v4257
        %v5547 = vunpack.c.h.b16 %v4257
        %v5548 = vunpack.c.l.b16 %v4258
        %v5549 = vunpack.c.h.b16 %v4258
        %v5550 = vunpack.c.l.b16 %v4259
        %v5551 = vunpack.c.h.b16 %v4259
        %v5552 = vunpack.c.l.b16 %v4260
        %v5553 = vunpack.c.h.b16 %v4260
        %v5554 = vunpack.c.l.b16 %v4261
        %v5555 = vunpack.c.h.b16 %v4261
        %v5556 = vunpack.c.l.b16 %v4262
        %v5557 = vunpack.c.h.b16 %v4262
        %v5558 = vunpack.c.l.b16 %v4263
        %v5559 = vunpack.c.h.b16 %v4263
        %v5560 = vunpack.c.l.b16 %v4264
        %v5561 = vunpack.c.h.b16 %v4264
        %v5562 = vunpack.c.l.b16 %v4265
        %v5563 = vunpack.c.h.b16 %v4265
        %v5564 = vunpack.c.l.b16 %v4266
        %v5565 = vunpack.c.h.b16 %v4266
        %v5566 = vunpack.c.l.b16 %v4267
        %v5567 = vunpack.c.h.b16 %v4267
        %v5568 = vunpack.c.l.b16 %v4268
        %v5569 = vunpack.c.h.b16 %v4268
        %v5570 = vunpack.c.l.b16 %v4269
        %v5571 = vunpack.c.h.b16 %v4269
        %v5572 = vunpack.c.l.b16 %v4270
        %v5573 = vunpack.c.h.b16 %v4270
        %v5574 = vunpack.c.l.b16 %v4271
        %v5575 = vunpack.c.h.b16 %v4271
        %v5576 = vunpack.c.l.b16 %v4272
        %v5577 = vunpack.c.h.b16 %v4272
        %v5578 = vunpack.c.l.b16 %v4273
        %v5579 = vunpack.c.h.b16 %v4273
        %v5580 = vunpack.c.l.b16 %v4274
        %v5581 = vunpack.c.h.b16 %v4274
        %v5582 = vunpack.c.l.b16 %v4275
        %v5583 = vunpack.c.h.b16 %v4275
        %v5584 = vunpack.c.l.b16 %v4276
        %v5585 = vunpack.c.h.b16 %v4276
        %v5586 = vunpack.c.l.b16 %v4277
        %v5587 = vunpack.c.h.b16 %v4277
        %v5588 = vunpack.c.l.b16 %v4278
        %v5589 = vunpack.c.h.b16 %v4278
        %v5590 = vunpack.c.l.b16 %v4279
        %v5591 = vunpack.c.h.b16 %v4279
        %v5592 = vunpack.c.l.b16 %v4280
        %v5593 = vunpack.c.h.b16 %v4280
        %v5594 = vunpack.c.l.b16 %v4281
        %v5595 = vunpack.c.h.b16 %v4281
        %v5596 = vunpack.c.l.b16 %v4282
        %v5597 = vunpack.c.h.b16 %v4282
        %v5598 = vunpack.c.l.b16 %v4283
        %v5599 = vunpack.c.h.b16 %v4283
        %v5600 = vunpack.c.l.b16 %v4284
        %v5601 = vunpack.c.h.b16 %v4284
        %v5602 = vunpack.c.l.b16 %v4285
        %v5603 = vunpack.c.h.b16 %v4285
        %v5604 = vunpack.c.l.b16 %v4286
        %v5605 = vunpack.c.h.b16 %v4286
        %v5606 = vunpack.c.l.b16 %v4287
        %v5607 = vunpack.c.h.b16 %v4287
        %v5608 = vunpack.c.l.b16 %v4288
        %v5609 = vunpack.c.h.b16 %v4288
        %v5610 = vunpack.c.l.b16 %v4289
        %v5611 = vunpack.c.h.b16 %v4289
        %v5612 = vunpack.c.l.b16 %v4290
        %v5613 = vunpack.c.h.b16 %v4290
        %v5614 = vunpack.c.l.b16 %v4291
        %v5615 = vunpack.c.h.b16 %v4291
        %v5616 = vunpack.c.l.b16 %v4292
        %v5617 = vunpack.c.h.b16 %v4292
        %v5618 = vunpack.c.l.b16 %v4293
        %v5619 = vunpack.c.h.b16 %v4293
        %v5620 = vunpack.c.l.b16 %v4294
        %v5621 = vunpack.c.h.b16 %v4294
        %v5622 = vunpack.c.l.b16 %v4295
        %v5623 = vunpack.c.h.b16 %v4295
        %v5624 = vunpack.c.l.b16 %v4296
        %v5625 = vunpack.c.h.b16 %v4296
        %v5626 = vunpack.c.l.b16 %v4297
        %v5627 = vunpack.c.h.b16 %v4297
        %v5628 = vunpack.c.l.b16 %v4298
        %v5629 = vunpack.c.h.b16 %v4298
        %v5630 = vunpack.c.l.b16 %v4299
        %v5631 = vunpack.c.h.b16 %v4299
        %v5632 = vunpack.c.l.b16 %v4300
        %v5633 = vunpack.c.h.b16 %v4300
        %v5634 = vunpack.c.l.b16 %v4301
        %v5635 = vunpack.c.h.b16 %v4301
        %v5636 = vunpack.c.l.b16 %v4302
        %v5637 = vunpack.c.h.b16 %v4302
        %v5638 = vunpack.c.l.b16 %v4303
        %v5639 = vunpack.c.h.b16 %v4303
        %v5640 = vunpack.c.l.b16 %v4304
        %v5641 = vunpack.c.h.b16 %v4304
        %v5642 = vunpack.c.l.b16 %v4305
        %v5643 = vunpack.c.h.b16 %v4305
        %v5644 = vunpack.c.l.b16 %v4306
        %v5645 = vunpack.c.h.b16 %v4306
        %v5646 = vunpack.c.l.b16 %v4307
        %v5647 = vunpack.c.h.b16 %v4307
        %v5648 = vunpack.c.l.b16 %v4308
        %v5649 = vunpack.c.h.b16 %v4308
        %v5650 = vunpack.c.l.b16 %v4309
        %v5651 = vunpack.c.h.b16 %v4309
        %v5652 = vunpack.c.l.b16 %v4310
        %v5653 = vunpack.c.h.b16 %v4310
        %v5654 = vunpack.c.l.b16 %v4311
        %v5655 = vunpack.c.h.b16 %v4311
        %v5656 = vunpack.c.l.b16 %v4312
        %v5657 = vunpack.c.h.b16 %v4312
        %v5658 = vunpack.c.l.b16 %v4313
        %v5659 = vunpack.c.h.b16 %v4313
        %v5660 = vunpack.c.l.b16 %v4314
        %v5661 = vunpack.c.h.b16 %v4314
        %v5662 = vunpack.c.l.b16 %v4315
        %v5663 = vunpack.c.h.b16 %v4315
        %v5664 = vunpack.c.l.b16 %v4316
        %v5665 = vunpack.c.h.b16 %v4316
        %v5666 = vunpack.c.l.b16 %v4317
        %v5667 = vunpack.c.h.b16 %v4317
        %v5668 = vunpack.c.l.b16 %v4318
        %v5669 = vunpack.c.h.b16 %v4318
        %v5670 = vunpack.c.l.b16 %v4319
        %v5671 = vunpack.c.h.b16 %v4319
        %v5672 = vunpack.c.l.b16 %v4320
        %v5673 = vunpack.c.h.b16 %v4320
        %v5674 = vunpack.c.l.b16 %v4321
        %v5675 = vunpack.c.h.b16 %v4321
        %v5676 = vunpack.c.l.b16 %v4322
        %v5677 = vunpack.c.h.b16 %v4322
        %v5678 = vunpack.c.l.b16 %v4323
        %v5679 = vunpack.c.h.b16 %v4323
        %v5680 = vunpack.c.l.b16 %v4324
        %v5681 = vunpack.c.h.b16 %v4324
        %v5682 = vunpack.c.l.b16 %v4325
        %v5683 = vunpack.c.h.b16 %v4325
        %v5684 = vunpack.c.l.b16 %v4326
        %v5685 = vunpack.c.h.b16 %v4326
        %v5686 = vunpack.c.l.b16 %v4327
        %v5687 = vunpack.c.h.b16 %v4327
        %v5688 = vunpack.c.l.b16 %v4328
        %v5689 = vunpack.c.h.b16 %v4328
        %v5690 = vunpack.c.l.b16 %v4329
        %v5691 = vunpack.c.h.b16 %v4329
        %v5692 = vunpack.c.l.b16 %v4330
        %v5693 = vunpack.c.h.b16 %v4330
        %v5694 = vunpack.c.l.b16 %v4331
        %v5695 = vunpack.c.h.b16 %v4331
        %v5696 = vunpack.c.l.b16 %v4332
        %v5697 = vunpack.c.h.b16 %v4332
        %v5698 = vunpack.c.l.b16 %v4333
        %v5699 = vunpack.c.h.b16 %v4333
        %v5700 = vunpack.c.l.b16 %v4334
        %v5701 = vunpack.c.h.b16 %v4334
        %v5702 = vunpack.c.l.b16 %v4335
        %v5703 = vunpack.c.h.b16 %v4335
        %v5704 = vunpack.c.l.b16 %v4336
        %v5705 = vunpack.c.h.b16 %v4336
        %v5706 = vunpack.c.l.b16 %v4337
        %v5707 = vunpack.c.h.b16 %v4337
        %v5708 = vunpack.c.l.b16 %v4338
        %v5709 = vunpack.c.h.b16 %v4338
        %v5710 = vunpack.c.l.b16 %v4339
        %v5711 = vunpack.c.h.b16 %v4339
        %v5712 = vunpack.c.l.b16 %v4340
        %v5713 = vunpack.c.h.b16 %v4340
        %v5714 = vunpack.c.l.b16 %v4341
        %v5715 = vunpack.c.h.b16 %v4341
        %v5716 = vunpack.c.l.b16 %v4342
        %v5717 = vunpack.c.h.b16 %v4342
        %v5718 = vunpack.c.l.b16 %v4343
        %v5719 = vunpack.c.h.b16 %v4343
        %v5720 = vunpack.c.l.b16 %v4344
        %v5721 = vunpack.c.h.b16 %v4344
        %v5722 = vunpack.c.l.b16 %v4345
        %v5723 = vunpack.c.h.b16 %v4345
        %v5724 = vunpack.c.l.b16 %v4346
        %v5725 = vunpack.c.h.b16 %v4346
        %v5726 = vunpack.c.l.b16 %v4347
        %v5727 = vunpack.c.h.b16 %v4347
        %v5728 = vunpack.c.l.b16 %v4348
        %v5729 = vunpack.c.h.b16 %v4348
        %v5730 = vunpack.c.l.b16 %v4349
        %v5731 = vunpack.c.h.b16 %v4349
        %v5732 = vunpack.c.l.b16 %v4350
        %v5733 = vunpack.c.h.b16 %v4350
        %v5734 = vunpack.c.l.b16 %v4351
        %v5735 = vunpack.c.h.b16 %v4351
        %v5736 = vunpack.c.l.b16 %v4352
        %v5737 = vunpack.c.h.b16 %v4352
        %v5738 = vunpack.c.l.b16 %v4353
        %v5739 = vunpack.c.h.b16 %v4353
        %v5740 = vunpack.c.l.b16 %v4354
        %v5741 = vunpack.c.h.b16 %v4354
        %v5742 = vunpack.c.l.b16 %v4355
        %v5743 = vunpack.c.h.b16 %v4355
        %v5744 = vunpack.c.l.b16 %v4356
        %v5745 = vunpack.c.h.b16 %v4356
        %v5746 = vunpack.c.l.b16 %v4357
        %v5747 = vunpack.c.h.b16 %v4357
        %v5748 = vunpack.c.l.b16 %v4358
        %v5749 = vunpack.c.h.b16 %v4358
        %v5750 = vunpack.c.l.b16 %v4359
        %v5751 = vunpack.c.h.b16 %v4359
        %v5752 = vunpack.c.l.b16 %v4360
        %v5753 = vunpack.c.h.b16 %v4360
        %v5754 = vunpack.c.l.b16 %v4361
        %v5755 = vunpack.c.h.b16 %v4361
        %v5756 = vunpack.c.l.b16 %v4362
        %v5757 = vunpack.c.h.b16 %v4362
        %v5758 = vunpack.c.l.b16 %v4363
        %v5759 = vunpack.c.h.b16 %v4363
        %v5760 = vunpack.c.l.b16 %v4364
        %v5761 = vunpack.c.h.b16 %v4364
        %v5762 = vunpack.c.l.b16 %v4365
        %v5763 = vunpack.c.h.b16 %v4365
        %v5764 = vunpack.c.l.b16 %v4366
        %v5765 = vunpack.c.h.b16 %v4366
        %v5766 = vunpack.c.l.b16 %v4367
        %v5767 = vunpack.c.h.b16 %v4367
        %v5768 = vunpack.c.l.b16 %v4368
        %v5769 = vunpack.c.h.b16 %v4368
        %v5770 = vunpack.c.l.b16 %v4369
        %v5771 = vunpack.c.h.b16 %v4369
        %v5772 = vunpack.c.l.b16 %v4370
        %v5773 = vunpack.c.h.b16 %v4370
        %v5774 = vunpack.c.l.b16 %v4371
        %v5775 = vunpack.c.h.b16 %v4371
        %v5776 = vunpack.c.l.b16 %v4372
        %v5777 = vunpack.c.h.b16 %v4372
        %v5778 = vunpack.c.l.b16 %v4373
        %v5779 = vunpack.c.h.b16 %v4373
        %v5780 = vunpack.c.l.b16 %v4374
        %v5781 = vunpack.c.h.b16 %v4374
        %v5782 = vunpack.c.l.b16 %v4375
        %v5783 = vunpack.c.h.b16 %v4375
        %v5784 = vunpack.c.l.b16 %v4376
        %v5785 = vunpack.c.h.b16 %v4376
        %v5786 = vunpack.c.l.b16 %v4377
        %v5787 = vunpack.c.h.b16 %v4377
        %v5788 = vunpack.c.l.b16 %v4378
        %v5789 = vunpack.c.h.b16 %v4378
        %v5790 = vunpack.c.l.b16 %v4379
        %v5791 = vunpack.c.h.b16 %v4379
        %v5792 = vunpack.c.l.b16 %v4380
        %v5793 = vunpack.c.h.b16 %v4380
        %v5794 = vunpack.c.l.b16 %v4381
        %v5795 = vunpack.c.h.b16 %v4381
        %v5796 = vunpack.c.l.b16 %v4382
        %v5797 = vunpack.c.h.b16 %v4382
        %v5798 = vunpack.c.l.b16 %v4383
        %v5799 = vunpack.c.h.b16 %v4383
        %v5800 = vunpack.c.l.b16 %v4384
        %v5801 = vunpack.c.h.b16 %v4384
        %v5802 = vunpack.c.l.b16 %v4385
        %v5803 = vunpack.c.h.b16 %v4385
        %v5804 = vunpack.c.l.b16 %v4386
        %v5805 = vunpack.c.h.b16 %v4386
        %v5806 = vunpack.c.l.b16 %v4387
        %v5807 = vunpack.c.h.b16 %v4387
        %v5808 = vunpack.c.l.b16 %v4388
        %v5809 = vunpack.c.h.b16 %v4388
        %v5810 = vunpack.c.l.b16 %v4389
        %v5811 = vunpack.c.h.b16 %v4389
        %v5812 = vunpack.c.l.b16 %v4390
        %v5813 = vunpack.c.h.b16 %v4390
        %v5814 = vunpack.c.l.b16 %v4391
        %v5815 = vunpack.c.h.b16 %v4391
        %v5816 = vunpack.c.l.b16 %v4392
        %v5817 = vunpack.c.h.b16 %v4392
        %v5818 = vunpack.c.l.b16 %v4393
        %v5819 = vunpack.c.h.b16 %v4393
        %v5820 = vunpack.c.l.b16 %v4394
        %v5821 = vunpack.c.h.b16 %v4394
        %v5822 = vunpack.c.l.b16 %v4395
        %v5823 = vunpack.c.h.b16 %v4395
        %v5824 = vunpack.c.l.b16 %v4396
        %v5825 = vunpack.c.h.b16 %v4396
        %v5826 = vunpack.c.l.b16 %v4397
        %v5827 = vunpack.c.h.b16 %v4397
        %v5828 = vunpack.c.l.b16 %v4398
        %v5829 = vunpack.c.h.b16 %v4398
        %v5830 = vunpack.c.l.b16 %v4399
        %v5831 = vunpack.c.h.b16 %v4399
        %v5832 = vunpack.c.l.b16 %v4400
        %v5833 = vunpack.c.h.b16 %v4400
        %v5834 = vunpack.c.l.b16 %v4401
        %v5835 = vunpack.c.h.b16 %v4401
        %v5836 = vunpack.c.l.b16 %v4402
        %v5837 = vunpack.c.h.b16 %v4402
        %v5838 = vunpack.c.l.b16 %v4403
        %v5839 = vunpack.c.h.b16 %v4403
        %v5840 = vunpack.c.l.b16 %v4404
        %v5841 = vunpack.c.h.b16 %v4404
        %v5842 = vunpack.c.l.b16 %v4405
        %v5843 = vunpack.c.h.b16 %v4405
        %v5844 = vunpack.c.l.b16 %v4406
        %v5845 = vunpack.c.h.b16 %v4406
        %v5846 = vunpack.c.l.b16 %v4407
        %v5847 = vunpack.c.h.b16 %v4407
        %v5848 = vunpack.c.l.b16 %v4408
        %v5849 = vunpack.c.h.b16 %v4408
        %v5850 = vunpack.c.l.b16 %v4409
        %v5851 = vunpack.c.h.b16 %v4409
        %v5852 = vunpack.c.l.b16 %v4410
        %v5853 = vunpack.c.h.b16 %v4410
        %v5854 = vunpack.c.l.b16 %v4411
        %v5855 = vunpack.c.h.b16 %v4411
        %v5856 = vunpack.c.l.b16 %v4412
        %v5857 = vunpack.c.h.b16 %v4412
        %v5858 = vunpack.c.l.b16 %v4413
        %v5859 = vunpack.c.h.b16 %v4413
        %v5860 = vunpack.c.l.b16 %v4414
        %v5861 = vunpack.c.h.b16 %v4414
        %v5862 = vunpack.c.l.b16 %v4415
        %v5863 = vunpack.c.h.b16 %v4415
        %v5864 = vunpack.c.l.b16 %v4416
        %v5865 = vunpack.c.h.b16 %v4416
        %v5866 = vunpack.c.l.b16 %v4417
        %v5867 = vunpack.c.h.b16 %v4417
        %v5868 = vunpack.c.l.b16 %v4418
        %v5869 = vunpack.c.h.b16 %v4418
        %v5870 = vunpack.c.l.b16 %v4419
        %v5871 = vunpack.c.h.b16 %v4419
        %v5872 = vunpack.c.l.b16 %v4420
        %v5873 = vunpack.c.h.b16 %v4420
        %v5874 = vunpack.c.l.b16 %v4421
        %v5875 = vunpack.c.h.b16 %v4421
        %v5876 = vunpack.c.l.b16 %v4422
        %v5877 = vunpack.c.h.b16 %v4422
        %v5878 = vunpack.c.l.b16 %v4423
        %v5879 = vunpack.c.h.b16 %v4423
        %v5880 = vunpack.c.l.b16 %v4424
        %v5881 = vunpack.c.h.b16 %v4424
        %v5882 = vunpack.c.l.b16 %v4425
        %v5883 = vunpack.c.h.b16 %v4425
        %v5884 = vunpack.c.l.b16 %v4426
        %v5885 = vunpack.c.h.b16 %v4426
        %v5886 = vunpack.c.l.b16 %v4427
        %v5887 = vunpack.c.h.b16 %v4427
        %v5888 = vunpack.c.l.b16 %v4428
        %v5889 = vunpack.c.h.b16 %v4428
        %v5890 = vunpack.c.l.b16 %v4429
        %v5891 = vunpack.c.h.b16 %v4429
        %v5892 = vunpack.c.l.b16 %v4430
        %v5893 = vunpack.c.h.b16 %v4430
        %v5894 = vunpack.c.l.b16 %v4431
        %v5895 = vunpack.c.h.b16 %v4431
        %v5896 = vunpack.c.l.b16 %v4432
        %v5897 = vunpack.c.h.b16 %v4432
        %v5898 = vunpack.c.l.b16 %v4433
        %v5899 = vunpack.c.h.b16 %v4433
        %v5900 = vunpack.c.l.b16 %v4434
        %v5901 = vunpack.c.h.b16 %v4434
        %v5902 = vunpack.c.l.b16 %v4435
        %v5903 = vunpack.c.h.b16 %v4435
        %v5904 = vunpack.c.l.b16 %v4436
        %v5905 = vunpack.c.h.b16 %v4436
        %v5906 = vunpack.c.l.b16 %v4437
        %v5907 = vunpack.c.h.b16 %v4437
        %v5908 = vunpack.c.l.b16 %v4438
        %v5909 = vunpack.c.h.b16 %v4438
        %v5910 = vunpack.c.l.b16 %v4439
        %v5911 = vunpack.c.h.b16 %v4439
        %v5912 = vunpack.c.l.b16 %v4440
        %v5913 = vunpack.c.h.b16 %v4440
        %v5914 = vunpack.c.l.b16 %v4441
        %v5915 = vunpack.c.h.b16 %v4441
        %v5916 = vunpack.c.l.b16 %v4442
        %v5917 = vunpack.c.h.b16 %v4442
        %v5918 = vunpack.c.l.b16 %v4443
        %v5919 = vunpack.c.h.b16 %v4443
        %v5920 = vunpack.c.l.b16 %v4444
        %v5921 = vunpack.c.h.b16 %v4444
        %v5922 = vunpack.c.l.b16 %v4445
        %v5923 = vunpack.c.h.b16 %v4445
        %v5924 = vunpack.c.l.b16 %v4446
        %v5925 = vunpack.c.h.b16 %v4446
        %v5926 = vunpack.c.l.b16 %v4447
        %v5927 = vunpack.c.h.b16 %v4447
        %v5928 = vunpack.c.l.b16 %v4448
        %v5929 = vunpack.c.h.b16 %v4448
        %v5930 = vunpack.c.l.b16 %v4449
        %v5931 = vunpack.c.h.b16 %v4449
        %v5932 = vunpack.c.l.b16 %v4450
        %v5933 = vunpack.c.h.b16 %v4450
        %v5934 = vunpack.c.l.b16 %v4451
        %v5935 = vunpack.c.h.b16 %v4451
        %v5936 = vunpack.c.l.b16 %v4452
        %v5937 = vunpack.c.h.b16 %v4452
        %v5938 = vunpack.c.l.b16 %v4453
        %v5939 = vunpack.c.h.b16 %v4453
        %v5940 = vunpack.c.l.b16 %v4454
        %v5941 = vunpack.c.h.b16 %v4454
        %v5942 = vunpack.c.l.b16 %v4455
        %v5943 = vunpack.c.h.b16 %v4455
        %v5944 = vunpack.c.l.b16 %v4456
        %v5945 = vunpack.c.h.b16 %v4456
        %v5946 = vunpack.c.l.b16 %v4457
        %v5947 = vunpack.c.h.b16 %v4457
        %v5948 = vunpack.c.l.b16 %v4458
        %v5949 = vunpack.c.h.b16 %v4458
        %v5950 = vunpack.c.l.b16 %v4459
        %v5951 = vunpack.c.h.b16 %v4459
        %v5952 = vunpack.c.l.b16 %v4460
        %v5953 = vunpack.c.h.b16 %v4460
        %v5954 = vunpack.c.l.b16 %v4461
        %v5955 = vunpack.c.h.b16 %v4461
        %v5956 = vunpack.c.l.b16 %v4462
        %v5957 = vunpack.c.h.b16 %v4462
        %v5958 = vunpack.c.l.b16 %v4463
        %v5959 = vunpack.c.h.b16 %v4463
        %v5960 = vunpack.c.l.b16 %v4464
        %v5961 = vunpack.c.h.b16 %v4464
        %v5962 = vunpack.c.l.b16 %v4465
        %v5963 = vunpack.c.h.b16 %v4465
        %v5964 = vunpack.c.l.b16 %v4466
        %v5965 = vunpack.c.h.b16 %v4466
        %v5966 = vunpack.c.l.b16 %v4467
        %v5967 = vunpack.c.h.b16 %v4467
        %v5968 = vunpack.c.l.b16 %v4468
        %v5969 = vunpack.c.h.b16 %v4468
        %v5970 = vunpack.c.l.b16 %v4469
        %v5971 = vunpack.c.h.b16 %v4469
        %v5972 = vunpack.c.l.b16 %v4470
        %v5973 = vunpack.c.h.b16 %v4470
        %v5974 = vunpack.c.l.b16 %v4471
        %v5975 = vunpack.c.h.b16 %v4471
        %v5976 = vunpack.c.l.b16 %v4472
        %v5977 = vunpack.c.h.b16 %v4472
        %v5978 = vunpack.c.l.b16 %v4473
        %v5979 = vunpack.c.h.b16 %v4473
        %v5980 = vunpack.c.l.b16 %v4474
        %v5981 = vunpack.c.h.b16 %v4474
        %v5982 = vunpack.c.l.b16 %v4475
        %v5983 = vunpack.c.h.b16 %v4475
        %v5984 = vunpack.c.l.b16 %v4476
        %v5985 = vunpack.c.h.b16 %v4476
        %v5986 = vunpack.c.l.b16 %v4477
        %v5987 = vunpack.c.h.b16 %v4477
        %v5988 = vunpack.c.l.b16 %v4478
        %v5989 = vunpack.c.h.b16 %v4478
        %v5990 = vunpack.c.l.b16 %v4479
        %v5991 = vunpack.c.h.b16 %v4479
        %v5992 = vunpack.c.l.b16 %v4480
        %v5993 = vunpack.c.h.b16 %v4480
        %v5994 = vunpack.c.l.b16 %v4481
        %v5995 = vunpack.c.h.b16 %v4481
        %v5996 = vunpack.c.l.b16 %v4482
        %v5997 = vunpack.c.h.b16 %v4482
        %v5998 = vunpack.c.l.b16 %v4483
        %v5999 = vunpack.c.h.b16 %v4483
        %v6000 = vunpack.c.l.b16 %v4484
        %v6001 = vunpack.c.h.b16 %v4484
        %v6002 = vunpack.c.l.b16 %v4485
        %v6003 = vunpack.c.h.b16 %v4485
        %v6004 = vunpack.c.l.b16 %v4486
        %v6005 = vunpack.c.h.b16 %v4486
        %v6006 = vunpack.c.l.b16 %v4487
        %v6007 = vunpack.c.h.b16 %v4487
        %v6008 = vunpack.c.l.b16 %v4488
        %v6009 = vunpack.c.h.b16 %v4488
        %v6010 = vunpack.c.l.b16 %v4489
        %v6011 = vunpack.c.h.b16 %v4489
        %v6012 = vunpack.c.l.b16 %v4490
        %v6013 = vunpack.c.h.b16 %v4490
        %v6014 = vunpack.c.l.b16 %v4491
        %v6015 = vunpack.c.h.b16 %v4491
        %v6016 = vunpack.c.l.b16 %v4492
        %v6017 = vunpack.c.h.b16 %v4492
        %v6018 = vunpack.c.l.b16 %v4493
        %v6019 = vunpack.c.h.b16 %v4493
        %v6020 = vunpack.c.l.b16 %v4494
        %v6021 = vunpack.c.h.b16 %v4494
        %v6022 = vunpack.c.l.b16 %v4495
        %v6023 = vunpack.c.h.b16 %v4495
        %v6024 = vunpack.c.l.b16 %v4496
        %v6025 = vunpack.c.h.b16 %v4496
        %v6026 = vunpack.c.l.b16 %v4497
        %v6027 = vunpack.c.h.b16 %v4497
        %v6028 = vunpack.c.l.b16 %v4498
        %v6029 = vunpack.c.h.b16 %v4498
        %v6030 = vunpack.c.l.b16 %v4499
        %v6031 = vunpack.c.h.b16 %v4499
        %v6032 = vunpack.c.l.b16 %v4500
        %v6033 = vunpack.c.h.b16 %v4500
        %v6034 = vunpack.c.l.b16 %v4501
        %v6035 = vunpack.c.h.b16 %v4501
        %v6036 = vunpack.c.l.b16 %v4502
        %v6037 = vunpack.c.h.b16 %v4502
        %v6038 = vunpack.c.l.b16 %v4503
        %v6039 = vunpack.c.h.b16 %v4503
        %v6040 = vunpack.c.l.b16 %v4504
        %v6041 = vunpack.c.h.b16 %v4504
        %v6042 = vunpack.c.l.b16 %v4505
        %v6043 = vunpack.c.h.b16 %v4505
        %v6044 = vunpack.c.l.b16 %v4506
        %v6045 = vunpack.c.h.b16 %v4506
        %v6046 = vunpack.c.l.b16 %v4507
        %v6047 = vunpack.c.h.b16 %v4507
        %v6048 = vunpack.c.l.b16 %v4508
        %v6049 = vunpack.c.h.b16 %v4508
        %v6050 = vunpack.c.l.b16 %v4509
        %v6051 = vunpack.c.h.b16 %v4509
        %v6052 = vunpack.c.l.b16 %v4510
        %v6053 = vunpack.c.h.b16 %v4510
        %v6054 = vunpack.c.l.b16 %v4511
        %v6055 = vunpack.c.h.b16 %v4511
        %v6056 = vunpack.c.l.b16 %v4512
        %v6057 = vunpack.c.h.b16 %v4512
        %v6058 = vunpack.c.l.b16 %v4513
        %v6059 = vunpack.c.h.b16 %v4513
        %v6060 = vunpack.c.l.b16 %v4514
        %v6061 = vunpack.c.h.b16 %v4514
        %v6062 = vunpack.c.l.b16 %v4515
        %v6063 = vunpack.c.h.b16 %v4515
        %v6064 = vunpack.c.l.b16 %v4516
        %v6065 = vunpack.c.h.b16 %v4516
        %v6066 = vunpack.c.l.b16 %v4517
        %v6067 = vunpack.c.h.b16 %v4517
        %v6068 = vunpack.c.l.b16 %v4518
        %v6069 = vunpack.c.h.b16 %v4518
        %v6070 = vunpack.c.l.b16 %v4519
        %v6071 = vunpack.c.h.b16 %v4519
        %v6072 = vunpack.c.l.b16 %v4520
        %v6073 = vunpack.c.h.b16 %v4520
        %v6074 = vunpack.c.l.b16 %v4521
        %v6075 = vunpack.c.h.b16 %v4521
        %v6076 = vunpack.c.l.b16 %v4522
        %v6077 = vunpack.c.h.b16 %v4522
        %v6078 = vunpack.c.l.b16 %v4523
        %v6079 = vunpack.c.h.b16 %v4523
        %v6080 = vunpack.c.l.b16 %v4524
        %v6081 = vunpack.c.h.b16 %v4524
        %v6082 = vunpack.c.l.b16 %v4525
        %v6083 = vunpack.c.h.b16 %v4525
        %v6084 = vunpack.c.l.b16 %v4526
        %v6085 = vunpack.c.h.b16 %v4526
        %v6086 = vunpack.c.l.b16 %v4527
        %v6087 = vunpack.c.h.b16 %v4527
        %v6088 = vunpack.c.l.b16 %v4528
        %v6089 = vunpack.c.h.b16 %v4528
        %v6090 = vunpack.c.l.b16 %v4529
        %v6091 = vunpack.c.h.b16 %v4529
        %v6092 = vunpack.c.l.b16 %v4530
        %v6093 = vunpack.c.h.b16 %v4530
        %v6094 = vunpack.c.l.b16 %v4531
        %v6095 = vunpack.c.h.b16 %v4531
        %v6096 = vunpack.c.l.b16 %v4532
        %v6097 = vunpack.c.h.b16 %v4532
        %v6098 = vunpack.c.l.b16 %v4533
        %v6099 = vunpack.c.h.b16 %v4533
        %v6100 = vunpack.c.l.b16 %v4534
        %v6101 = vunpack.c.h.b16 %v4534
        %v6102 = vunpack.c.l.b16 %v4535
        %v6103 = vunpack.c.h.b16 %v4535
        %v6104 = vunpack.c.l.b16 %v4536
        %v6105 = vunpack.c.h.b16 %v4536
        %v6106 = vunpack.c.l.b16 %v4537
        %v6107 = vunpack.c.h.b16 %v4537
        %v6108 = vunpack.c.l.b16 %v4538
        %v6109 = vunpack.c.h.b16 %v4538
        %v6110 = vunpack.c.l.b16 %v4539
        %v6111 = vunpack.c.h.b16 %v4539
        %v6112 = vunpack.c.l.b16 %v4540
        %v6113 = vunpack.c.h.b16 %v4540
        %v6114 = vunpack.c.l.b16 %v4541
        %v6115 = vunpack.c.h.b16 %v4541
        %v6116 = vunpack.c.l.b16 %v4542
        %v6117 = vunpack.c.h.b16 %v4542
        %v6118 = vunpack.c.l.b16 %v4543
        %v6119 = vunpack.c.h.b16 %v4543
        %v6120 = vunpack.c.l.b16 %v4544
        %v6121 = vunpack.c.h.b16 %v4544
        %v6122 = vunpack.c.l.b16 %v4545
        %v6123 = vunpack.c.h.b16 %v4545
        %v6124 = vunpack.c.l.b16 %v4546
        %v6125 = vunpack.c.h.b16 %v4546
        %v6126 = vunpack.c.l.b16 %v4547
        %v6127 = vunpack.c.h.b16 %v4547
        %v6128 = vunpack.c.l.b16 %v4548
        %v6129 = vunpack.c.h.b16 %v4548
        %v6130 = vunpack.c.l.b16 %v4549
        %v6131 = vunpack.c.h.b16 %v4549
        %v6132 = vunpack.c.l.b16 %v4550
        %v6133 = vunpack.c.h.b16 %v4550
        %v6134 = vunpack.c.l.b16 %v4551
        %v6135 = vunpack.c.h.b16 %v4551
        %v6136 = vunpack.c.l.b16 %v4552
        %v6137 = vunpack.c.h.b16 %v4552
        %v6138 = vunpack.c.l.b16 %v4553
        %v6139 = vunpack.c.h.b16 %v4553
        %v6140 = vunpack.c.l.b16 %v4554
        %v6141 = vunpack.c.h.b16 %v4554
        %v6142 = vunpack.c.l.b16 %v4555
        %v6143 = vunpack.c.h.b16 %v4555
        %v6144 = vunpack.c.l.b16 %v4556
        %v6145 = vunpack.c.h.b16 %v4556
        %v6146 = vunpack.c.l.b16 %v4557
        %v6147 = vunpack.c.h.b16 %v4557
        %v6148 = vunpack.c.l.b16 %v4558
        %v6149 = vunpack.c.h.b16 %v4558
        %v6150 = vunpack.c.l.b16 %v4559
        %v6151 = vunpack.c.h.b16 %v4559
        %v6152 = vpack.c.b16 %v5132, %v5128
        %v6153 = vpack.c.b16 %v5133, %v5129
        %v6154 = vpack.c.b16 %v5134, %v5130
        %v6155 = vpack.c.b16 %v5135, %v5131
        %v6156 = vpack.c.b16 %v5140, %v5136
        %v6157 = vpack.c.b16 %v5141, %v5137
        %v6158 = vpack.c.b16 %v5142, %v5138
        %v6159 = vpack.c.b16 %v5143, %v5139
        %v6160 = vpack.c.b16 %v5148, %v5144
        %v6161 = vpack.c.b16 %v5149, %v5145
        %v6162 = vpack.c.b16 %v5150, %v5146
        %v6163 = vpack.c.b16 %v5151, %v5147
        %v6164 = vpack.c.b16 %v5156, %v5152
        %v6165 = vpack.c.b16 %v5157, %v5153
        %v6166 = vpack.c.b16 %v5158, %v5154
        %v6167 = vpack.c.b16 %v5159, %v5155
        %v6168 = vpack.c.b16 %v5164, %v5160
        %v6169 = vpack.c.b16 %v5165, %v5161
        %v6170 = vpack.c.b16 %v5166, %v5162
        %v6171 = vpack.c.b16 %v5167, %v5163
        %v6172 = vpack.c.b16 %v5172, %v5168
        %v6173 = vpack.c.b16 %v5173, %v5169
        %v6174 = vpack.c.b16 %v5174, %v5170
        %v6175 = vpack.c.b16 %v5175, %v5171
        %v6176 = vpack.c.b16 %v5180, %v5176
        %v6177 = vpack.c.b16 %v5181, %v5177
        %v6178 = vpack.c.b16 %v5182, %v5178
        %v6179 = vpack.c.b16 %v5183, %v5179
        %v6180 = vpack.c.b16 %v5188, %v5184
        %v6181 = vpack.c.b16 %v5189, %v5185
        %v6182 = vpack.c.b16 %v5190, %v5186
        %v6183 = vpack.c.b16 %v5191, %v5187
        %v6184 = vpack.c.b16 %v5196, %v5192
        %v6185 = vpack.c.b16 %v5197, %v5193
        %v6186 = vpack.c.b16 %v5198, %v5194
        %v6187 = vpack.c.b16 %v5199, %v5195
        %v6188 = vpack.c.b16 %v5204, %v5200
        %v6189 = vpack.c.b16 %v5205, %v5201
        %v6190 = vpack.c.b16 %v5206, %v5202
        %v6191 = vpack.c.b16 %v5207, %v5203
        %v6192 = vpack.c.b16 %v5212, %v5208
        %v6193 = vpack.c.b16 %v5213, %v5209
        %v6194 = vpack.c.b16 %v5214, %v5210
        %v6195 = vpack.c.b16 %v5215, %v5211
        %v6196 = vpack.c.b16 %v5220, %v5216
        %v6197 = vpack.c.b16 %v5221, %v5217
        %v6198 = vpack.c.b16 %v5222, %v5218
        %v6199 = vpack.c.b16 %v5223, %v5219
        %v6200 = vpack.c.b16 %v5228, %v5224
        %v6201 = vpack.c.b16 %v5229, %v5225
        %v6202 = vpack.c.b16 %v5230, %v5226
        %v6203 = vpack.c.b16 %v5231, %v5227
        %v6204 = vpack.c.b16 %v5236, %v5232
        %v6205 = vpack.c.b16 %v5237, %v5233
        %v6206 = vpack.c.b16 %v5238, %v5234
        %v6207 = vpack.c.b16 %v5239, %v5235
        %v6208 = vpack.c.b16 %v5244, %v5240
        %v6209 = vpack.c.b16 %v5245, %v5241
        %v6210 = vpack.c.b16 %v5246, %v5242
        %v6211 = vpack.c.b16 %v5247, %v5243
        %v6212 = vpack.c.b16 %v5252, %v5248
        %v6213 = vpack.c.b16 %v5253, %v5249
        %v6214 = vpack.c.b16 %v5254, %v5250
        %v6215 = vpack.c.b16 %v5255, %v5251
        %v6216 = vpack.c.b16 %v5260, %v5256
        %v6217 = vpack.c.b16 %v5261, %v5257
        %v6218 = vpack.c.b16 %v5262, %v5258
        %v6219 = vpack.c.b16 %v5263, %v5259
        %v6220 = vpack.c.b16 %v5268, %v5264
        %v6221 = vpack.c.b16 %v5269, %v5265
        %v6222 = vpack.c.b16 %v5270, %v5266
        %v6223 = vpack.c.b16 %v5271, %v5267
        %v6224 = vpack.c.b16 %v5276, %v5272
        %v6225 = vpack.c.b16 %v5277, %v5273
        %v6226 = vpack.c.b16 %v5278, %v5274
        %v6227 = vpack.c.b16 %v5279, %v5275
        %v6228 = vpack.c.b16 %v5284, %v5280
        %v6229 = vpack.c.b16 %v5285, %v5281
        %v6230 = vpack.c.b16 %v5286, %v5282
        %v6231 = vpack.c.b16 %v5287, %v5283
        %v6232 = vpack.c.b16 %v5292, %v5288
        %v6233 = vpack.c.b16 %v5293, %v5289
        %v6234 = vpack.c.b16 %v5294, %v5290
        %v6235 = vpack.c.b16 %v5295, %v5291
        %v6236 = vpack.c.b16 %v5300, %v5296
        %v6237 = vpack.c.b16 %v5301, %v5297
        %v6238 = vpack.c.b16 %v5302, %v5298
        %v6239 = vpack.c.b16 %v5303, %v5299
        %v6240 = vpack.c.b16 %v5308, %v5304
        %v6241 = vpack.c.b16 %v5309, %v5305
        %v6242 = vpack.c.b16 %v5310, %v5306
        %v6243 = vpack.c.b16 %v5311, %v5307
        %v6244 = vpack.c.b16 %v5316, %v5312
        %v6245 = vpack.c.b16 %v5317, %v5313
        %v6246 = vpack.c.b16 %v5318, %v5314
        %v6247 = vpack.c.b16 %v5319, %v5315
        %v6248 = vpack.c.b16 %v5324, %v5320
        %v6249 = vpack.c.b16 %v5325, %v5321
        %v6250 = vpack.c.b16 %v5326, %v5322
        %v6251 = vpack.c.b16 %v5327, %v5323
        %v6252 = vpack.c.b16 %v5332, %v5328
        %v6253 = vpack.c.b16 %v5333, %v5329
        %v6254 = vpack.c.b16 %v5334, %v5330
        %v6255 = vpack.c.b16 %v5335, %v5331
        %v6256 = vpack.c.b16 %v5340, %v5336
        %v6257 = vpack.c.b16 %v5341, %v5337
        %v6258 = vpack.c.b16 %v5342, %v5338
        %v6259 = vpack.c.b16 %v5343, %v5339
        %v6260 = vpack.c.b16 %v5348, %v5344
        %v6261 = vpack.c.b16 %v5349, %v5345
        %v6262 = vpack.c.b16 %v5350, %v5346
        %v6263 = vpack.c.b16 %v5351, %v5347
        %v6264 = vpack.c.b16 %v5356, %v5352
        %v6265 = vpack.c.b16 %v5357, %v5353
        %v6266 = vpack.c.b16 %v5358, %v5354
        %v6267 = vpack.c.b16 %v5359, %v5355
        %v6268 = vpack.c.b16 %v5364, %v5360
        %v6269 = vpack.c.b16 %v5365, %v5361
        %v6270 = vpack.c.b16 %v5366, %v5362
        %v6271 = vpack.c.b16 %v5367, %v5363
        %v6272 = vpack.c.b16 %v5372, %v5368
        %v6273 = vpack.c.b16 %v5373, %v5369
        %v6274 = vpack.c.b16 %v5374, %v5370
        %v6275 = vpack.c.b16 %v5375, %v5371
        %v6276 = vpack.c.b16 %v5380, %v5376
        %v6277 = vpack.c.b16 %v5381, %v5377
        %v6278 = vpack.c.b16 %v5382, %v5378
        %v6279 = vpack.c.b16 %v5383, %v5379
        %v6280 = vpack.c.b16 %v5388, %v5384
        %v6281 = vpack.c.b16 %v5389, %v5385
        %v6282 = vpack.c.b16 %v5390, %v5386
        %v6283 = vpack.c.b16 %v5391, %v5387
        %v6284 = vpack.c.b16 %v5396, %v5392
        %v6285 = vpack.c.b16 %v5397, %v5393
        %v6286 = vpack.c.b16 %v5398, %v5394
        %v6287 = vpack.c.b16 %v5399, %v5395
        %v6288 = vpack.c.b16 %v5404, %v5400
        %v6289 = vpack.c.b16 %v5405, %v5401
        %v6290 = vpack.c.b16 %v5406, %v5402
        %v6291 = vpack.c.b16 %v5407, %v5403
        %v6292 = vpack.c.b16 %v5412, %v5408
        %v6293 = vpack.c.b16 %v5413, %v5409
        %v6294 = vpack.c.b16 %v5414, %v5410
        %v6295 = vpack.c.b16 %v5415, %v5411
        %v6296 = vpack.c.b16 %v5420, %v5416
        %v6297 = vpack.c.b16 %v5421, %v5417
        %v6298 = vpack.c.b16 %v5422, %v5418
        %v6299 = vpack.c.b16 %v5423, %v5419
        %v6300 = vpack.c.b16 %v5428, %v5424
        %v6301 = vpack.c.b16 %v5429, %v5425
        %v6302 = vpack.c.b16 %v5430, %v5426
        %v6303 = vpack.c.b16 %v5431, %v5427
        %v6304 = vpack.c.b16 %v5436, %v5432
        %v6305 = vpack.c.b16 %v5437, %v5433
        %v6306 = vpack.c.b16 %v5438, %v5434
        %v6307 = vpack.c.b16 %v5439, %v5435
        %v6308 = vpack.c.b16 %v5444, %v5440
        %v6309 = vpack.c.b16 %v5445, %v5441
        %v6310 = vpack.c.b16 %v5446, %v5442
        %v6311 = vpack.c.b16 %v5447, %v5443
        %v6312 = vpack.c.b16 %v5452, %v5448
        %v6313 = vpack.c.b16 %v5453, %v5449
        %v6314 = vpack.c.b16 %v5454, %v5450
        %v6315 = vpack.c.b16 %v5455, %v5451
        %v6316 = vpack.c.b16 %v5460, %v5456
        %v6317 = vpack.c.b16 %v5461, %v5457
        %v6318 = vpack.c.b16 %v5462, %v5458
        %v6319 = vpack.c.b16 %v5463, %v5459
        %v6320 = vpack.c.b16 %v5468, %v5464
        %v6321 = vpack.c.b16 %v5469, %v5465
        %v6322 = vpack.c.b16 %v5470, %v5466
        %v6323 = vpack.c.b16 %v5471, %v5467
        %v6324 = vpack.c.b16 %v5476, %v5472
        %v6325 = vpack.c.b16 %v5477, %v5473
        %v6326 = vpack.c.b16 %v5478, %v5474
        %v6327 = vpack.c.b16 %v5479, %v5475
        %v6328 = vpack.c.b16 %v5484, %v5480
        %v6329 = vpack.c.b16 %v5485, %v5481
        %v6330 = vpack.c.b16 %v5486, %v5482
        %v6331 = vpack.c.b16 %v5487, %v5483
        %v6332 = vpack.c.b16 %v5492, %v5488
        %v6333 = vpack.c.b16 %v5493, %v5489
        %v6334 = vpack.c.b16 %v5494, %v5490
        %v6335 = vpack.c.b16 %v5495, %v5491
        %v6336 = vpack.c.b16 %v5500, %v5496
        %v6337 = vpack.c.b16 %v5501, %v5497
        %v6338 = vpack.c.b16 %v5502, %v5498
        %v6339 = vpack.c.b16 %v5503, %v5499
        %v6340 = vpack.c.b16 %v5508, %v5504
        %v6341 = vpack.c.b16 %v5509, %v5505
        %v6342 = vpack.c.b16 %v5510, %v5506
        %v6343 = vpack.c.b16 %v5511, %v5507
        %v6344 = vpack.c.b16 %v5516, %v5512
        %v6345 = vpack.c.b16 %v5517, %v5513
        %v6346 = vpack.c.b16 %v5518, %v5514
        %v6347 = vpack.c.b16 %v5519, %v5515
        %v6348 = vpack.c.b16 %v5524, %v5520
        %v6349 = vpack.c.b16 %v5525, %v5521
        %v6350 = vpack.c.b16 %v5526, %v5522
        %v6351 = vpack.c.b16 %v5527, %v5523
        %v6352 = vpack.c.b16 %v5532, %v5528
        %v6353 = vpack.c.b16 %v5533, %v5529
        %v6354 = vpack.c.b16 %v5534, %v5530
        %v6355 = vpack.c.b16 %v5535, %v5531
        %v6356 = vpack.c.b16 %v5540, %v5536
        %v6357 = vpack.c.b16 %v5541, %v5537
        %v6358 = vpack.c.b16 %v5542, %v5538
        %v6359 = vpack.c.b16 %v5543, %v5539
        %v6360 = vpack.c.b16 %v5548, %v5544
        %v6361 = vpack.c.b16 %v5549, %v5545
        %v6362 = vpack.c.b16 %v5550, %v5546
        %v6363 = vpack.c.b16 %v5551, %v5547
        %v6364 = vpack.c.b16 %v5556, %v5552
        %v6365 = vpack.c.b16 %v5557, %v5553
        %v6366 = vpack.c.b16 %v5558, %v5554
        %v6367 = vpack.c.b16 %v5559, %v5555
        %v6368 = vpack.c.b16 %v5564, %v5560
        %v6369 = vpack.c.b16 %v5565, %v5561
        %v6370 = vpack.c.b16 %v5566, %v5562
        %v6371 = vpack.c.b16 %v5567, %v5563
        %v6372 = vpack.c.b16 %v5572, %v5568
        %v6373 = vpack.c.b16 %v5573, %v5569
        %v6374 = vpack.c.b16 %v5574, %v5570
        %v6375 = vpack.c.b16 %v5575, %v5571
        %v6376 = vpack.c.b16 %v5580, %v5576
        %v6377 = vpack.c.b16 %v5581, %v5577
        %v6378 = vpack.c.b16 %v5582, %v5578
        %v6379 = vpack.c.b16 %v5583, %v5579
        %v6380 = vpack.c.b16 %v5588, %v5584
        %v6381 = vpack.c.b16 %v5589, %v5585
        %v6382 = vpack.c.b16 %v5590, %v5586
        %v6383 = vpack.c.b16 %v5591, %v5587
        %v6384 = vpack.c.b16 %v5596, %v5592
        %v6385 = vpack.c.b16 %v5597, %v5593
        %v6386 = vpack.c.b16 %v5598, %v5594
        %v6387 = vpack.c.b16 %v5599, %v5595
        %v6388 = vpack.c.b16 %v5604, %v5600
        %v6389 = vpack.c.b16 %v5605, %v5601
        %v6390 = vpack.c.b16 %v5606, %v5602
        %v6391 = vpack.c.b16 %v5607, %v5603
        %v6392 = vpack.c.b16 %v5612, %v5608
        %v6393 = vpack.c.b16 %v5613, %v5609
        %v6394 = vpack.c.b16 %v5614, %v5610
        %v6395 = vpack.c.b16 %v5615, %v5611
        %v6396 = vpack.c.b16 %v5620, %v5616
        %v6397 = vpack.c.b16 %v5621, %v5617
        %v6398 = vpack.c.b16 %v5622, %v5618
        %v6399 = vpack.c.b16 %v5623, %v5619
        %v6400 = vpack.c.b16 %v5628, %v5624
        %v6401 = vpack.c.b16 %v5629, %v5625
        %v6402 = vpack.c.b16 %v5630, %v5626
        %v6403 = vpack.c.b16 %v5631, %v5627
        %v6404 = vpack.c.b16 %v5636, %v5632
        %v6405 = vpack.c.b16 %v5637, %v5633
        %v6406 = vpack.c.b16 %v5638, %v5634
        %v6407 = vpack.c.b16 %v5639, %v5635
        %v6408 = vpack.c.b16 %v5644, %v5640
        %v6409 = vpack.c.b16 %v5645, %v5641
        %v6410 = vpack.c.b16 %v5646, %v5642
        %v6411 = vpack.c.b16 %v5647, %v5643
        %v6412 = vpack.c.b16 %v5652, %v5648
        %v6413 = vpack.c.b16 %v5653, %v5649
        %v6414 = vpack.c.b16 %v5654, %v5650
        %v6415 = vpack.c.b16 %v5655, %v5651
        %v6416 = vpack.c.b16 %v5660, %v5656
        %v6417 = vpack.c.b16 %v5661, %v5657
        %v6418 = vpack.c.b16 %v5662, %v5658
        %v6419 = vpack.c.b16 %v5663, %v5659
        %v6420 = vpack.c.b16 %v5668, %v5664
        %v6421 = vpack.c.b16 %v5669, %v5665
        %v6422 = vpack.c.b16 %v5670, %v5666
        %v6423 = vpack.c.b16 %v5671, %v5667
        %v6424 = vpack.c.b16 %v5676, %v5672
        %v6425 = vpack.c.b16 %v5677, %v5673
        %v6426 = vpack.c.b16 %v5678, %v5674
        %v6427 = vpack.c.b16 %v5679, %v5675
        %v6428 = vpack.c.b16 %v5684, %v5680
        %v6429 = vpack.c.b16 %v5685, %v5681
        %v6430 = vpack.c.b16 %v5686, %v5682
        %v6431 = vpack.c.b16 %v5687, %v5683
        %v6432 = vpack.c.b16 %v5692, %v5688
        %v6433 = vpack.c.b16 %v5693, %v5689
        %v6434 = vpack.c.b16 %v5694, %v5690
        %v6435 = vpack.c.b16 %v5695, %v5691
        %v6436 = vpack.c.b16 %v5700, %v5696
        %v6437 = vpack.c.b16 %v5701, %v5697
        %v6438 = vpack.c.b16 %v5702, %v5698
        %v6439 = vpack.c.b16 %v5703, %v5699
        %v6440 = vpack.c.b16 %v5708, %v5704
        %v6441 = vpack.c.b16 %v5709, %v5705
        %v6442 = vpack.c.b16 %v5710, %v5706
        %v6443 = vpack.c.b16 %v5711, %v5707
        %v6444 = vpack.c.b16 %v5716, %v5712
        %v6445 = vpack.c.b16 %v5717, %v5713
        %v6446 = vpack.c.b16 %v5718, %v5714
        %v6447 = vpack.c.b16 %v5719, %v5715
        %v6448 = vpack.c.b16 %v5724, %v5720
        %v6449 = vpack.c.b16 %v5725, %v5721
        %v6450 = vpack.c.b16 %v5726, %v5722
        %v6451 = vpack.c.b16 %v5727, %v5723
        %v6452 = vpack.c.b16 %v5732, %v5728
        %v6453 = vpack.c.b16 %v5733, %v5729
        %v6454 = vpack.c.b16 %v5734, %v5730
        %v6455 = vpack.c.b16 %v5735, %v5731
        %v6456 = vpack.c.b16 %v5740, %v5736
        %v6457 = vpack.c.b16 %v5741, %v5737
        %v6458 = vpack.c.b16 %v5742, %v5738
        %v6459 = vpack.c.b16 %v5743, %v5739
        %v6460 = vpack.c.b16 %v5748, %v5744
        %v6461 = vpack.c.b16 %v5749, %v5745
        %v6462 = vpack.c.b16 %v5750, %v5746
        %v6463 = vpack.c.b16 %v5751, %v5747
        %v6464 = vpack.c.b16 %v5756, %v5752
        %v6465 = vpack.c.b16 %v5757, %v5753
        %v6466 = vpack.c.b16 %v5758, %v5754
        %v6467 = vpack.c.b16 %v5759, %v5755
        %v6468 = vpack.c.b16 %v5764, %v5760
        %v6469 = vpack.c.b16 %v5765, %v5761
        %v6470 = vpack.c.b16 %v5766, %v5762
        %v6471 = vpack.c.b16 %v5767, %v5763
        %v6472 = vpack.c.b16 %v5772, %v5768
        %v6473 = vpack.c.b16 %v5773, %v5769
        %v6474 = vpack.c.b16 %v5774, %v5770
        %v6475 = vpack.c.b16 %v5775, %v5771
        %v6476 = vpack.c.b16 %v5780, %v5776
        %v6477 = vpack.c.b16 %v5781, %v5777
        %v6478 = vpack.c.b16 %v5782, %v5778
        %v6479 = vpack.c.b16 %v5783, %v5779
        %v6480 = vpack.c.b16 %v5788, %v5784
        %v6481 = vpack.c.b16 %v5789, %v5785
        %v6482 = vpack.c.b16 %v5790, %v5786
        %v6483 = vpack.c.b16 %v5791, %v5787
        %v6484 = vpack.c.b16 %v5796, %v5792
        %v6485 = vpack.c.b16 %v5797, %v5793
        %v6486 = vpack.c.b16 %v5798, %v5794
        %v6487 = vpack.c.b16 %v5799, %v5795
        %v6488 = vpack.c.b16 %v5804, %v5800
        %v6489 = vpack.c.b16 %v5805, %v5801
        %v6490 = vpack.c.b16 %v5806, %v5802
        %v6491 = vpack.c.b16 %v5807, %v5803
        %v6492 = vpack.c.b16 %v5812, %v5808
        %v6493 = vpack.c.b16 %v5813, %v5809
        %v6494 = vpack.c.b16 %v5814, %v5810
        %v6495 = vpack.c.b16 %v5815, %v5811
        %v6496 = vpack.c.b16 %v5820, %v5816
        %v6497 = vpack.c.b16 %v5821, %v5817
        %v6498 = vpack.c.b16 %v5822, %v5818
        %v6499 = vpack.c.b16 %v5823, %v5819
        %v6500 = vpack.c.b16 %v5828, %v5824
        %v6501 = vpack.c.b16 %v5829, %v5825
        %v6502 = vpack.c.b16 %v5830, %v5826
        %v6503 = vpack.c.b16 %v5831, %v5827
        %v6504 = vpack.c.b16 %v5836, %v5832
        %v6505 = vpack.c.b16 %v5837, %v5833
        %v6506 = vpack.c.b16 %v5838, %v5834
        %v6507 = vpack.c.b16 %v5839, %v5835
        %v6508 = vpack.c.b16 %v5844, %v5840
        %v6509 = vpack.c.b16 %v5845, %v5841
        %v6510 = vpack.c.b16 %v5846, %v5842
        %v6511 = vpack.c.b16 %v5847, %v5843
        %v6512 = vpack.c.b16 %v5852, %v5848
        %v6513 = vpack.c.b16 %v5853, %v5849
        %v6514 = vpack.c.b16 %v5854, %v5850
        %v6515 = vpack.c.b16 %v5855, %v5851
        %v6516 = vpack.c.b16 %v5860, %v5856
        %v6517 = vpack.c.b16 %v5861, %v5857
        %v6518 = vpack.c.b16 %v5862, %v5858
        %v6519 = vpack.c.b16 %v5863, %v5859
        %v6520 = vpack.c.b16 %v5868, %v5864
        %v6521 = vpack.c.b16 %v5869, %v5865
        %v6522 = vpack.c.b16 %v5870, %v5866
        %v6523 = vpack.c.b16 %v5871, %v5867
        %v6524 = vpack.c.b16 %v5876, %v5872
        %v6525 = vpack.c.b16 %v5877, %v5873
        %v6526 = vpack.c.b16 %v5878, %v5874
        %v6527 = vpack.c.b16 %v5879, %v5875
        %v6528 = vpack.c.b16 %v5884, %v5880
        %v6529 = vpack.c.b16 %v5885, %v5881
        %v6530 = vpack.c.b16 %v5886, %v5882
        %v6531 = vpack.c.b16 %v5887, %v5883
        %v6532 = vpack.c.b16 %v5892, %v5888
        %v6533 = vpack.c.b16 %v5893, %v5889
        %v6534 = vpack.c.b16 %v5894, %v5890
        %v6535 = vpack.c.b16 %v5895, %v5891
        %v6536 = vpack.c.b16 %v5900, %v5896
        %v6537 = vpack.c.b16 %v5901, %v5897
        %v6538 = vpack.c.b16 %v5902, %v5898
        %v6539 = vpack.c.b16 %v5903, %v5899
        %v6540 = vpack.c.b16 %v5908, %v5904
        %v6541 = vpack.c.b16 %v5909, %v5905
        %v6542 = vpack.c.b16 %v5910, %v5906
        %v6543 = vpack.c.b16 %v5911, %v5907
        %v6544 = vpack.c.b16 %v5916, %v5912
        %v6545 = vpack.c.b16 %v5917, %v5913
        %v6546 = vpack.c.b16 %v5918, %v5914
        %v6547 = vpack.c.b16 %v5919, %v5915
        %v6548 = vpack.c.b16 %v5924, %v5920
        %v6549 = vpack.c.b16 %v5925, %v5921
        %v6550 = vpack.c.b16 %v5926, %v5922
        %v6551 = vpack.c.b16 %v5927, %v5923
        %v6552 = vpack.c.b16 %v5932, %v5928
        %v6553 = vpack.c.b16 %v5933, %v5929
        %v6554 = vpack.c.b16 %v5934, %v5930
        %v6555 = vpack.c.b16 %v5935, %v5931
        %v6556 = vpack.c.b16 %v5940, %v5936
        %v6557 = vpack.c.b16 %v5941, %v5937
        %v6558 = vpack.c.b16 %v5942, %v5938
        %v6559 = vpack.c.b16 %v5943, %v5939
        %v6560 = vpack.c.b16 %v5948, %v5944
        %v6561 = vpack.c.b16 %v5949, %v5945
        %v6562 = vpack.c.b16 %v5950, %v5946
        %v6563 = vpack.c.b16 %v5951, %v5947
        %v6564 = vpack.c.b16 %v5956, %v5952
        %v6565 = vpack.c.b16 %v5957, %v5953
        %v6566 = vpack.c.b16 %v5958, %v5954
        %v6567 = vpack.c.b16 %v5959, %v5955
        %v6568 = vpack.c.b16 %v5964, %v5960
        %v6569 = vpack.c.b16 %v5965, %v5961
        %v6570 = vpack.c.b16 %v5966, %v5962
        %v6571 = vpack.c.b16 %v5967, %v5963
        %v6572 = vpack.c.b16 %v5972, %v5968
        %v6573 = vpack.c.b16 %v5973, %v5969
        %v6574 = vpack.c.b16 %v5974, %v5970
        %v6575 = vpack.c.b16 %v5975, %v5971
        %v6576 = vpack.c.b16 %v5980, %v5976
        %v6577 = vpack.c.b16 %v5981, %v5977
        %v6578 = vpack.c.b16 %v5982, %v5978
        %v6579 = vpack.c.b16 %v5983, %v5979
        %v6580 = vpack.c.b16 %v5988, %v5984
        %v6581 = vpack.c.b16 %v5989, %v5985
        %v6582 = vpack.c.b16 %v5990, %v5986
        %v6583 = vpack.c.b16 %v5991, %v5987
        %v6584 = vpack.c.b16 %v5996, %v5992
        %v6585 = vpack.c.b16 %v5997, %v5993
        %v6586 = vpack.c.b16 %v5998, %v5994
        %v6587 = vpack.c.b16 %v5999, %v5995
        %v6588 = vpack.c.b16 %v6004, %v6000
        %v6589 = vpack.c.b16 %v6005, %v6001
        %v6590 = vpack.c.b16 %v6006, %v6002
        %v6591 = vpack.c.b16 %v6007, %v6003
        %v6592 = vpack.c.b16 %v6012, %v6008
        %v6593 = vpack.c.b16 %v6013, %v6009
        %v6594 = vpack.c.b16 %v6014, %v6010
        %v6595 = vpack.c.b16 %v6015, %v6011
        %v6596 = vpack.c.b16 %v6020, %v6016
        %v6597 = vpack.c.b16 %v6021, %v6017
        %v6598 = vpack.c.b16 %v6022, %v6018
        %v6599 = vpack.c.b16 %v6023, %v6019
        %v6600 = vpack.c.b16 %v6028, %v6024
        %v6601 = vpack.c.b16 %v6029, %v6025
        %v6602 = vpack.c.b16 %v6030, %v6026
        %v6603 = vpack.c.b16 %v6031, %v6027
        %v6604 = vpack.c.b16 %v6036, %v6032
        %v6605 = vpack.c.b16 %v6037, %v6033
        %v6606 = vpack.c.b16 %v6038, %v6034
        %v6607 = vpack.c.b16 %v6039, %v6035
        %v6608 = vpack.c.b16 %v6044, %v6040
        %v6609 = vpack.c.b16 %v6045, %v6041
        %v6610 = vpack.c.b16 %v6046, %v6042
        %v6611 = vpack.c.b16 %v6047, %v6043
        %v6612 = vpack.c.b16 %v6052, %v6048
        %v6613 = vpack.c.b16 %v6053, %v6049
        %v6614 = vpack.c.b16 %v6054, %v6050
        %v6615 = vpack.c.b16 %v6055, %v6051
        %v6616 = vpack.c.b16 %v6060, %v6056
        %v6617 = vpack.c.b16 %v6061, %v6057
        %v6618 = vpack.c.b16 %v6062, %v6058
        %v6619 = vpack.c.b16 %v6063, %v6059
        %v6620 = vpack.c.b16 %v6068, %v6064
        %v6621 = vpack.c.b16 %v6069, %v6065
        %v6622 = vpack.c.b16 %v6070, %v6066
        %v6623 = vpack.c.b16 %v6071, %v6067
        %v6624 = vpack.c.b16 %v6076, %v6072
        %v6625 = vpack.c.b16 %v6077, %v6073
        %v6626 = vpack.c.b16 %v6078, %v6074
        %v6627 = vpack.c.b16 %v6079, %v6075
        %v6628 = vpack.c.b16 %v6084, %v6080
        %v6629 = vpack.c.b16 %v6085, %v6081
        %v6630 = vpack.c.b16 %v6086, %v6082
        %v6631 = vpack.c.b16 %v6087, %v6083
        %v6632 = vpack.c.b16 %v6092, %v6088
        %v6633 = vpack.c.b16 %v6093, %v6089
        %v6634 = vpack.c.b16 %v6094, %v6090
        %v6635 = vpack.c.b16 %v6095, %v6091
        %v6636 = vpack.c.b16 %v6100, %v6096
        %v6637 = vpack.c.b16 %v6101, %v6097
        %v6638 = vpack.c.b16 %v6102, %v6098
        %v6639 = vpack.c.b16 %v6103, %v6099
        %v6640 = vpack.c.b16 %v6108, %v6104
        %v6641 = vpack.c.b16 %v6109, %v6105
        %v6642 = vpack.c.b16 %v6110, %v6106
        %v6643 = vpack.c.b16 %v6111, %v6107
        %v6644 = vpack.c.b16 %v6116, %v6112
        %v6645 = vpack.c.b16 %v6117, %v6113
        %v6646 = vpack.c.b16 %v6118, %v6114
        %v6647 = vpack.c.b16 %v6119, %v6115
        %v6648 = vpack.c.b16 %v6124, %v6120
        %v6649 = vpack.c.b16 %v6125, %v6121
        %v6650 = vpack.c.b16 %v6126, %v6122
        %v6651 = vpack.c.b16 %v6127, %v6123
        %v6652 = vpack.c.b16 %v6132, %v6128
        %v6653 = vpack.c.b16 %v6133, %v6129
        %v6654 = vpack.c.b16 %v6134, %v6130
        %v6655 = vpack.c.b16 %v6135, %v6131
        %v6656 = vpack.c.b16 %v6140, %v6136
        %v6657 = vpack.c.b16 %v6141, %v6137
        %v6658 = vpack.c.b16 %v6142, %v6138
        %v6659 = vpack.c.b16 %v6143, %v6139
        %v6660 = vpack.c.b16 %v6148, %v6144
        %v6661 = vpack.c.b16 %v6149, %v6145
        %v6662 = vpack.c.b16 %v6150, %v6146
        %v6663 = vpack.c.b16 %v6151, %v6147
        %7176 = vmatprep.subr.bf16.mxu0 %v6181
        %7177 = vmatpush1.bf16.msra.mxu0 %v6180
        %7178 = vmatprep.subr.bf16.mxu0 %v6177
        %7179 = vmatpush1.bf16.msra.mxu0 %v6176
        %7180 = vmatprep.subr.bf16.mxu0 %v6173
        %7181 = vmatpush1.bf16.msra.mxu0 %v6172
        %7182 = vmatprep.subr.bf16.mxu0 %v6169
        %7183 = vmatpush1.bf16.msra.mxu0 %v6168
        %7184 = vmatprep.subr.bf16.mxu0 %v6165
        %7185 = vmatpush1.bf16.msra.mxu0 %v6164
        %7186 = vmatprep.subr.bf16.mxu0 %v6161
        %7187 = vmatpush1.bf16.msra.mxu0 %v6160
        %7188 = vmatprep.subr.bf16.mxu0 %v6157
        %7189 = vmatpush1.bf16.msra.mxu0 %v6156
        %7190 = vmatprep.subr.bf16.mxu0 %v6153
        %7191 = vmatpush1.bf16.msra.mxu0 %v6152
        %7192 = vmatprep.subr.bf16.mxu0 %v6213
        %7193 = vmatpush2.bf16.msra.mxu0 %v6212
        %7194 = vmatprep.subr.bf16.mxu0 %v6209
        %7195 = vmatpush2.bf16.msra.mxu0 %v6208
        %7196 = vmatprep.subr.bf16.mxu0 %v6205
        %7197 = vmatpush2.bf16.msra.mxu0 %v6204
        %7198 = vmatprep.subr.bf16.mxu0 %v6201
        %7199 = vmatpush2.bf16.msra.mxu0 %v6200
        %7200 = vmatprep.subr.bf16.mxu0 %v6197
        %7201 = vmatpush2.bf16.msra.mxu0 %v6196
        %7202 = vmatprep.subr.bf16.mxu0 %v6193
        %7203 = vmatpush2.bf16.msra.mxu0 %v6192
        %7204 = vmatprep.subr.bf16.mxu0 %v6189
        %7205 = vmatpush2.bf16.msra.mxu0 %v6188
        %7206 = vmatprep.subr.bf16.mxu0 %v6185
        %7207 = vmatpush2.bf16.msra.mxu0 %v6184
        %7208 = vmatprep.mubr.bf16.mxu0 %v4585
        %7209 = vmatmul.mubr.bf16.gmra.mxu0 %v4584
        %v7210 = vpop.f32.mrf.mxu0
        %v7211 = vadd.f32 %v216, %v7210
        %v7212 = vpop.f32.mrf.mxu0
        %v7213 = vadd.f32 %v217, %v7212
        %v7214 = vpop.f32.mrf.mxu0
        %v7215 = vpop.f32.mrf.mxu0
        %7216 = vdwg.mxu0
        %7217 = vmatprep.subr.bf16.mxu0 %v6245
        %7218 = vmatpush1.bf16.msra.mxu0 %v6244
        %7219 = vmatprep.subr.bf16.mxu0 %v6241
        %7220 = vmatpush1.bf16.msra.mxu0 %v6240
        %7221 = vmatprep.subr.bf16.mxu0 %v6237
        %7222 = vmatpush1.bf16.msra.mxu0 %v6236
        %7223 = vmatprep.subr.bf16.mxu0 %v6233
        %7224 = vmatpush1.bf16.msra.mxu0 %v6232
        %7225 = vmatprep.subr.bf16.mxu0 %v6229
        %7226 = vmatpush1.bf16.msra.mxu0 %v6228
        %7227 = vmatprep.subr.bf16.mxu0 %v6225
        %7228 = vmatpush1.bf16.msra.mxu0 %v6224
        %7229 = vmatprep.subr.bf16.mxu0 %v6221
        %7230 = vmatpush1.bf16.msra.mxu0 %v6220
        %7231 = vmatprep.subr.bf16.mxu0 %v6217
        %7232 = vmatpush1.bf16.msra.mxu0 %v6216
        %7233 = vmatprep.subr.bf16.mxu0 %v6277
        %7234 = vmatpush2.bf16.msra.mxu0 %v6276
        %7235 = vmatprep.subr.bf16.mxu0 %v6273
        %7236 = vmatpush2.bf16.msra.mxu0 %v6272
        %7237 = vmatprep.subr.bf16.mxu0 %v6269
        %7238 = vmatpush2.bf16.msra.mxu0 %v6268
        %7239 = vmatprep.subr.bf16.mxu0 %v6265
        %7240 = vmatpush2.bf16.msra.mxu0 %v6264
        %7241 = vmatprep.subr.bf16.mxu0 %v6261
        %7242 = vmatpush2.bf16.msra.mxu0 %v6260
        %7243 = vmatprep.subr.bf16.mxu0 %v6257
        %7244 = vmatpush2.bf16.msra.mxu0 %v6256
        %7245 = vmatprep.subr.bf16.mxu0 %v6253
        %7246 = vmatpush2.bf16.msra.mxu0 %v6252
        %7247 = vmatprep.subr.bf16.mxu0 %v6249
        %7248 = vmatpush2.bf16.msra.mxu0 %v6248
        %7249 = vmatprep.mubr.bf16.mxu0 %v4587
        %7250 = vmatmul.mubr.bf16.gmra.mxu0 %v4586
        %v7251 = vpop.f32.mrf.mxu0
        %v7252 = vadd.f32 %v7211, %v7251
        %v7253 = vpop.f32.mrf.mxu0
        %v7254 = vadd.f32 %v7213, %v7253
        %v7255 = vpop.f32.mrf.mxu0
        %v7256 = vpop.f32.mrf.mxu0
        %7257 = vdwg.mxu0
        %7258 = vmatprep.subr.bf16.mxu0 %v6309
        %7259 = vmatpush1.bf16.msra.mxu0 %v6308
        %7260 = vmatprep.subr.bf16.mxu0 %v6305
        %7261 = vmatpush1.bf16.msra.mxu0 %v6304
        %7262 = vmatprep.subr.bf16.mxu0 %v6301
        %7263 = vmatpush1.bf16.msra.mxu0 %v6300
        %7264 = vmatprep.subr.bf16.mxu0 %v6297
        %7265 = vmatpush1.bf16.msra.mxu0 %v6296
        %7266 = vmatprep.subr.bf16.mxu0 %v6293
        %7267 = vmatpush1.bf16.msra.mxu0 %v6292
        %7268 = vmatprep.subr.bf16.mxu0 %v6289
        %7269 = vmatpush1.bf16.msra.mxu0 %v6288
        %7270 = vmatprep.subr.bf16.mxu0 %v6285
        %7271 = vmatpush1.bf16.msra.mxu0 %v6284
        %7272 = vmatprep.subr.bf16.mxu0 %v6281
        %7273 = vmatpush1.bf16.msra.mxu0 %v6280
        %7274 = vmatprep.subr.bf16.mxu0 %v6341
        %7275 = vmatpush2.bf16.msra.mxu0 %v6340
        %7276 = vmatprep.subr.bf16.mxu0 %v6337
        %7277 = vmatpush2.bf16.msra.mxu0 %v6336
        %7278 = vmatprep.subr.bf16.mxu0 %v6333
        %7279 = vmatpush2.bf16.msra.mxu0 %v6332
        %7280 = vmatprep.subr.bf16.mxu0 %v6329
        %7281 = vmatpush2.bf16.msra.mxu0 %v6328
        %7282 = vmatprep.subr.bf16.mxu0 %v6325
        %7283 = vmatpush2.bf16.msra.mxu0 %v6324
        %7284 = vmatprep.subr.bf16.mxu0 %v6321
        %7285 = vmatpush2.bf16.msra.mxu0 %v6320
        %7286 = vmatprep.subr.bf16.mxu0 %v6317
        %7287 = vmatpush2.bf16.msra.mxu0 %v6316
        %7288 = vmatprep.subr.bf16.mxu0 %v6313
        %7289 = vmatpush2.bf16.msra.mxu0 %v6312
        %7290 = vmatprep.mubr.bf16.mxu0 %v4589
        %7291 = vmatmul.mubr.bf16.gmra.mxu0 %v4588
        %v7292 = vpop.f32.mrf.mxu0
        %v7293 = vadd.f32 %v7252, %v7292
        %v7294 = vpop.f32.mrf.mxu0
        %v7295 = vadd.f32 %v7254, %v7294
        %v7296 = vpop.f32.mrf.mxu0
        %v7297 = vpop.f32.mrf.mxu0
        %7298 = vdwg.mxu0
        %7299 = vmatprep.subr.bf16.mxu0 %v6373
        %7300 = vmatpush1.bf16.msra.mxu0 %v6372
        %7301 = vmatprep.subr.bf16.mxu0 %v6369
        %7302 = vmatpush1.bf16.msra.mxu0 %v6368
        %7303 = vmatprep.subr.bf16.mxu0 %v6365
        %7304 = vmatpush1.bf16.msra.mxu0 %v6364
        %7305 = vmatprep.subr.bf16.mxu0 %v6361
        %7306 = vmatpush1.bf16.msra.mxu0 %v6360
        %7307 = vmatprep.subr.bf16.mxu0 %v6357
        %7308 = vmatpush1.bf16.msra.mxu0 %v6356
        %7309 = vmatprep.subr.bf16.mxu0 %v6353
        %7310 = vmatpush1.bf16.msra.mxu0 %v6352
        %7311 = vmatprep.subr.bf16.mxu0 %v6349
        %7312 = vmatpush1.bf16.msra.mxu0 %v6348
        %7313 = vmatprep.subr.bf16.mxu0 %v6345
        %7314 = vmatpush1.bf16.msra.mxu0 %v6344
        %7315 = vmatprep.subr.bf16.mxu0 %v6405
        %7316 = vmatpush2.bf16.msra.mxu0 %v6404
        %7317 = vmatprep.subr.bf16.mxu0 %v6401
        %7318 = vmatpush2.bf16.msra.mxu0 %v6400
        %7319 = vmatprep.subr.bf16.mxu0 %v6397
        %7320 = vmatpush2.bf16.msra.mxu0 %v6396
        %7321 = vmatprep.subr.bf16.mxu0 %v6393
        %7322 = vmatpush2.bf16.msra.mxu0 %v6392
        %7323 = vmatprep.subr.bf16.mxu0 %v6389
        %7324 = vmatpush2.bf16.msra.mxu0 %v6388
        %7325 = vmatprep.subr.bf16.mxu0 %v6385
        %7326 = vmatpush2.bf16.msra.mxu0 %v6384
        %7327 = vmatprep.subr.bf16.mxu0 %v6381
        %7328 = vmatpush2.bf16.msra.mxu0 %v6380
        %7329 = vmatprep.subr.bf16.mxu0 %v6377
        %7330 = vmatpush2.bf16.msra.mxu0 %v6376
        %7331 = vmatprep.mubr.bf16.mxu0 %v4591
        %7332 = vmatmul.mubr.bf16.gmra.mxu0 %v4590
        %v7333 = vpop.f32.mrf.mxu0
        %v7334 = vadd.f32 %v7293, %v7333
        %v7335 = vpop.f32.mrf.mxu0
        %v7336 = vadd.f32 %v7295, %v7335
        %v7337 = vpop.f32.mrf.mxu0
        %v7338 = vpop.f32.mrf.mxu0
        %7339 = vdwg.mxu0
        %7340 = vmatprep.subr.bf16.mxu0 %v6437
        %7341 = vmatpush1.bf16.msra.mxu0 %v6436
        %7342 = vmatprep.subr.bf16.mxu0 %v6433
        %7343 = vmatpush1.bf16.msra.mxu0 %v6432
        %7344 = vmatprep.subr.bf16.mxu0 %v6429
        %7345 = vmatpush1.bf16.msra.mxu0 %v6428
        %7346 = vmatprep.subr.bf16.mxu0 %v6425
        %7347 = vmatpush1.bf16.msra.mxu0 %v6424
        %7348 = vmatprep.subr.bf16.mxu0 %v6421
        %7349 = vmatpush1.bf16.msra.mxu0 %v6420
        %7350 = vmatprep.subr.bf16.mxu0 %v6417
        %7351 = vmatpush1.bf16.msra.mxu0 %v6416
        %7352 = vmatprep.subr.bf16.mxu0 %v6413
        %7353 = vmatpush1.bf16.msra.mxu0 %v6412
        %7354 = vmatprep.subr.bf16.mxu0 %v6409
        %7355 = vmatpush1.bf16.msra.mxu0 %v6408
        %7356 = vmatprep.subr.bf16.mxu0 %v6469
        %7357 = vmatpush2.bf16.msra.mxu0 %v6468
        %7358 = vmatprep.subr.bf16.mxu0 %v6465
        %7359 = vmatpush2.bf16.msra.mxu0 %v6464
        %7360 = vmatprep.subr.bf16.mxu0 %v6461
        %7361 = vmatpush2.bf16.msra.mxu0 %v6460
        %7362 = vmatprep.subr.bf16.mxu0 %v6457
        %7363 = vmatpush2.bf16.msra.mxu0 %v6456
        %7364 = vmatprep.subr.bf16.mxu0 %v6453
        %7365 = vmatpush2.bf16.msra.mxu0 %v6452
        %7366 = vmatprep.subr.bf16.mxu0 %v6449
        %7367 = vmatpush2.bf16.msra.mxu0 %v6448
        %7368 = vmatprep.subr.bf16.mxu0 %v6445
        %7369 = vmatpush2.bf16.msra.mxu0 %v6444
        %7370 = vmatprep.subr.bf16.mxu0 %v6441
        %7371 = vmatpush2.bf16.msra.mxu0 %v6440
        %7372 = vmatprep.mubr.bf16.mxu0 %v4593
        %7373 = vmatmul.mubr.bf16.gmra.mxu0 %v4592
        %v7374 = vpop.f32.mrf.mxu0
        %v7375 = vadd.f32 %v7334, %v7374
        %v7376 = vpop.f32.mrf.mxu0
        %v7377 = vadd.f32 %v7336, %v7376
        %v7378 = vpop.f32.mrf.mxu0
        %v7379 = vpop.f32.mrf.mxu0
        %7380 = vdwg.mxu0
        %7381 = vmatprep.subr.bf16.mxu0 %v6501
        %7382 = vmatpush1.bf16.msra.mxu0 %v6500
        %7383 = vmatprep.subr.bf16.mxu0 %v6497
        %7384 = vmatpush1.bf16.msra.mxu0 %v6496
        %7385 = vmatprep.subr.bf16.mxu0 %v6493
        %7386 = vmatpush1.bf16.msra.mxu0 %v6492
        %7387 = vmatprep.subr.bf16.mxu0 %v6489
        %7388 = vmatpush1.bf16.msra.mxu0 %v6488
        %7389 = vmatprep.subr.bf16.mxu0 %v6485
        %7390 = vmatpush1.bf16.msra.mxu0 %v6484
        %7391 = vmatprep.subr.bf16.mxu0 %v6481
        %7392 = vmatpush1.bf16.msra.mxu0 %v6480
        %7393 = vmatprep.subr.bf16.mxu0 %v6477
        %7394 = vmatpush1.bf16.msra.mxu0 %v6476
        %7395 = vmatprep.subr.bf16.mxu0 %v6473
        %7396 = vmatpush1.bf16.msra.mxu0 %v6472
        %7397 = vmatprep.subr.bf16.mxu0 %v6533
        %7398 = vmatpush2.bf16.msra.mxu0 %v6532
        %7399 = vmatprep.subr.bf16.mxu0 %v6529
        %7400 = vmatpush2.bf16.msra.mxu0 %v6528
        %7401 = vmatprep.subr.bf16.mxu0 %v6525
        %7402 = vmatpush2.bf16.msra.mxu0 %v6524
        %7403 = vmatprep.subr.bf16.mxu0 %v6521
        %7404 = vmatpush2.bf16.msra.mxu0 %v6520
        %7405 = vmatprep.subr.bf16.mxu0 %v6517
        %7406 = vmatpush2.bf16.msra.mxu0 %v6516
        %7407 = vmatprep.subr.bf16.mxu0 %v6513
        %7408 = vmatpush2.bf16.msra.mxu0 %v6512
        %7409 = vmatprep.subr.bf16.mxu0 %v6509
        %7410 = vmatpush2.bf16.msra.mxu0 %v6508
        %7411 = vmatprep.subr.bf16.mxu0 %v6505
        %7412 = vmatpush2.bf16.msra.mxu0 %v6504
        %7413 = vmatprep.mubr.bf16.mxu0 %v4595
        %7414 = vmatmul.mubr.bf16.gmra.mxu0 %v4594
        %v7415 = vpop.f32.mrf.mxu0
        %v7416 = vadd.f32 %v7375, %v7415
        %v7417 = vpop.f32.mrf.mxu0
        %v7418 = vadd.f32 %v7377, %v7417
        %v7419 = vpop.f32.mrf.mxu0
        %v7420 = vpop.f32.mrf.mxu0
        %7421 = vdwg.mxu0
        %7422 = vmatprep.subr.bf16.mxu0 %v6565
        %7423 = vmatpush1.bf16.msra.mxu0 %v6564
        %7424 = vmatprep.subr.bf16.mxu0 %v6561
        %7425 = vmatpush1.bf16.msra.mxu0 %v6560
        %7426 = vmatprep.subr.bf16.mxu0 %v6557
        %7427 = vmatpush1.bf16.msra.mxu0 %v6556
        %7428 = vmatprep.subr.bf16.mxu0 %v6553
        %7429 = vmatpush1.bf16.msra.mxu0 %v6552
        %7430 = vmatprep.subr.bf16.mxu0 %v6549
        %7431 = vmatpush1.bf16.msra.mxu0 %v6548
        %7432 = vmatprep.subr.bf16.mxu0 %v6545
        %7433 = vmatpush1.bf16.msra.mxu0 %v6544
        %7434 = vmatprep.subr.bf16.mxu0 %v6541
        %7435 = vmatpush1.bf16.msra.mxu0 %v6540
        %7436 = vmatprep.subr.bf16.mxu0 %v6537
        %7437 = vmatpush1.bf16.msra.mxu0 %v6536
        %7438 = vmatprep.subr.bf16.mxu0 %v6597
        %7439 = vmatpush2.bf16.msra.mxu0 %v6596
        %7440 = vmatprep.subr.bf16.mxu0 %v6593
        %7441 = vmatpush2.bf16.msra.mxu0 %v6592
        %7442 = vmatprep.subr.bf16.mxu0 %v6589
        %7443 = vmatpush2.bf16.msra.mxu0 %v6588
        %7444 = vmatprep.subr.bf16.mxu0 %v6585
        %7445 = vmatpush2.bf16.msra.mxu0 %v6584
        %7446 = vmatprep.subr.bf16.mxu0 %v6581
        %7447 = vmatpush2.bf16.msra.mxu0 %v6580
        %7448 = vmatprep.subr.bf16.mxu0 %v6577
        %7449 = vmatpush2.bf16.msra.mxu0 %v6576
        %7450 = vmatprep.subr.bf16.mxu0 %v6573
        %7451 = vmatpush2.bf16.msra.mxu0 %v6572
        %7452 = vmatprep.subr.bf16.mxu0 %v6569
        %7453 = vmatpush2.bf16.msra.mxu0 %v6568
        %7454 = vmatprep.mubr.bf16.mxu0 %v4597
        %7455 = vmatmul.mubr.bf16.gmra.mxu0 %v4596
        %v7456 = vpop.f32.mrf.mxu0
        %v7457 = vadd.f32 %v7416, %v7456
        %v7458 = vpop.f32.mrf.mxu0
        %v7459 = vadd.f32 %v7418, %v7458
        %v7460 = vpop.f32.mrf.mxu0
        %v7461 = vpop.f32.mrf.mxu0
        %7462 = vdwg.mxu0
        %7463 = vmatprep.subr.bf16.mxu0 %v6629
        %7464 = vmatpush1.bf16.msra.mxu0 %v6628
        %7465 = vmatprep.subr.bf16.mxu0 %v6625
        %7466 = vmatpush1.bf16.msra.mxu0 %v6624
        %7467 = vmatprep.subr.bf16.mxu0 %v6621
        %7468 = vmatpush1.bf16.msra.mxu0 %v6620
        %7469 = vmatprep.subr.bf16.mxu0 %v6617
        %7470 = vmatpush1.bf16.msra.mxu0 %v6616
        %7471 = vmatprep.subr.bf16.mxu0 %v6613
        %7472 = vmatpush1.bf16.msra.mxu0 %v6612
        %7473 = vmatprep.subr.bf16.mxu0 %v6609
        %7474 = vmatpush1.bf16.msra.mxu0 %v6608
        %7475 = vmatprep.subr.bf16.mxu0 %v6605
        %7476 = vmatpush1.bf16.msra.mxu0 %v6604
        %7477 = vmatprep.subr.bf16.mxu0 %v6601
        %7478 = vmatpush1.bf16.msra.mxu0 %v6600
        %7479 = vmatprep.subr.bf16.mxu0 %v6661
        %7480 = vmatpush2.bf16.msra.mxu0 %v6660
        %7481 = vmatprep.subr.bf16.mxu0 %v6657
        %7482 = vmatpush2.bf16.msra.mxu0 %v6656
        %7483 = vmatprep.subr.bf16.mxu0 %v6653
        %7484 = vmatpush2.bf16.msra.mxu0 %v6652
        %7485 = vmatprep.subr.bf16.mxu0 %v6649
        %7486 = vmatpush2.bf16.msra.mxu0 %v6648
        %7487 = vmatprep.subr.bf16.mxu0 %v6645
        %7488 = vmatpush2.bf16.msra.mxu0 %v6644
        %7489 = vmatprep.subr.bf16.mxu0 %v6641
        %7490 = vmatpush2.bf16.msra.mxu0 %v6640
        %7491 = vmatprep.subr.bf16.mxu0 %v6637
        %7492 = vmatpush2.bf16.msra.mxu0 %v6636
        %7493 = vmatprep.subr.bf16.mxu0 %v6633
        %7494 = vmatpush2.bf16.msra.mxu0 %v6632
        %7495 = vmatprep.mubr.bf16.mxu0 %v4599
        %7496 = vmatmul.mubr.bf16.gmra.mxu0 %v4598
        %v7497 = vpop.f32.mrf.mxu0
        %v7498 = vadd.f32 %v7457, %v7497
        %v7499 = vpop.f32.mrf.mxu0
        %v7500 = vadd.f32 %v7459, %v7499
        %v7501 = vpop.f32.mrf.mxu0
        %v7502 = vpop.f32.mrf.mxu0
        %7503 = vdwg.mxu0
        %7504 = vmatprep.subr.bf16.mxu0 %v6183
        %7505 = vmatpush1.bf16.msra.mxu0 %v6182
        %7506 = vmatprep.subr.bf16.mxu0 %v6179
        %7507 = vmatpush1.bf16.msra.mxu0 %v6178
        %7508 = vmatprep.subr.bf16.mxu0 %v6175
        %7509 = vmatpush1.bf16.msra.mxu0 %v6174
        %7510 = vmatprep.subr.bf16.mxu0 %v6171
        %7511 = vmatpush1.bf16.msra.mxu0 %v6170
        %7512 = vmatprep.subr.bf16.mxu0 %v6167
        %7513 = vmatpush1.bf16.msra.mxu0 %v6166
        %7514 = vmatprep.subr.bf16.mxu0 %v6163
        %7515 = vmatpush1.bf16.msra.mxu0 %v6162
        %7516 = vmatprep.subr.bf16.mxu0 %v6159
        %7517 = vmatpush1.bf16.msra.mxu0 %v6158
        %7518 = vmatprep.subr.bf16.mxu0 %v6155
        %7519 = vmatpush1.bf16.msra.mxu0 %v6154
        %7520 = vmatprep.subr.bf16.mxu0 %v6215
        %7521 = vmatpush2.bf16.msra.mxu0 %v6214
        %7522 = vmatprep.subr.bf16.mxu0 %v6211
        %7523 = vmatpush2.bf16.msra.mxu0 %v6210
        %7524 = vmatprep.subr.bf16.mxu0 %v6207
        %7525 = vmatpush2.bf16.msra.mxu0 %v6206
        %7526 = vmatprep.subr.bf16.mxu0 %v6203
        %7527 = vmatpush2.bf16.msra.mxu0 %v6202
        %7528 = vmatprep.subr.bf16.mxu0 %v6199
        %7529 = vmatpush2.bf16.msra.mxu0 %v6198
        %7530 = vmatprep.subr.bf16.mxu0 %v6195
        %7531 = vmatpush2.bf16.msra.mxu0 %v6194
        %7532 = vmatprep.subr.bf16.mxu0 %v6191
        %7533 = vmatpush2.bf16.msra.mxu0 %v6190
        %7534 = vmatprep.subr.bf16.mxu0 %v6187
        %7535 = vmatpush2.bf16.msra.mxu0 %v6186
        %7536 = vmatprep.mubr.bf16.mxu0 %v4585
        %7537 = vmatmul.mubr.bf16.gmra.mxu0 %v4584
        %v7538 = vpop.f32.mrf.mxu0
        %v7539 = vadd.f32 %v218, %v7538
        %v7540 = vpop.f32.mrf.mxu0
        %v7541 = vadd.f32 %v219, %v7540
        %v7542 = vpop.f32.mrf.mxu0
        %v7543 = vpop.f32.mrf.mxu0
        %7544 = vdwg.mxu0
        %7545 = vmatprep.subr.bf16.mxu0 %v6247
        %7546 = vmatpush1.bf16.msra.mxu0 %v6246
        %7547 = vmatprep.subr.bf16.mxu0 %v6243
        %7548 = vmatpush1.bf16.msra.mxu0 %v6242
        %7549 = vmatprep.subr.bf16.mxu0 %v6239
        %7550 = vmatpush1.bf16.msra.mxu0 %v6238
        %7551 = vmatprep.subr.bf16.mxu0 %v6235
        %7552 = vmatpush1.bf16.msra.mxu0 %v6234
        %7553 = vmatprep.subr.bf16.mxu0 %v6231
        %7554 = vmatpush1.bf16.msra.mxu0 %v6230
        %7555 = vmatprep.subr.bf16.mxu0 %v6227
        %7556 = vmatpush1.bf16.msra.mxu0 %v6226
        %7557 = vmatprep.subr.bf16.mxu0 %v6223
        %7558 = vmatpush1.bf16.msra.mxu0 %v6222
        %7559 = vmatprep.subr.bf16.mxu0 %v6219
        %7560 = vmatpush1.bf16.msra.mxu0 %v6218
        %7561 = vmatprep.subr.bf16.mxu0 %v6279
        %7562 = vmatpush2.bf16.msra.mxu0 %v6278
        %7563 = vmatprep.subr.bf16.mxu0 %v6275
        %7564 = vmatpush2.bf16.msra.mxu0 %v6274
        %7565 = vmatprep.subr.bf16.mxu0 %v6271
        %7566 = vmatpush2.bf16.msra.mxu0 %v6270
        %7567 = vmatprep.subr.bf16.mxu0 %v6267
        %7568 = vmatpush2.bf16.msra.mxu0 %v6266
        %7569 = vmatprep.subr.bf16.mxu0 %v6263
        %7570 = vmatpush2.bf16.msra.mxu0 %v6262
        %7571 = vmatprep.subr.bf16.mxu0 %v6259
        %7572 = vmatpush2.bf16.msra.mxu0 %v6258
        %7573 = vmatprep.subr.bf16.mxu0 %v6255
        %7574 = vmatpush2.bf16.msra.mxu0 %v6254
        %7575 = vmatprep.subr.bf16.mxu0 %v6251
        %7576 = vmatpush2.bf16.msra.mxu0 %v6250
        %7577 = vmatprep.mubr.bf16.mxu0 %v4587
        %7578 = vmatmul.mubr.bf16.gmra.mxu0 %v4586
        %v7579 = vpop.f32.mrf.mxu0
        %v7580 = vadd.f32 %v7539, %v7579
        %v7581 = vpop.f32.mrf.mxu0
        %v7582 = vadd.f32 %v7541, %v7581
        %v7583 = vpop.f32.mrf.mxu0
        %v7584 = vpop.f32.mrf.mxu0
        %7585 = vdwg.mxu0
        %7586 = vmatprep.subr.bf16.mxu0 %v6311
        %7587 = vmatpush1.bf16.msra.mxu0 %v6310
        %7588 = vmatprep.subr.bf16.mxu0 %v6307
        %7589 = vmatpush1.bf16.msra.mxu0 %v6306
        %7590 = vmatprep.subr.bf16.mxu0 %v6303
        %7591 = vmatpush1.bf16.msra.mxu0 %v6302
        %7592 = vmatprep.subr.bf16.mxu0 %v6299
        %7593 = vmatpush1.bf16.msra.mxu0 %v6298
        %7594 = vmatprep.subr.bf16.mxu0 %v6295
        %7595 = vmatpush1.bf16.msra.mxu0 %v6294
        %7596 = vmatprep.subr.bf16.mxu0 %v6291
        %7597 = vmatpush1.bf16.msra.mxu0 %v6290
        %7598 = vmatprep.subr.bf16.mxu0 %v6287
        %7599 = vmatpush1.bf16.msra.mxu0 %v6286
        %7600 = vmatprep.subr.bf16.mxu0 %v6283
        %7601 = vmatpush1.bf16.msra.mxu0 %v6282
        %7602 = vmatprep.subr.bf16.mxu0 %v6343
        %7603 = vmatpush2.bf16.msra.mxu0 %v6342
        %7604 = vmatprep.subr.bf16.mxu0 %v6339
        %7605 = vmatpush2.bf16.msra.mxu0 %v6338
        %7606 = vmatprep.subr.bf16.mxu0 %v6335
        %7607 = vmatpush2.bf16.msra.mxu0 %v6334
        %7608 = vmatprep.subr.bf16.mxu0 %v6331
        %7609 = vmatpush2.bf16.msra.mxu0 %v6330
        %7610 = vmatprep.subr.bf16.mxu0 %v6327
        %7611 = vmatpush2.bf16.msra.mxu0 %v6326
        %7612 = vmatprep.subr.bf16.mxu0 %v6323
        %7613 = vmatpush2.bf16.msra.mxu0 %v6322
        %7614 = vmatprep.subr.bf16.mxu0 %v6319
        %7615 = vmatpush2.bf16.msra.mxu0 %v6318
        %7616 = vmatprep.subr.bf16.mxu0 %v6315
        %7617 = vmatpush2.bf16.msra.mxu0 %v6314
        %7618 = vmatprep.mubr.bf16.mxu0 %v4589
        %7619 = vmatmul.mubr.bf16.gmra.mxu0 %v4588
        %v7620 = vpop.f32.mrf.mxu0
        %v7621 = vadd.f32 %v7580, %v7620
        %v7622 = vpop.f32.mrf.mxu0
        %v7623 = vadd.f32 %v7582, %v7622
        %v7624 = vpop.f32.mrf.mxu0
        %v7625 = vpop.f32.mrf.mxu0
        %7626 = vdwg.mxu0
        %7627 = vmatprep.subr.bf16.mxu0 %v6375
        %7628 = vmatpush1.bf16.msra.mxu0 %v6374
        %7629 = vmatprep.subr.bf16.mxu0 %v6371
        %7630 = vmatpush1.bf16.msra.mxu0 %v6370
        %7631 = vmatprep.subr.bf16.mxu0 %v6367
        %7632 = vmatpush1.bf16.msra.mxu0 %v6366
        %7633 = vmatprep.subr.bf16.mxu0 %v6363
        %7634 = vmatpush1.bf16.msra.mxu0 %v6362
        %7635 = vmatprep.subr.bf16.mxu0 %v6359
        %7636 = vmatpush1.bf16.msra.mxu0 %v6358
        %7637 = vmatprep.subr.bf16.mxu0 %v6355
        %7638 = vmatpush1.bf16.msra.mxu0 %v6354
        %7639 = vmatprep.subr.bf16.mxu0 %v6351
        %7640 = vmatpush1.bf16.msra.mxu0 %v6350
        %7641 = vmatprep.subr.bf16.mxu0 %v6347
        %7642 = vmatpush1.bf16.msra.mxu0 %v6346
        %7643 = vmatprep.subr.bf16.mxu0 %v6407
        %7644 = vmatpush2.bf16.msra.mxu0 %v6406
        %7645 = vmatprep.subr.bf16.mxu0 %v6403
        %7646 = vmatpush2.bf16.msra.mxu0 %v6402
        %7647 = vmatprep.subr.bf16.mxu0 %v6399
        %7648 = vmatpush2.bf16.msra.mxu0 %v6398
        %7649 = vmatprep.subr.bf16.mxu0 %v6395
        %7650 = vmatpush2.bf16.msra.mxu0 %v6394
        %7651 = vmatprep.subr.bf16.mxu0 %v6391
        %7652 = vmatpush2.bf16.msra.mxu0 %v6390
        %7653 = vmatprep.subr.bf16.mxu0 %v6387
        %7654 = vmatpush2.bf16.msra.mxu0 %v6386
        %7655 = vmatprep.subr.bf16.mxu0 %v6383
        %7656 = vmatpush2.bf16.msra.mxu0 %v6382
        %7657 = vmatprep.subr.bf16.mxu0 %v6379
        %7658 = vmatpush2.bf16.msra.mxu0 %v6378
        %7659 = vmatprep.mubr.bf16.mxu0 %v4591
        %7660 = vmatmul.mubr.bf16.gmra.mxu0 %v4590
        %v7661 = vpop.f32.mrf.mxu0
        %v7662 = vadd.f32 %v7621, %v7661
        %v7663 = vpop.f32.mrf.mxu0
        %v7664 = vadd.f32 %v7623, %v7663
        %v7665 = vpop.f32.mrf.mxu0
        %v7666 = vpop.f32.mrf.mxu0
        %7667 = vdwg.mxu0
        %7668 = vmatprep.subr.bf16.mxu0 %v6439
        %7669 = vmatpush1.bf16.msra.mxu0 %v6438
        %7670 = vmatprep.subr.bf16.mxu0 %v6435
        %7671 = vmatpush1.bf16.msra.mxu0 %v6434
        %7672 = vmatprep.subr.bf16.mxu0 %v6431
        %7673 = vmatpush1.bf16.msra.mxu0 %v6430
        %7674 = vmatprep.subr.bf16.mxu0 %v6427
        %7675 = vmatpush1.bf16.msra.mxu0 %v6426
        %7676 = vmatprep.subr.bf16.mxu0 %v6423
        %7677 = vmatpush1.bf16.msra.mxu0 %v6422
        %7678 = vmatprep.subr.bf16.mxu0 %v6419
        %7679 = vmatpush1.bf16.msra.mxu0 %v6418
        %7680 = vmatprep.subr.bf16.mxu0 %v6415
        %7681 = vmatpush1.bf16.msra.mxu0 %v6414
        %7682 = vmatprep.subr.bf16.mxu0 %v6411
        %7683 = vmatpush1.bf16.msra.mxu0 %v6410
        %7684 = vmatprep.subr.bf16.mxu0 %v6471
        %7685 = vmatpush2.bf16.msra.mxu0 %v6470
        %7686 = vmatprep.subr.bf16.mxu0 %v6467
        %7687 = vmatpush2.bf16.msra.mxu0 %v6466
        %7688 = vmatprep.subr.bf16.mxu0 %v6463
        %7689 = vmatpush2.bf16.msra.mxu0 %v6462
        %7690 = vmatprep.subr.bf16.mxu0 %v6459
        %7691 = vmatpush2.bf16.msra.mxu0 %v6458
        %7692 = vmatprep.subr.bf16.mxu0 %v6455
        %7693 = vmatpush2.bf16.msra.mxu0 %v6454
        %7694 = vmatprep.subr.bf16.mxu0 %v6451
        %7695 = vmatpush2.bf16.msra.mxu0 %v6450
        %7696 = vmatprep.subr.bf16.mxu0 %v6447
        %7697 = vmatpush2.bf16.msra.mxu0 %v6446
        %7698 = vmatprep.subr.bf16.mxu0 %v6443
        %7699 = vmatpush2.bf16.msra.mxu0 %v6442
        %7700 = vmatprep.mubr.bf16.mxu0 %v4593
        %7701 = vmatmul.mubr.bf16.gmra.mxu0 %v4592
        %v7702 = vpop.f32.mrf.mxu0
        %v7703 = vadd.f32 %v7662, %v7702
        %v7704 = vpop.f32.mrf.mxu0
        %v7705 = vadd.f32 %v7664, %v7704
        %v7706 = vpop.f32.mrf.mxu0
        %v7707 = vpop.f32.mrf.mxu0
        %7708 = vdwg.mxu0
        %7709 = vmatprep.subr.bf16.mxu0 %v6503
        %7710 = vmatpush1.bf16.msra.mxu0 %v6502
        %7711 = vmatprep.subr.bf16.mxu0 %v6499
        %7712 = vmatpush1.bf16.msra.mxu0 %v6498
        %7713 = vmatprep.subr.bf16.mxu0 %v6495
        %7714 = vmatpush1.bf16.msra.mxu0 %v6494
        %7715 = vmatprep.subr.bf16.mxu0 %v6491
        %7716 = vmatpush1.bf16.msra.mxu0 %v6490
        %7717 = vmatprep.subr.bf16.mxu0 %v6487
        %7718 = vmatpush1.bf16.msra.mxu0 %v6486
        %7719 = vmatprep.subr.bf16.mxu0 %v6483
        %7720 = vmatpush1.bf16.msra.mxu0 %v6482
        %7721 = vmatprep.subr.bf16.mxu0 %v6479
        %7722 = vmatpush1.bf16.msra.mxu0 %v6478
        %7723 = vmatprep.subr.bf16.mxu0 %v6475
        %7724 = vmatpush1.bf16.msra.mxu0 %v6474
        %7725 = vmatprep.subr.bf16.mxu0 %v6535
        %7726 = vmatpush2.bf16.msra.mxu0 %v6534
        %7727 = vmatprep.subr.bf16.mxu0 %v6531
        %7728 = vmatpush2.bf16.msra.mxu0 %v6530
        %7729 = vmatprep.subr.bf16.mxu0 %v6527
        %7730 = vmatpush2.bf16.msra.mxu0 %v6526
        %7731 = vmatprep.subr.bf16.mxu0 %v6523
        %7732 = vmatpush2.bf16.msra.mxu0 %v6522
        %7733 = vmatprep.subr.bf16.mxu0 %v6519
        %7734 = vmatpush2.bf16.msra.mxu0 %v6518
        %7735 = vmatprep.subr.bf16.mxu0 %v6515
        %7736 = vmatpush2.bf16.msra.mxu0 %v6514
        %7737 = vmatprep.subr.bf16.mxu0 %v6511
        %7738 = vmatpush2.bf16.msra.mxu0 %v6510
        %7739 = vmatprep.subr.bf16.mxu0 %v6507
        %7740 = vmatpush2.bf16.msra.mxu0 %v6506
        %7741 = vmatprep.mubr.bf16.mxu0 %v4595
        %7742 = vmatmul.mubr.bf16.gmra.mxu0 %v4594
        %v7743 = vpop.f32.mrf.mxu0
        %v7744 = vadd.f32 %v7703, %v7743
        %v7745 = vpop.f32.mrf.mxu0
        %v7746 = vadd.f32 %v7705, %v7745
        %v7747 = vpop.f32.mrf.mxu0
        %v7748 = vpop.f32.mrf.mxu0
        %7749 = vdwg.mxu0
        %7750 = vmatprep.subr.bf16.mxu0 %v6567
        %7751 = vmatpush1.bf16.msra.mxu0 %v6566
        %7752 = vmatprep.subr.bf16.mxu0 %v6563
        %7753 = vmatpush1.bf16.msra.mxu0 %v6562
        %7754 = vmatprep.subr.bf16.mxu0 %v6559
        %7755 = vmatpush1.bf16.msra.mxu0 %v6558
        %7756 = vmatprep.subr.bf16.mxu0 %v6555
        %7757 = vmatpush1.bf16.msra.mxu0 %v6554
        %7758 = vmatprep.subr.bf16.mxu0 %v6551
        %7759 = vmatpush1.bf16.msra.mxu0 %v6550
        %7760 = vmatprep.subr.bf16.mxu0 %v6547
        %7761 = vmatpush1.bf16.msra.mxu0 %v6546
        %7762 = vmatprep.subr.bf16.mxu0 %v6543
        %7763 = vmatpush1.bf16.msra.mxu0 %v6542
        %7764 = vmatprep.subr.bf16.mxu0 %v6539
        %7765 = vmatpush1.bf16.msra.mxu0 %v6538
        %7766 = vmatprep.subr.bf16.mxu0 %v6599
        %7767 = vmatpush2.bf16.msra.mxu0 %v6598
        %7768 = vmatprep.subr.bf16.mxu0 %v6595
        %7769 = vmatpush2.bf16.msra.mxu0 %v6594
        %7770 = vmatprep.subr.bf16.mxu0 %v6591
        %7771 = vmatpush2.bf16.msra.mxu0 %v6590
        %7772 = vmatprep.subr.bf16.mxu0 %v6587
        %7773 = vmatpush2.bf16.msra.mxu0 %v6586
        %7774 = vmatprep.subr.bf16.mxu0 %v6583
        %7775 = vmatpush2.bf16.msra.mxu0 %v6582
        %7776 = vmatprep.subr.bf16.mxu0 %v6579
        %7777 = vmatpush2.bf16.msra.mxu0 %v6578
        %7778 = vmatprep.subr.bf16.mxu0 %v6575
        %7779 = vmatpush2.bf16.msra.mxu0 %v6574
        %7780 = vmatprep.subr.bf16.mxu0 %v6571
        %7781 = vmatpush2.bf16.msra.mxu0 %v6570
        %7782 = vmatprep.mubr.bf16.mxu0 %v4597
        %7783 = vmatmul.mubr.bf16.gmra.mxu0 %v4596
        %v7784 = vpop.f32.mrf.mxu0
        %v7785 = vadd.f32 %v7744, %v7784
        %v7786 = vpop.f32.mrf.mxu0
        %v7787 = vadd.f32 %v7746, %v7786
        %v7788 = vpop.f32.mrf.mxu0
        %v7789 = vpop.f32.mrf.mxu0
        %7790 = vdwg.mxu0
        %7791 = vmatprep.subr.bf16.mxu0 %v6631
        %7792 = vmatpush1.bf16.msra.mxu0 %v6630
        %7793 = vmatprep.subr.bf16.mxu0 %v6627
        %7794 = vmatpush1.bf16.msra.mxu0 %v6626
        %7795 = vmatprep.subr.bf16.mxu0 %v6623
        %7796 = vmatpush1.bf16.msra.mxu0 %v6622
        %7797 = vmatprep.subr.bf16.mxu0 %v6619
        %7798 = vmatpush1.bf16.msra.mxu0 %v6618
        %7799 = vmatprep.subr.bf16.mxu0 %v6615
        %7800 = vmatpush1.bf16.msra.mxu0 %v6614
        %7801 = vmatprep.subr.bf16.mxu0 %v6611
        %7802 = vmatpush1.bf16.msra.mxu0 %v6610
        %7803 = vmatprep.subr.bf16.mxu0 %v6607
        %7804 = vmatpush1.bf16.msra.mxu0 %v6606
        %7805 = vmatprep.subr.bf16.mxu0 %v6603
        %7806 = vmatpush1.bf16.msra.mxu0 %v6602
        %7807 = vmatprep.subr.bf16.mxu0 %v6663
        %7808 = vmatpush2.bf16.msra.mxu0 %v6662
        %7809 = vmatprep.subr.bf16.mxu0 %v6659
        %7810 = vmatpush2.bf16.msra.mxu0 %v6658
        %7811 = vmatprep.subr.bf16.mxu0 %v6655
        %7812 = vmatpush2.bf16.msra.mxu0 %v6654
        %7813 = vmatprep.subr.bf16.mxu0 %v6651
        %7814 = vmatpush2.bf16.msra.mxu0 %v6650
        %7815 = vmatprep.subr.bf16.mxu0 %v6647
        %7816 = vmatpush2.bf16.msra.mxu0 %v6646
        %7817 = vmatprep.subr.bf16.mxu0 %v6643
        %7818 = vmatpush2.bf16.msra.mxu0 %v6642
        %7819 = vmatprep.subr.bf16.mxu0 %v6639
        %7820 = vmatpush2.bf16.msra.mxu0 %v6638
        %7821 = vmatprep.subr.bf16.mxu0 %v6635
        %7822 = vmatpush2.bf16.msra.mxu0 %v6634
        %7823 = vmatprep.mubr.bf16.mxu0 %v4599
        %7824 = vmatmul.mubr.bf16.gmra.mxu0 %v4598
        %v7825 = vpop.f32.mrf.mxu0
        %v7826 = vadd.f32 %v7785, %v7825
        %v7827 = vpop.f32.mrf.mxu0
        %v7828 = vadd.f32 %v7787, %v7827
        %v7829 = vpop.f32.mrf.mxu0
        %v7830 = vpop.f32.mrf.mxu0
        %7831 = vdwg.mxu0
        %v7832 = vadd.f32 %v7498, %v7500
        %v7833 = vadd.f32 %v7832, %v7826
        %v7834 = vadd.f32 %v7833, %v7828
        %7835 = vadd.xlane.f32.xlu0 %v7834
        %v7836 = vpop.xlane.xlu0 %7835
        %v7837 = vmul.f32 %v7836, 0.001953125
        %v7838 = vmul.f32 %v7498, %v7498
        %v7839 = vmul.f32 %v7500, %v7500
        %v7840 = vmul.f32 %v7826, %v7826
        %v7841 = vmul.f32 %v7828, %v7828
        %v7842 = vadd.f32 %v7838, %v7839
        %v7843 = vadd.f32 %v7842, %v7840
        %v7844 = vadd.f32 %v7843, %v7841
        %7845 = vadd.xlane.f32.xlu0 %v7844
        %v7846 = vpop.xlane.xlu0 %7845
        %v7847 = vmul.f32 %v7846, 0.001953125
        %v7848 = vmul.f32 %v7837, %v7837
        %v7849 = vsub.f32 %v7847, %v7848
        %v7850 = vmax.f32 %v7849, 0.0
        %v7851 = vsub.f32 %v7498, %v7837
        %v7852 = vsub.f32 %v7500, %v7837
        %v7853 = vsub.f32 %v7826, %v7837
        %v7854 = vsub.f32 %v7828, %v7837
        %v7855 = vadd.f32 %v7850, 1e-05
        %v7856 = vrsqrt.pop %v7855
        %v7857 = vmul.f32 %v7851, %v7856
        %v7858 = vmul.f32 %v7852, %v7856
        %v7859 = vmul.f32 %v7853, %v7856
        %v7860 = vmul.f32 %v7854, %v7856
        %7861 = vst [vmem:[%s215] sm:$0xff] %v7857
        %7862 = vst [vmem:[%s215 + $0x8] sm:$0xff] %v7858
        %7863 = vst [vmem:[%s215 + $0x10] sm:$0xff] %v7859
        %7864 = vst [vmem:[%s215 + $0x18] sm:$0xff] %v7860
        %s7865 = sand.u32 %s97, 1
        %s7866 = scalar_lea.sflag [#allocation5], %s7865
        %s7867 = sand.u32 %s97, 1
        %s7868 = smul.addr %s7867, 32
        %s7869 = scalar_lea.vmem [#allocation9], %s7868
        // Predicated region
        $region45: #{tpu_custom_call.1} parent=31 // pred_check
          %p7870 = pneg %p107
        $region46: #{tpu_custom_call.1} parent=31 // pred_check_branch
          %7872 = sbr.rel (%p7870) target = $region48
        $region47: #{tpu_custom_call.1} parent=31 // pred_region
          %s7874 = ssub.s32 512, 512
          %7875 = vsyncadd %s7866, %s7874
          %s7876 = smul.addr %s21, 4
          %s7877 = smul.addr %s7876, 128
          %s7878 = scalar_lea.hbm %s3, %s7877
          %s7880 = sshll.u32 %s7869, 4
          %s7881 = int_to_ptr.vmem [resolvable:$true] %s7880
          %7883 = dma.vmem_to_hbm [thread:$0]  %s7881, 512, %s7878, %s7866
        $region48: #{tpu_custom_call.1} parent=31 // pred_fallthru
          _
      $region32: #{tpu_custom_call.1} parent=5 // pred_fallthru
        _
      %p7884 = scmp.le.s32.totalorder 2, %s16
      // Predicated region
      $region49: #{tpu_custom_call.1} parent=5 // pred_check
        %p7885 = pneg %p7884
      $region50: #{tpu_custom_call.1} parent=5 // pred_check_branch
        %7887 = sbr.rel (%p7885) target = $region52
      $region51: #{tpu_custom_call.1} parent=5 // pred_region
        %s7888 = ssub.s32 %s16, 2
        // Predicated region
        $region53: #{tpu_custom_call.1} parent=51 // pred_check
          %p7889 = pneg %p113
        $region54: #{tpu_custom_call.1} parent=51 // pred_check_branch
          %7891 = sbr.rel (%p7889) target = $region56
        $region55: #{tpu_custom_call.1} parent=51 // pred_region
          %s7892 = sand.u32 %s98, 1
          %s7893 = scalar_lea.sflag [#allocation5], %s7892
          %s7894 = sand.u32 %s98, 1
          %s7895 = smul.addr %s7894, 32
          %s7896 = scalar_lea.vmem [#allocation9], %s7895
          %7897 = dma.done %s7893, 512
        $region56: #{tpu_custom_call.1} parent=51 // pred_fallthru
          _
      $region52: #{tpu_custom_call.1} parent=5 // pred_fallthru
        _
    $region6: #{tpu_custom_call.1} parent=1 // loop_footer
      %s20 = sadd.s32 1, %s16
    $region7: #{tpu_custom_call.1} parent=1 // loop_footer_branch
      %15 = sbr.rel target = $region3
    $region8: #{tpu_custom_call.1} parent=1 // loop_exit
      _
    %7898 = vsyncpa [#allocation4], 1
    %s7899 = scalar_lea.sflag [#allocation4], 1
    %7900 = vsyncpa %s7899, 1
    %7901 = vsyncpa [#allocation7], 1
    %7902 = vsyncpa [#allocation5], 1
    %s7903 = scalar_lea.sflag [#allocation5], 1
    %7904 = vsyncpa %s7903, 1

</llo_original>
